<compile_context>
chip_gen: v7x
topology: tpu7x:2x2x1
jax: 0.10.0
libtpu: 0.0.40
codegen_flags: <defaults>
</compile_context>

<pallas_src>
import numpy as np
import jax
import jax.numpy as jnp
from jax.experimental import pallas as pl
from jax.experimental.pallas import tpu as pltpu

NEG_SLOPE = 0.2  # GATv2Conv default negative_slope


def gatv2_kernel(x_ref, wlr_ref, blr_ref, we_ref, att_ref, bias_ref,
                 adj_ref, ea_ref, pool_ref, out_ref):
    """One grid step = B block-diagonal tiles of T nodes (GPT whole graphs each)."""
    B, T, _ = adj_ref.shape
    GPT = pool_ref.shape[1]
    Cp = out_ref.shape[1]               # lane-dense padded channel count
    C = we_ref.shape[1]                 # real channel count (num_classes)
    Cs = min(Cp, ((C + 7) // 8) * 8)    # sublane-padded real channels (small transpose)

    wlr = wlr_ref[...]                  # [F, 2*Cp]  fused [Wl | Wr]
    blr = blr_ref[...]                  # [1, 2*Cp]
    bias = bias_ref[...]                # [1, Cp]
    we = [we_ref[0, c] for c in range(C)]    # SMEM scalars, read once before the tile loop
    att = [att_ref[0, c] for c in range(C)]

    for b in range(B):                  # static unroll over the tiles of this grid step
        x = x_ref[pl.ds(b * T, T), :]                                       # [T, F]
        # Fused source/target projection (K=8; kept f32 since it feeds the softmax logits).
        xlr = jnp.dot(x, wlr, preferred_element_type=jnp.float32) + blr     # [T, 2*Cp]
        xl = xlr[:, :Cp]                                                    # lin_l(x_j)
        xr = xlr[:, Cp:]                                                    # lin_r(x_i)

        ea = ea_ref[b].astype(jnp.float32)                                  # bf16 -> f32 [T, T]
        mask = adj_ref[b].astype(jnp.float32) > 0.0                         # int8 adjacency

        # Transpose only the real channels ([T, Cs] -> [Cs, T]); remaining lanes are padding.
        xl_t = jnp.transpose(xl[:, :Cs])

        # logits[i, j] = sum_c att[c] * leaky_relu(xl[j, c] + xr[i, c] + ea[i, j] * we[c])
        t = xr[:, 0:1] + xl_t[0:1, :] + ea * we[0]
        t = jnp.where(t > 0, t, NEG_SLOPE * t)
        logits = att[0] * t                                                 # init from c = 0
        for c in range(1, C):
            t = xr[:, c:c + 1] + xl_t[c:c + 1, :] + ea * we[c]
            t = jnp.where(t > 0, t, NEG_SLOPE * t)
            logits = logits + att[c] * t

        # Softmax over source nodes j, restricted to edges (every node has a self loop).
        logits = jnp.where(mask, logits, -1e30)            # f32 sentinel; exp underflows to 0
        m = jnp.max(logits, axis=1, keepdims=True)
        p = jnp.exp(logits - m)
        denom = jnp.sum(p, axis=1, keepdims=True)
        alpha = p * pl.reciprocal(denom, approx=True)      # EUP reciprocal

        # Reassociated mean-pool: node-level outputs are never needed, so pool @ alpha first,
        # then @ xl.  bias is added after pooling because mean-pool rows sum to 1.
        g_alpha = jnp.dot(pool_ref[b].astype(jnp.bfloat16), alpha.astype(jnp.bfloat16),
                          preferred_element_type=jnp.float32)               # [GPT, T]
        out = jnp.dot(g_alpha.astype(jnp.bfloat16), xl.astype(jnp.bfloat16),
                      preferred_element_type=jnp.float32) + bias            # [GPT, Cp]
        out_ref[pl.ds(b * GPT, GPT), :] = out


def gat_forward(x, edge_index, edge_attr, batch, params, num_classes, num_graphs,
                nodes_per_tile=128, graphs_per_tile=16, tiles_per_step=2):
    """Builds block-diagonal graph tiles (self loops with fill_value='mean'), calls the kernel.

    Precondition (caller checks host-side): graphs are contiguous and every tile of
    `nodes_per_tile` nodes holds exactly `graphs_per_tile` whole graphs.
    TODO(synk): relax for ragged graph sizes via a scalar-prefetched per-tile graph table.
    """
    N, F = x.shape
    T = nodes_per_tile
    GPT = graphs_per_tile
    B = tiles_per_step
    assert N % T == 0 and num_graphs % GPT == 0
    num_tiles = N // T
    assert num_graphs // GPT == num_tiles
    assert num_tiles % B == 0
    num_steps = num_tiles // B
    Cp = ((num_classes + 127) // 128) * 128        # lane-dense padded channel count

    # --- pad parameters to lane-dense width and fuse Wl/Wr into a single matmul ---
    def pad_cols(a, width):
        return jnp.zeros((a.shape[0], width), jnp.float32).at[:, :a.shape[1]].set(a)

    w_lr = jnp.concatenate([pad_cols(params["Wl"], Cp), pad_cols(params["Wr"], Cp)], axis=1)
    b_lr = jnp.concatenate([pad_cols(params["bl"], Cp), pad_cols(params["br"], Cp)], axis=1)
    bias = pad_cols(params["bias"], Cp)

    # --- block-diagonal densification (only the diagonal tiles are materialized) ---
    src, dst = edge_index[0], edge_index[1]
    node_tile = jnp.arange(N) // T
    nloc = jnp.arange(N) % T
    e_tile = dst // T
    # int8 adjacency + bf16 edge attrs: 128 KB -> 48 KB of HBM traffic per 128-node tile.
    adj_blocks = jnp.zeros((num_tiles, T, T), jnp.int8).at[e_tile, dst % T, src % T].set(1)
    ea_blocks = jnp.zeros((num_tiles, T, T), jnp.bfloat16).at[
        e_tile, dst % T, src % T].set(edge_attr[:, 0].astype(jnp.bfloat16))

    # add_self_loops with fill_value='mean': self-loop attr = mean of incoming edge attrs.
    deg = jnp.zeros((N,), jnp.float32).at[dst].add(1.0)
    asum = jnp.zeros((N,), jnp.float32).at[dst].add(edge_attr[:, 0])
    mean_attr = asum / jnp.maximum(deg, 1.0)
    adj_blocks = adj_blocks.at[node_tile, nloc, nloc].set(1)
    ea_blocks = ea_blocks.at[node_tile, nloc, nloc].set(mean_attr.astype(jnp.bfloat16))

    # global_mean_pool as block-diagonal [GPT, T] matrices.
    counts = jnp.zeros((num_graphs,), jnp.float32).at[batch].add(1.0)
    pool_blocks = jnp.zeros((num_tiles, GPT, T), jnp.float32).at[
        node_tile, batch % GPT, nloc].set(1.0 / jnp.maximum(counts, 1.0)[batch])

    smem = pl.BlockSpec(memory_space=pltpu.MemorySpace.SMEM)
    out = pl.pallas_call(
        gatv2_kernel,
        out_shape=jax.ShapeDtypeStruct((num_graphs, Cp), jnp.float32),
        grid=(num_steps,),
        in_specs=[
            pl.BlockSpec((B * T, F), lambda i: (i, 0)),        # x (B tiles of T nodes)
            pl.BlockSpec((F, 2 * Cp), lambda i: (0, 0)),       # fused W_lr
            pl.BlockSpec((1, 2 * Cp), lambda i: (0, 0)),       # fused b_lr
            smem,                                              # we  (scalars)
            smem,                                              # att (scalars)
            pl.BlockSpec((1, Cp), lambda i: (0, 0)),           # output bias
            pl.BlockSpec((B, T, T), lambda i: (i, 0, 0)),      # int8 adjacency blocks
            pl.BlockSpec((B, T, T), lambda i: (i, 0, 0)),      # bf16 edge-attr blocks
            pl.BlockSpec((B, GPT, T), lambda i: (i, 0, 0)),    # mean-pool blocks
        ],
        out_specs=pl.BlockSpec((B * GPT, Cp), lambda i: (i, 0)),
        compiler_params=pltpu.CompilerParams(
            dimension_semantics=("parallel",)),                # >=4 steps -> both v7x TCs pipeline
        # NOTE: for large tiles_per_step also raise vmem_limit_bytes (v5e scoped default is
        # 16 MiB) and keep B * double-buffered working set well under v7x's 64 MiB VMEM.
    )(x, w_lr, b_lr, params["we"], params["att"], bias,
      adj_blocks, ea_blocks, pool_blocks)

    out = out[:, :num_classes]                                 # drop lane padding
    if num_classes == 1:
        return out.reshape(-1)
    return out


def reference_forward(x, edge_index, edge_attr, batch, params, num_classes, num_graphs):
    """Plain-JAX dense f32 reference with identical semantics (for self-check)."""
    N = x.shape[0]
    src, dst = edge_index[0], edge_index[1]
    adj = jnp.zeros((N, N)).at[dst, src].set(1.0)
    ea = jnp.zeros((N, N)).at[dst, src].set(edge_attr[:, 0])
    deg = jnp.sum(adj, axis=1)
    mean_attr = jnp.sum(ea * adj, axis=1) / jnp.maximum(deg, 1.0)
    diag = jnp.arange(N)
    adj = adj.at[diag, diag].set(1.0)
    ea = ea.at[diag, diag].set(mean_attr)

    xl = x @ params["Wl"] + params["bl"]
    xr = x @ params["Wr"] + params["br"]
    e = xl[None, :, :] + xr[:, None, :] + ea[:, :, None] * params["we"][0][None, None, :]
    e = jnp.where(e > 0, e, NEG_SLOPE * e)
    logits = jnp.sum(e * params["att"][0][None, None, :], axis=-1)
    logits = jnp.where(adj > 0, logits, -1e30)
    p = jnp.exp(logits - jnp.max(logits, axis=1, keepdims=True)) * adj
    alpha = p / jnp.sum(p, axis=1, keepdims=True)
    node_out = alpha @ xl + params["bias"]
    counts = jnp.zeros((num_graphs,)).at[batch].add(1.0)
    pool = (jax.nn.one_hot(batch, num_graphs) / jnp.maximum(counts, 1.0)[None, :]).T
    out = pool @ node_out
    return out.reshape(-1) if num_classes == 1 else out


if __name__ == "__main__":
    NUM_NODE_FEATURES = 8
    NUM_CLASSES = 4
    NODES_PER_GRAPH = 8
    NUM_GRAPHS = 128              # 16 graphs/tile -> 8 full-lane 128-node tiles
    GRAPHS_PER_TILE = 16
    NODES_PER_TILE = GRAPHS_PER_TILE * NODES_PER_GRAPH   # 128
    TILES_PER_STEP = 2            # -> grid=(4,): 2 pipelined steps per TC on v7x
    N = NODES_PER_GRAPH * NUM_GRAPHS

    key = jax.random.PRNGKey(0)
    ks = jax.random.split(key, 8)

    # Deterministic parameter init (shapes per GATv2Conv(F, C, edge_dim=1), heads=1).
    g_lin = float(np.sqrt(6.0 / (NUM_NODE_FEATURES + NUM_CLASSES)))
    params = {
        "Wl": jax.random.uniform(ks[0], (NUM_NODE_FEATURES, NUM_CLASSES), jnp.float32, -g_lin, g_lin),
        "bl": jax.random.normal(ks[1], (1, NUM_CLASSES), jnp.float32) * 0.1,
        "Wr": jax.random.uniform(ks[2], (NUM_NODE_FEATURES, NUM_CLASSES), jnp.float32, -g_lin, g_lin),
        "br": jax.random.normal(ks[3], (1, NUM_CLASSES), jnp.float32) * 0.1,
        "we": jax.random.normal(ks[4], (1, NUM_CLASSES), jnp.float32),      # lin_edge (edge_dim=1, bias=False)
        "att": jax.random.normal(ks[5], (1, NUM_CLASSES), jnp.float32),     # attention vector (heads=1)
        "bias": jnp.zeros((1, NUM_CLASSES), jnp.float32),                   # output bias
    }

    # Deterministic directed graph: per graph a bidirectional ring + skip edges (no self loops).
    edges = []
    for g in range(NUM_GRAPHS):
        o = g * NODES_PER_GRAPH
        for i in range(NODES_PER_GRAPH):
            edges.append((o + i, o + (i + 1) % NODES_PER_GRAPH))
            edges.append((o + (i + 1) % NODES_PER_GRAPH, o + i))
            edges.append((o + i, o + (i + 2) % NODES_PER_GRAPH))
    edge_index = jnp.array(np.array(edges, dtype=np.int32).T)               # [2, E] = (src, dst)
    E = edge_index.shape[1]

    x = jax.random.normal(ks[6], (N, NUM_NODE_FEATURES), jnp.float32)
    edge_attr = jax.random.uniform(ks[7], (E, 1), jnp.float32)

    # Host-side tiling precondition (pure numpy: no device sync, jit-safe wrapper).
    batch_np = np.repeat(np.arange(NUM_GRAPHS, dtype=np.int32), NODES_PER_GRAPH)
    assert np.array_equal(np.arange(N) // NODES_PER_TILE, batch_np // GRAPHS_PER_TILE), \
        "tiling must respect graph boundaries (graphs contiguous, GPT whole graphs per tile)"
    batch = jnp.array(batch_np)

    out = gat_forward(x, edge_index, edge_attr, batch, params, NUM_CLASSES, NUM_GRAPHS,
                      nodes_per_tile=NODES_PER_TILE, graphs_per_tile=GRAPHS_PER_TILE,
                      tiles_per_step=TILES_PER_STEP)
    out = jax.block_until_ready(out)

    ref = reference_forward(x, edge_index, edge_attr, batch, params, NUM_CLASSES, NUM_GRAPHS)
    # Tolerance accounts for bf16 edge attrs, bf16 readout-matmul operands and the approximate
    # (EUP) softmax reciprocal, all measured against a pure-f32 reference.
    np.testing.assert_allclose(np.asarray(out), np.asarray(ref), rtol=3e-2, atol=3e-2)

    print("KERNEL_OK")
</pallas_src>

<mosaic_0001>
module attributes {stable_mosaic.version = 11 : i64} {
  func.func @gatv2_kernel(%arg0: i32, %arg1: memref<256x8xf32, #tpu.memory_space<vmem>>, %arg2: memref<8x256xf32, #tpu.memory_space<vmem>>, %arg3: memref<1x256xf32, #tpu.memory_space<vmem>>, %arg4: memref<1x4xf32, #tpu.memory_space<smem>>, %arg5: memref<1x4xf32, #tpu.memory_space<smem>>, %arg6: memref<1x128xf32, #tpu.memory_space<vmem>>, %arg7: memref<2x128x128xi8, #tpu.memory_space<vmem>>, %arg8: memref<2x128x128xbf16, #tpu.memory_space<vmem>>, %arg9: memref<2x16x128xf32, #tpu.memory_space<vmem>>, %arg10: memref<32x128xf32, #tpu.memory_space<vmem>>) attributes {dimension_semantics = [#tpu.dimension_semantics<parallel>], iteration_bounds = array<i64: 4>, scalar_prefetch = 0 : i64, scratch_operands = 0 : i64, tpu.core_type = #tpu.core_type<tc>, window_params = [{transform_indices = @transform_0, window_bounds = array<i64: 256, 8>}, {pipeline_mode = #tpu.pipeline_mode<synchronous>, transform_indices = @transform_1, window_bounds = array<i64: 8, 256>}, {pipeline_mode = #tpu.pipeline_mode<synchronous>, transform_indices = @transform_2, window_bounds = array<i64: 1, 256>}, {transform_indices = @transform_3, window_bounds = array<i64: 1, 4>}, {transform_indices = @transform_4, window_bounds = array<i64: 1, 4>}, {pipeline_mode = #tpu.pipeline_mode<synchronous>, transform_indices = @transform_5, window_bounds = array<i64: 1, 128>}, {transform_indices = @transform_6, window_bounds = array<i64: 2, 128, 128>}, {transform_indices = @transform_7, window_bounds = array<i64: 2, 128, 128>}, {transform_indices = @transform_8, window_bounds = array<i64: 2, 16, 128>}, {transform_indices = @transform_9, window_bounds = array<i64: 32, 128>}]} {
    %c0 = arith.constant 0 : index
    %c0_0 = arith.constant 0 : index
    %0 = vector.load %arg2[%c0, %c0_0] : memref<8x256xf32, #tpu.memory_space<vmem>>, vector<8x256xf32>
    %c0_1 = arith.constant 0 : index
    %c0_2 = arith.constant 0 : index
    %1 = vector.load %arg3[%c0_1, %c0_2] : memref<1x256xf32, #tpu.memory_space<vmem>>, vector<1x256xf32>
    %c0_3 = arith.constant 0 : index
    %c0_4 = arith.constant 0 : index
    %2 = vector.load %arg6[%c0_3, %c0_4] : memref<1x128xf32, #tpu.memory_space<vmem>>, vector<1x128xf32>
    %c0_5 = arith.constant 0 : index
    %c0_6 = arith.constant 0 : index
    %3 = memref.load %arg4[%c0_5, %c0_6] : memref<1x4xf32, #tpu.memory_space<smem>>
    %c0_7 = arith.constant 0 : index
    %c1 = arith.constant 1 : index
    %4 = memref.load %arg4[%c0_7, %c1] : memref<1x4xf32, #tpu.memory_space<smem>>
    %c0_8 = arith.constant 0 : index
    %c2 = arith.constant 2 : index
    %5 = memref.load %arg4[%c0_8, %c2] : memref<1x4xf32, #tpu.memory_space<smem>>
    %c0_9 = arith.constant 0 : index
    %c3 = arith.constant 3 : index
    %6 = memref.load %arg4[%c0_9, %c3] : memref<1x4xf32, #tpu.memory_space<smem>>
    %c0_10 = arith.constant 0 : index
    %c0_11 = arith.constant 0 : index
    %7 = memref.load %arg5[%c0_10, %c0_11] : memref<1x4xf32, #tpu.memory_space<smem>>
    %c0_12 = arith.constant 0 : index
    %c1_13 = arith.constant 1 : index
    %8 = memref.load %arg5[%c0_12, %c1_13] : memref<1x4xf32, #tpu.memory_space<smem>>
    %c0_14 = arith.constant 0 : index
    %c2_15 = arith.constant 2 : index
    %9 = memref.load %arg5[%c0_14, %c2_15] : memref<1x4xf32, #tpu.memory_space<smem>>
    %c0_16 = arith.constant 0 : index
    %c3_17 = arith.constant 3 : index
    %10 = memref.load %arg5[%c0_16, %c3_17] : memref<1x4xf32, #tpu.memory_space<smem>>
    %c0_18 = arith.constant 0 : index
    %c0_19 = arith.constant 0 : index
    %11 = vector.load %arg1[%c0_18, %c0_19] : memref<256x8xf32, #tpu.memory_space<vmem>>, vector<128x8xf32>
    %cst = arith.constant dense<0.000000e+00> : vector<128x256xf32>
    %12 = tpu.matmul %11, %0, %cst {dimension_numbers = #tpu.dot_dimension_numbers<[1], [0], [0], [1], [0, 0, 1, 1], [], []>} : vector<128x8xf32>, vector<8x256xf32>, vector<128x256xf32> -> vector<128x256xf32>
    %13 = vector.broadcast %1 : vector<1x256xf32> to vector<128x256xf32>
    %14 = arith.addf %12, %13 : vector<128x256xf32>
    %15 = vector.extract_strided_slice %14 {offsets = [0, 0], sizes = [128, 128], strides = [1, 1]} : vector<128x256xf32> to vector<128x128xf32>
    %16 = vector.extract_strided_slice %14 {offsets = [0, 128], sizes = [128, 128], strides = [1, 1]} : vector<128x256xf32> to vector<128x128xf32>
    %c0_20 = arith.constant 0 : index
    %c0_21 = arith.constant 0 : index
    %c0_22 = arith.constant 0 : index
    %17 = vector.load %arg8[%c0_20, %c0_21, %c0_22] : memref<2x128x128xbf16, #tpu.memory_space<vmem>>, vector<1x128x128xbf16>
    %18 = vector.shape_cast %17 : vector<1x128x128xbf16> to vector<128x128xbf16>
    %19 = arith.extf %18 : vector<128x128xbf16> to vector<128x128xf32>
    %c0_23 = arith.constant 0 : index
    %c0_24 = arith.constant 0 : index
    %c0_25 = arith.constant 0 : index
    %20 = vector.load %arg7[%c0_23, %c0_24, %c0_25] : memref<2x128x128xi8, #tpu.memory_space<vmem>>, vector<1x128x128xi8>
    %21 = vector.shape_cast %20 : vector<1x128x128xi8> to vector<128x128xi8>
    %22 = arith.sitofp %21 : vector<128x128xi8> to vector<128x128xf32>
    %cst_26 = arith.constant 0.000000e+00 : f32
    %23 = vector.broadcast %cst_26 : f32 to vector<128x128xf32>
    %24 = arith.cmpf ogt, %22, %23 : vector<128x128xf32>
    %25 = vector.extract_strided_slice %15 {offsets = [0, 0], sizes = [128, 8], strides = [1, 1]} : vector<128x128xf32> to vector<128x8xf32>
    %26 = tpu.transpose %25, [1, 0] : vector<128x8xf32> -> vector<8x128xf32>
    %27 = vector.extract_strided_slice %16 {offsets = [0, 0], sizes = [128, 1], strides = [1, 1]} : vector<128x128xf32> to vector<128x1xf32>
    %28 = vector.extract_strided_slice %26 {offsets = [0, 0], sizes = [1, 128], strides = [1, 1]} : vector<8x128xf32> to vector<1x128xf32>
    %29 = vector.broadcast %27 : vector<128x1xf32> to vector<128x128xf32>
    %30 = vector.broadcast %28 : vector<1x128xf32> to vector<128x128xf32>
    %31 = arith.addf %29, %30 : vector<128x128xf32>
    %32 = vector.broadcast %3 : f32 to vector<128x128xf32>
    %33 = arith.mulf %19, %32 : vector<128x128xf32>
    %34 = arith.addf %31, %33 : vector<128x128xf32>
    %cst_27 = arith.constant 0.000000e+00 : f32
    %35 = vector.broadcast %cst_27 : f32 to vector<128x128xf32>
    %36 = arith.cmpf ogt, %34, %35 : vector<128x128xf32>
    %cst_28 = arith.constant 2.000000e-01 : f32
    %37 = vector.broadcast %cst_28 : f32 to vector<128x128xf32>
    %38 = arith.mulf %37, %34 : vector<128x128xf32>
    %39 = arith.select %36, %34, %38 : vector<128x128xi1>, vector<128x128xf32>
    %40 = vector.broadcast %7 : f32 to vector<128x128xf32>
    %41 = arith.mulf %40, %39 : vector<128x128xf32>
    %42 = vector.extract_strided_slice %16 {offsets = [0, 1], sizes = [128, 1], strides = [1, 1]} : vector<128x128xf32> to vector<128x1xf32>
    %43 = vector.extract_strided_slice %26 {offsets = [1, 0], sizes = [1, 128], strides = [1, 1]} : vector<8x128xf32> to vector<1x128xf32>
    %44 = vector.broadcast %42 : vector<128x1xf32> to vector<128x128xf32>
    %45 = vector.broadcast %43 : vector<1x128xf32> to vector<128x128xf32>
    %46 = arith.addf %44, %45 : vector<128x128xf32>
    %47 = vector.broadcast %4 : f32 to vector<128x128xf32>
    %48 = arith.mulf %19, %47 : vector<128x128xf32>
    %49 = arith.addf %46, %48 : vector<128x128xf32>
    %cst_29 = arith.constant 0.000000e+00 : f32
    %50 = vector.broadcast %cst_29 : f32 to vector<128x128xf32>
    %51 = arith.cmpf ogt, %49, %50 : vector<128x128xf32>
    %cst_30 = arith.constant 2.000000e-01 : f32
    %52 = vector.broadcast %cst_30 : f32 to vector<128x128xf32>
    %53 = arith.mulf %52, %49 : vector<128x128xf32>
    %54 = arith.select %51, %49, %53 : vector<128x128xi1>, vector<128x128xf32>
    %55 = vector.broadcast %8 : f32 to vector<128x128xf32>
    %56 = arith.mulf %55, %54 : vector<128x128xf32>
    %57 = arith.addf %41, %56 : vector<128x128xf32>
    %58 = vector.extract_strided_slice %16 {offsets = [0, 2], sizes = [128, 1], strides = [1, 1]} : vector<128x128xf32> to vector<128x1xf32>
    %59 = vector.extract_strided_slice %26 {offsets = [2, 0], sizes = [1, 128], strides = [1, 1]} : vector<8x128xf32> to vector<1x128xf32>
    %60 = vector.broadcast %58 : vector<128x1xf32> to vector<128x128xf32>
    %61 = vector.broadcast %59 : vector<1x128xf32> to vector<128x128xf32>
    %62 = arith.addf %60, %61 : vector<128x128xf32>
    %63 = vector.broadcast %5 : f32 to vector<128x128xf32>
    %64 = arith.mulf %19, %63 : vector<128x128xf32>
    %65 = arith.addf %62, %64 : vector<128x128xf32>
    %cst_31 = arith.constant 0.000000e+00 : f32
    %66 = vector.broadcast %cst_31 : f32 to vector<128x128xf32>
    %67 = arith.cmpf ogt, %65, %66 : vector<128x128xf32>
    %cst_32 = arith.constant 2.000000e-01 : f32
    %68 = vector.broadcast %cst_32 : f32 to vector<128x128xf32>
    %69 = arith.mulf %68, %65 : vector<128x128xf32>
    %70 = arith.select %67, %65, %69 : vector<128x128xi1>, vector<128x128xf32>
    %71 = vector.broadcast %9 : f32 to vector<128x128xf32>
    %72 = arith.mulf %71, %70 : vector<128x128xf32>
    %73 = arith.addf %57, %72 : vector<128x128xf32>
    %74 = vector.extract_strided_slice %16 {offsets = [0, 3], sizes = [128, 1], strides = [1, 1]} : vector<128x128xf32> to vector<128x1xf32>
    %75 = vector.extract_strided_slice %26 {offsets = [3, 0], sizes = [1, 128], strides = [1, 1]} : vector<8x128xf32> to vector<1x128xf32>
    %76 = vector.broadcast %74 : vector<128x1xf32> to vector<128x128xf32>
    %77 = vector.broadcast %75 : vector<1x128xf32> to vector<128x128xf32>
    %78 = arith.addf %76, %77 : vector<128x128xf32>
    %79 = vector.broadcast %6 : f32 to vector<128x128xf32>
    %80 = arith.mulf %19, %79 : vector<128x128xf32>
    %81 = arith.addf %78, %80 : vector<128x128xf32>
    %cst_33 = arith.constant 0.000000e+00 : f32
    %82 = vector.broadcast %cst_33 : f32 to vector<128x128xf32>
    %83 = arith.cmpf ogt, %81, %82 : vector<128x128xf32>
    %cst_34 = arith.constant 2.000000e-01 : f32
    %84 = vector.broadcast %cst_34 : f32 to vector<128x128xf32>
    %85 = arith.mulf %84, %81 : vector<128x128xf32>
    %86 = arith.select %83, %81, %85 : vector<128x128xi1>, vector<128x128xf32>
    %87 = vector.broadcast %10 : f32 to vector<128x128xf32>
    %88 = arith.mulf %87, %86 : vector<128x128xf32>
    %89 = arith.addf %73, %88 : vector<128x128xf32>
    %cst_35 = arith.constant -1.000000e+30 : f32
    %90 = vector.broadcast %cst_35 : f32 to vector<128x128xf32>
    %91 = arith.select %24, %89, %90 : vector<128x128xi1>, vector<128x128xf32>
    %cst_36 = arith.constant dense<0xFF800000> : vector<128xf32>
    %92 = vector.multi_reduction <maximumf>, %91, %cst_36 [1] : vector<128x128xf32> to vector<128xf32>
    %93 = vector.shape_cast %92 : vector<128xf32> to vector<128x1xf32>
    %94 = vector.broadcast %93 : vector<128x1xf32> to vector<128x128xf32>
    %95 = arith.subf %91, %94 : vector<128x128xf32>
    %96 = math.exp %95 : vector<128x128xf32>
    %cst_37 = arith.constant dense<0.000000e+00> : vector<128xf32>
    %97 = vector.multi_reduction <add>, %96, %cst_37 [1] : vector<128x128xf32> to vector<128xf32>
    %98 = vector.shape_cast %97 : vector<128xf32> to vector<128x1xf32>
    %99 = tpu.reciprocal %98 {approx = true} : vector<128x1xf32> -> vector<128x1xf32>
    %100 = vector.broadcast %99 : vector<128x1xf32> to vector<128x128xf32>
    %101 = arith.mulf %96, %100 : vector<128x128xf32>
    %c0_38 = arith.constant 0 : index
    %c0_39 = arith.constant 0 : index
    %c0_40 = arith.constant 0 : index
    %102 = vector.load %arg9[%c0_38, %c0_39, %c0_40] : memref<2x16x128xf32, #tpu.memory_space<vmem>>, vector<1x16x128xf32>
    %103 = vector.shape_cast %102 : vector<1x16x128xf32> to vector<16x128xf32>
    %104 = arith.truncf %103 : vector<16x128xf32> to vector<16x128xbf16>
    %105 = arith.truncf %101 : vector<128x128xf32> to vector<128x128xbf16>
    %cst_41 = arith.constant dense<0.000000e+00> : vector<16x128xf32>
    %106 = tpu.matmul %104, %105, %cst_41 {dimension_numbers = #tpu.dot_dimension_numbers<[1], [0], [0], [1], [0, 0, 1, 1], [], []>} : vector<16x128xbf16>, vector<128x128xbf16>, vector<16x128xf32> -> vector<16x128xf32>
    %107 = arith.truncf %106 : vector<16x128xf32> to vector<16x128xbf16>
    %108 = arith.truncf %15 : vector<128x128xf32> to vector<128x128xbf16>
    %cst_42 = arith.constant dense<0.000000e+00> : vector<16x128xf32>
    %109 = tpu.matmul %107, %108, %cst_42 {dimension_numbers = #tpu.dot_dimension_numbers<[1], [0], [0], [1], [0, 0, 1, 1], [], []>} : vector<16x128xbf16>, vector<128x128xbf16>, vector<16x128xf32> -> vector<16x128xf32>
    %110 = vector.broadcast %2 : vector<1x128xf32> to vector<16x128xf32>
    %111 = arith.addf %109, %110 : vector<16x128xf32>
    %c0_43 = arith.constant 0 : index
    %c0_44 = arith.constant 0 : index
    %112 = vector.load %arg10[%c0_43, %c0_44] : memref<32x128xf32, #tpu.memory_space<vmem>>, vector<16x128xf32>
    tpu.vector_store %arg10[%c0_43, %c0_44], %111 {strides = array<i32>} : memref<32x128xf32, #tpu.memory_space<vmem>>, vector<16x128xf32>,
    %c128 = arith.constant 128 : index
    %c0_45 = arith.constant 0 : index
    %113 = vector.load %arg1[%c128, %c0_45] : memref<256x8xf32, #tpu.memory_space<vmem>>, vector<128x8xf32>
    %cst_46 = arith.constant dense<0.000000e+00> : vector<128x256xf32>
    %114 = tpu.matmul %113, %0, %cst_46 {dimension_numbers = #tpu.dot_dimension_numbers<[1], [0], [0], [1], [0, 0, 1, 1], [], []>} : vector<128x8xf32>, vector<8x256xf32>, vector<128x256xf32> -> vector<128x256xf32>
    %115 = vector.broadcast %1 : vector<1x256xf32> to vector<128x256xf32>
    %116 = arith.addf %114, %115 : vector<128x256xf32>
    %117 = vector.extract_strided_slice %116 {offsets = [0, 0], sizes = [128, 128], strides = [1, 1]} : vector<128x256xf32> to vector<128x128xf32>
    %118 = vector.extract_strided_slice %116 {offsets = [0, 128], sizes = [128, 128], strides = [1, 1]} : vector<128x256xf32> to vector<128x128xf32>
    %c1_47 = arith.constant 1 : index
    %c0_48 = arith.constant 0 : index
    %c0_49 = arith.constant 0 : index
    %119 = vector.load %arg8[%c1_47, %c0_48, %c0_49] : memref<2x128x128xbf16, #tpu.memory_space<vmem>>, vector<1x128x128xbf16>
    %120 = vector.shape_cast %119 : vector<1x128x128xbf16> to vector<128x128xbf16>
    %121 = arith.extf %120 : vector<128x128xbf16> to vector<128x128xf32>
    %c1_50 = arith.constant 1 : index
    %c0_51 = arith.constant 0 : index
    %c0_52 = arith.constant 0 : index
    %122 = vector.load %arg7[%c1_50, %c0_51, %c0_52] : memref<2x128x128xi8, #tpu.memory_space<vmem>>, vector<1x128x128xi8>
    %123 = vector.shape_cast %122 : vector<1x128x128xi8> to vector<128x128xi8>
    %124 = arith.sitofp %123 : vector<128x128xi8> to vector<128x128xf32>
    %cst_53 = arith.constant 0.000000e+00 : f32
    %125 = vector.broadcast %cst_53 : f32 to vector<128x128xf32>
    %126 = arith.cmpf ogt, %124, %125 : vector<128x128xf32>
    %127 = vector.extract_strided_slice %117 {offsets = [0, 0], sizes = [128, 8], strides = [1, 1]} : vector<128x128xf32> to vector<128x8xf32>
    %128 = tpu.transpose %127, [1, 0] : vector<128x8xf32> -> vector<8x128xf32>
    %129 = vector.extract_strided_slice %118 {offsets = [0, 0], sizes = [128, 1], strides = [1, 1]} : vector<128x128xf32> to vector<128x1xf32>
    %130 = vector.extract_strided_slice %128 {offsets = [0, 0], sizes = [1, 128], strides = [1, 1]} : vector<8x128xf32> to vector<1x128xf32>
    %131 = vector.broadcast %129 : vector<128x1xf32> to vector<128x128xf32>
    %132 = vector.broadcast %130 : vector<1x128xf32> to vector<128x128xf32>
    %133 = arith.addf %131, %132 : vector<128x128xf32>
    %134 = vector.broadcast %3 : f32 to vector<128x128xf32>
    %135 = arith.mulf %121, %134 : vector<128x128xf32>
    %136 = arith.addf %133, %135 : vector<128x128xf32>
    %cst_54 = arith.constant 0.000000e+00 : f32
    %137 = vector.broadcast %cst_54 : f32 to vector<128x128xf32>
    %138 = arith.cmpf ogt, %136, %137 : vector<128x128xf32>
    %cst_55 = arith.constant 2.000000e-01 : f32
    %139 = vector.broadcast %cst_55 : f32 to vector<128x128xf32>
    %140 = arith.mulf %139, %136 : vector<128x128xf32>
    %141 = arith.select %138, %136, %140 : vector<128x128xi1>, vector<128x128xf32>
    %142 = vector.broadcast %7 : f32 to vector<128x128xf32>
    %143 = arith.mulf %142, %141 : vector<128x128xf32>
    %144 = vector.extract_strided_slice %118 {offsets = [0, 1], sizes = [128, 1], strides = [1, 1]} : vector<128x128xf32> to vector<128x1xf32>
    %145 = vector.extract_strided_slice %128 {offsets = [1, 0], sizes = [1, 128], strides = [1, 1]} : vector<8x128xf32> to vector<1x128xf32>
    %146 = vector.broadcast %144 : vector<128x1xf32> to vector<128x128xf32>
    %147 = vector.broadcast %145 : vector<1x128xf32> to vector<128x128xf32>
    %148 = arith.addf %146, %147 : vector<128x128xf32>
    %149 = vector.broadcast %4 : f32 to vector<128x128xf32>
    %150 = arith.mulf %121, %149 : vector<128x128xf32>
    %151 = arith.addf %148, %150 : vector<128x128xf32>
    %cst_56 = arith.constant 0.000000e+00 : f32
    %152 = vector.broadcast %cst_56 : f32 to vector<128x128xf32>
    %153 = arith.cmpf ogt, %151, %152 : vector<128x128xf32>
    %cst_57 = arith.constant 2.000000e-01 : f32
    %154 = vector.broadcast %cst_57 : f32 to vector<128x128xf32>
    %155 = arith.mulf %154, %151 : vector<128x128xf32>
    %156 = arith.select %153, %151, %155 : vector<128x128xi1>, vector<128x128xf32>
    %157 = vector.broadcast %8 : f32 to vector<128x128xf32>
    %158 = arith.mulf %157, %156 : vector<128x128xf32>
    %159 = arith.addf %143, %158 : vector<128x128xf32>
    %160 = vector.extract_strided_slice %118 {offsets = [0, 2], sizes = [128, 1], strides = [1, 1]} : vector<128x128xf32> to vector<128x1xf32>
    %161 = vector.extract_strided_slice %128 {offsets = [2, 0], sizes = [1, 128], strides = [1, 1]} : vector<8x128xf32> to vector<1x128xf32>
    %162 = vector.broadcast %160 : vector<128x1xf32> to vector<128x128xf32>
    %163 = vector.broadcast %161 : vector<1x128xf32> to vector<128x128xf32>
    %164 = arith.addf %162, %163 : vector<128x128xf32>
    %165 = vector.broadcast %5 : f32 to vector<128x128xf32>
    %166 = arith.mulf %121, %165 : vector<128x128xf32>
    %167 = arith.addf %164, %166 : vector<128x128xf32>
    %cst_58 = arith.constant 0.000000e+00 : f32
    %168 = vector.broadcast %cst_58 : f32 to vector<128x128xf32>
    %169 = arith.cmpf ogt, %167, %168 : vector<128x128xf32>
    %cst_59 = arith.constant 2.000000e-01 : f32
    %170 = vector.broadcast %cst_59 : f32 to vector<128x128xf32>
    %171 = arith.mulf %170, %167 : vector<128x128xf32>
    %172 = arith.select %169, %167, %171 : vector<128x128xi1>, vector<128x128xf32>
    %173 = vector.broadcast %9 : f32 to vector<128x128xf32>
    %174 = arith.mulf %173, %172 : vector<128x128xf32>
    %175 = arith.addf %159, %174 : vector<128x128xf32>
    %176 = vector.extract_strided_slice %118 {offsets = [0, 3], sizes = [128, 1], strides = [1, 1]} : vector<128x128xf32> to vector<128x1xf32>
    %177 = vector.extract_strided_slice %128 {offsets = [3, 0], sizes = [1, 128], strides = [1, 1]} : vector<8x128xf32> to vector<1x128xf32>
    %178 = vector.broadcast %176 : vector<128x1xf32> to vector<128x128xf32>
    %179 = vector.broadcast %177 : vector<1x128xf32> to vector<128x128xf32>
    %180 = arith.addf %178, %179 : vector<128x128xf32>
    %181 = vector.broadcast %6 : f32 to vector<128x128xf32>
    %182 = arith.mulf %121, %181 : vector<128x128xf32>
    %183 = arith.addf %180, %182 : vector<128x128xf32>
    %cst_60 = arith.constant 0.000000e+00 : f32
    %184 = vector.broadcast %cst_60 : f32 to vector<128x128xf32>
    %185 = arith.cmpf ogt, %183, %184 : vector<128x128xf32>
    %cst_61 = arith.constant 2.000000e-01 : f32
    %186 = vector.broadcast %cst_61 : f32 to vector<128x128xf32>
    %187 = arith.mulf %186, %183 : vector<128x128xf32>
    %188 = arith.select %185, %183, %187 : vector<128x128xi1>, vector<128x128xf32>
    %189 = vector.broadcast %10 : f32 to vector<128x128xf32>
    %190 = arith.mulf %189, %188 : vector<128x128xf32>
    %191 = arith.addf %175, %190 : vector<128x128xf32>
    %cst_62 = arith.constant -1.000000e+30 : f32
    %192 = vector.broadcast %cst_62 : f32 to vector<128x128xf32>
    %193 = arith.select %126, %191, %192 : vector<128x128xi1>, vector<128x128xf32>
    %cst_63 = arith.constant dense<0xFF800000> : vector<128xf32>
    %194 = vector.multi_reduction <maximumf>, %193, %cst_63 [1] : vector<128x128xf32> to vector<128xf32>
    %195 = vector.shape_cast %194 : vector<128xf32> to vector<128x1xf32>
    %196 = vector.broadcast %195 : vector<128x1xf32> to vector<128x128xf32>
    %197 = arith.subf %193, %196 : vector<128x128xf32>
    %198 = math.exp %197 : vector<128x128xf32>
    %cst_64 = arith.constant dense<0.000000e+00> : vector<128xf32>
    %199 = vector.multi_reduction <add>, %198, %cst_64 [1] : vector<128x128xf32> to vector<128xf32>
    %200 = vector.shape_cast %199 : vector<128xf32> to vector<128x1xf32>
    %201 = tpu.reciprocal %200 {approx = true} : vector<128x1xf32> -> vector<128x1xf32>
    %202 = vector.broadcast %201 : vector<128x1xf32> to vector<128x128xf32>
    %203 = arith.mulf %198, %202 : vector<128x128xf32>
    %c1_65 = arith.constant 1 : index
    %c0_66 = arith.constant 0 : index
    %c0_67 = arith.constant 0 : index
    %204 = vector.load %arg9[%c1_65, %c0_66, %c0_67] : memref<2x16x128xf32, #tpu.memory_space<vmem>>, vector<1x16x128xf32>
    %205 = vector.shape_cast %204 : vector<1x16x128xf32> to vector<16x128xf32>
    %206 = arith.truncf %205 : vector<16x128xf32> to vector<16x128xbf16>
    %207 = arith.truncf %203 : vector<128x128xf32> to vector<128x128xbf16>
    %cst_68 = arith.constant dense<0.000000e+00> : vector<16x128xf32>
    %208 = tpu.matmul %206, %207, %cst_68 {dimension_numbers = #tpu.dot_dimension_numbers<[1], [0], [0], [1], [0, 0, 1, 1], [], []>} : vector<16x128xbf16>, vector<128x128xbf16>, vector<16x128xf32> -> vector<16x128xf32>
    %209 = arith.truncf %208 : vector<16x128xf32> to vector<16x128xbf16>
    %210 = arith.truncf %117 : vector<128x128xf32> to vector<128x128xbf16>
    %cst_69 = arith.constant dense<0.000000e+00> : vector<16x128xf32>
    %211 = tpu.matmul %209, %210, %cst_69 {dimension_numbers = #tpu.dot_dimension_numbers<[1], [0], [0], [1], [0, 0, 1, 1], [], []>} : vector<16x128xbf16>, vector<128x128xbf16>, vector<16x128xf32> -> vector<16x128xf32>
    %212 = vector.broadcast %2 : vector<1x128xf32> to vector<16x128xf32>
    %213 = arith.addf %211, %212 : vector<16x128xf32>
    %c16 = arith.constant 16 : index
    %c0_70 = arith.constant 0 : index
    %214 = vector.load %arg10[%c16, %c0_70] : memref<32x128xf32, #tpu.memory_space<vmem>>, vector<16x128xf32>
    tpu.vector_store %arg10[%c16, %c0_70], %213 {strides = array<i32>} : memref<32x128xf32, #tpu.memory_space<vmem>>, vector<16x128xf32>,
    return
  }
  func.func @transform_0(%arg0: i32) -> (i32, i32) {
    %c0_i32 = arith.constant 0 : i32
    %c0_i32_0 = arith.constant 0 : i32
    return %arg0, %c0_i32 : i32, i32
  }
  func.func @transform_1(%arg0: i32) -> (i32, i32) {
    %c0_i32 = arith.constant 0 : i32
    %c0_i32_0 = arith.constant 0 : i32
    %c0_i32_1 = arith.constant 0 : i32
    return %c0_i32, %c0_i32_0 : i32, i32
  }
  func.func @transform_2(%arg0: i32) -> (i32, i32) {
    %c0_i32 = arith.constant 0 : i32
    %c0_i32_0 = arith.constant 0 : i32
    %c0_i32_1 = arith.constant 0 : i32
    return %c0_i32, %c0_i32_0 : i32, i32
  }
  func.func @transform_3(%arg0: i32) -> (i32, i32) {
    %c0_i32 = arith.constant 0 : i32
    %c0_i32_0 = arith.constant 0 : i32
    %c0_i32_1 = arith.constant 0 : i32
    return %c0_i32, %c0_i32_0 : i32, i32
  }
  func.func @transform_4(%arg0: i32) -> (i32, i32) {
    %c0_i32 = arith.constant 0 : i32
    %c0_i32_0 = arith.constant 0 : i32
    %c0_i32_1 = arith.constant 0 : i32
    return %c0_i32, %c0_i32_0 : i32, i32
  }
  func.func @transform_5(%arg0: i32) -> (i32, i32) {
    %c0_i32 = arith.constant 0 : i32
    %c0_i32_0 = arith.constant 0 : i32
    %c0_i32_1 = arith.constant 0 : i32
    return %c0_i32, %c0_i32_0 : i32, i32
  }
  func.func @transform_6(%arg0: i32) -> (i32, i32, i32) {
    %c0_i32 = arith.constant 0 : i32
    %c0_i32_0 = arith.constant 0 : i32
    %c0_i32_1 = arith.constant 0 : i32
    return %arg0, %c0_i32, %c0_i32_0 : i32, i32, i32
  }
  func.func @transform_7(%arg0: i32) -> (i32, i32, i32) {
    %c0_i32 = arith.constant 0 : i32
    %c0_i32_0 = arith.constant 0 : i32
    %c0_i32_1 = arith.constant 0 : i32
    return %arg0, %c0_i32, %c0_i32_0 : i32, i32, i32
  }
  func.func @transform_8(%arg0: i32) -> (i32, i32, i32) {
    %c0_i32 = arith.constant 0 : i32
    %c0_i32_0 = arith.constant 0 : i32
    %c0_i32_1 = arith.constant 0 : i32
    return %arg0, %c0_i32, %c0_i32_0 : i32, i32, i32
  }
  func.func @transform_9(%arg0: i32) -> (i32, i32) {
    %c0_i32 = arith.constant 0 : i32
    %c0_i32_0 = arith.constant 0 : i32
    return %arg0, %c0_i32 : i32, i32
  }
}

</mosaic_0001>

<llo_original>
// kernel: tpu_custom_call.1
$region0: #{tpu_custom_call.1}
  #allocation0 [shape = 'u32[]', space=smem, size = 0x4, offset = 0x4, fixed_abs, tag = 'smem constant byte address 0x4 - core index']
  #allocation1 [shape = 'u32[144,128]{1,0:T(1,128)}', space=vmem, size = 0x12000, scoped, tag = 'internal scratch']
  %s0 = inlined_call_operand.vmem [shape: f32[1024,8], index: 0, kind: input, shape index: {}]
  %s1 = inlined_call_operand.vmem [shape: f32[8,256], index: 1, kind: input, shape index: {}]
  %s2 = inlined_call_operand.vmem [shape: f32[1,256], index: 2, kind: input, shape index: {}]
  %s3 = inlined_call_operand.vmem [shape: f32[1,4], index: 3, kind: input, shape index: {}]
  %s4 = inlined_call_operand.vmem [shape: f32[1,4], index: 4, kind: input, shape index: {}]
  %s5 = inlined_call_operand.vmem [shape: f32[1,128], index: 5, kind: input, shape index: {}]
  %s6 = inlined_call_operand.vmem [shape: s8[8,128,128], index: 6, kind: input, shape index: {}]
  %s7 = inlined_call_operand.vmem [shape: bf16[8,128,128], index: 7, kind: input, shape index: {}]
  %s8 = inlined_call_operand.vmem [shape: f32[8,16,128], index: 8, kind: input, shape index: {}]
  %s9 = inlined_call_operand.hbm [shape: f32[128,128], index: 9, kind: output, shape index: {}]
  %s10 = sld [smem:[#allocation0]]
  $region77: #{tpu_custom_call.1} parent=0
    _
  %s12 = ssub.s32 1, %s10
  %s13 = scalar_select 0, %s12, %s10
  $region1: #{tpu_custom_call.1} parent=0
    #allocation2 [shape = 'u8[512]{0}', space=smem, size = 0x200, scoped, tag = 'input window, operand 3, single buffered']
    #allocation3 [shape = 's32[2]{0}', space=sflag, size = 0x8, scoped, tag = 'scoped memory for tpu_custom_call.1']
    #allocation4 [shape = 's32[2]{0}', space=sflag, size = 0x8, scoped, tag = 'scoped memory for tpu_custom_call.1']
    #allocation5 [shape = 'u8[512]{0}', space=smem, size = 0x200, scoped, tag = 'input window, operand 4, single buffered']
    #allocation6 [shape = 's32[1]{0}', space=sflag, size = 0x4, scoped, tag = 'scoped memory for tpu_custom_call.1']
    #allocation7 [shape = 'u8[32768]{0}', space=vmem, size = 0x8000, scoped, tag = 'output window, operand 0']
    %14 = vsyncpa [#allocation4], 0
    %15 = vsyncpa [#allocation6], 0
    %16 = vsyncpa [#allocation3], 0
    %s17 = scalar_lea.sflag [#allocation3], 1
    %18 = vsyncpa %s17, 0
    loop: start=0, step=1, limit=6
    $region2: #{tpu_custom_call.1} parent=1 // loop_pre_header
      _
    $region3: #{tpu_custom_call.1} parent=1 // loop_header
      %s20 = sphi 0, %s24
      %p21 = scmp.ge.s32.totalorder %s20, 6
      %s30 = sphi 0, %s32
      %s33 = sphi 0, %s30
      %s34 = sphi 0, %s33
      %s50 = sphi 0, %s34
      %s54 = sphi 0, %s54
      %s56 = sphi 0, %s54
      %s57 = sphi 0, %s56
      %s71 = sphi 0, %s57
      %s75 = sphi 0, %s75
      %s77 = sphi 0, %s75
      %s78 = sphi 0, %s77
      %s92 = sphi 0, %s78
      %s96 = sphi 0, %s96
      %s98 = sphi 0, %s96
      %s99 = sphi 0, %s98
      %s113 = sphi 0, %s99
      %s117 = sphi 0, %s117
      %s119 = sphi 0, %s117
      %s120 = sphi 0, %s119
      %s134 = sphi 0, %s120
      %s138 = sphi 0, %s138
      %s140 = sphi 0, %s138
      %s141 = sphi 0, %s140
      %s155 = sphi 0, %s141
      %s161 = sphi 0, %s163
      %s164 = sphi 0, %s161
      %s165 = sphi 0, %s164
      %s181 = sphi 0, %s165
      %s187 = sphi 0, %s189
      %s190 = sphi 0, %s187
      %s191 = sphi 0, %s190
      %s207 = sphi 0, %s191
      %s213 = sphi 0, %s215
      %s216 = sphi 0, %s213
      %s217 = sphi 0, %s216
      %s233 = sphi 0, %s217
      %s239 = sphi 0, %s241
      %s242 = sphi 0, %s239
      %s243 = sphi 0, %s242
      %s259 = sphi 0, %s243
    $region4: #{tpu_custom_call.1} parent=1 // loop_header_branch
      %23 = sbr.rel (%p21) target = $region8
    $region5: #{tpu_custom_call.1} parent=1 // loop_body
      %s25 = ssub.s32 %s20, 1
      %s26 = ssub.s32 %s20, 2
      %s27 = sadd.s32 %s20, 1
      %s28 = ssub.s32 %s20, %s27
      %p29 = scmp.eq.s32.totalorder %s28, 0
      %s31 = sadd.s32 %s30, 1
      %s32 = scalar_select %p29, %s30, %s31
      %p35 = pneg %p29
      %p36 = scmp.eq.s32.totalorder %s20, 3
      %p37 = por %p35, %p36
      %p38 = scmp.ne.s32.totalorder %s30, %s33
      %p39 = scmp.eq.s32.totalorder %s20, 0
      %p40 = por %p38, %p39
      %p41 = scmp.ne.s32.totalorder %s30, %s33
      %p42 = scmp.eq.s32.totalorder %s25, 3
      %p43 = por %p41, %p42
      %p44 = scmp.ne.s32.totalorder %s33, %s34
      %p45 = scmp.eq.s32.totalorder %s25, 0
      %p46 = por %p44, %p45
      %p47 = scmp.ne.s32.totalorder %s33, %s34
      %p48 = scmp.eq.s32.totalorder %s26, 3
      %p49 = por %p47, %p48
      %p51 = scmp.ne.s32.totalorder %s34, %s50
      %p52 = scmp.eq.s32.totalorder %s26, 0
      %p53 = por %p51, %p52
      %s55 = sadd.s32 %s54, 1
      %p58 = scmp.eq.s32.totalorder %s20, 3
      %p59 = scmp.ne.s32.totalorder %s54, %s56
      %p60 = scmp.eq.s32.totalorder %s20, 0
      %p61 = por %p59, %p60
      %p62 = scmp.ne.s32.totalorder %s54, %s56
      %p63 = scmp.eq.s32.totalorder %s25, 3
      %p64 = por %p62, %p63
      %p65 = scmp.ne.s32.totalorder %s56, %s57
      %p66 = scmp.eq.s32.totalorder %s25, 0
      %p67 = por %p65, %p66
      %p68 = scmp.ne.s32.totalorder %s56, %s57
      %p69 = scmp.eq.s32.totalorder %s26, 3
      %p70 = por %p68, %p69
      %p72 = scmp.ne.s32.totalorder %s57, %s71
      %p73 = scmp.eq.s32.totalorder %s26, 0
      %p74 = por %p72, %p73
      %s76 = sadd.s32 %s75, 1
      %p79 = scmp.eq.s32.totalorder %s20, 3
      %p80 = scmp.ne.s32.totalorder %s75, %s77
      %p81 = scmp.eq.s32.totalorder %s20, 0
      %p82 = por %p80, %p81
      %p83 = scmp.ne.s32.totalorder %s75, %s77
      %p84 = scmp.eq.s32.totalorder %s25, 3
      %p85 = por %p83, %p84
      %p86 = scmp.ne.s32.totalorder %s77, %s78
      %p87 = scmp.eq.s32.totalorder %s25, 0
      %p88 = por %p86, %p87
      %p89 = scmp.ne.s32.totalorder %s77, %s78
      %p90 = scmp.eq.s32.totalorder %s26, 3
      %p91 = por %p89, %p90
      %p93 = scmp.ne.s32.totalorder %s78, %s92
      %p94 = scmp.eq.s32.totalorder %s26, 0
      %p95 = por %p93, %p94
      %s97 = sadd.s32 %s96, 1
      %p100 = scmp.eq.s32.totalorder %s20, 3
      %p101 = scmp.ne.s32.totalorder %s96, %s98
      %p102 = scmp.eq.s32.totalorder %s20, 0
      %p103 = por %p101, %p102
      %p104 = scmp.ne.s32.totalorder %s96, %s98
      %p105 = scmp.eq.s32.totalorder %s25, 3
      %p106 = por %p104, %p105
      %p107 = scmp.ne.s32.totalorder %s98, %s99
      %p108 = scmp.eq.s32.totalorder %s25, 0
      %p109 = por %p107, %p108
      %p110 = scmp.ne.s32.totalorder %s98, %s99
      %p111 = scmp.eq.s32.totalorder %s26, 3
      %p112 = por %p110, %p111
      %p114 = scmp.ne.s32.totalorder %s99, %s113
      %p115 = scmp.eq.s32.totalorder %s26, 0
      %p116 = por %p114, %p115
      %s118 = sadd.s32 %s117, 1
      %p121 = scmp.eq.s32.totalorder %s20, 3
      %p122 = scmp.ne.s32.totalorder %s117, %s119
      %p123 = scmp.eq.s32.totalorder %s20, 0
      %p124 = por %p122, %p123
      %p125 = scmp.ne.s32.totalorder %s117, %s119
      %p126 = scmp.eq.s32.totalorder %s25, 3
      %p127 = por %p125, %p126
      %p128 = scmp.ne.s32.totalorder %s119, %s120
      %p129 = scmp.eq.s32.totalorder %s25, 0
      %p130 = por %p128, %p129
      %p131 = scmp.ne.s32.totalorder %s119, %s120
      %p132 = scmp.eq.s32.totalorder %s26, 3
      %p133 = por %p131, %p132
      %p135 = scmp.ne.s32.totalorder %s120, %s134
      %p136 = scmp.eq.s32.totalorder %s26, 0
      %p137 = por %p135, %p136
      %s139 = sadd.s32 %s138, 1
      %p142 = scmp.eq.s32.totalorder %s20, 3
      %p143 = scmp.ne.s32.totalorder %s138, %s140
      %p144 = scmp.eq.s32.totalorder %s20, 0
      %p145 = por %p143, %p144
      %p146 = scmp.ne.s32.totalorder %s138, %s140
      %p147 = scmp.eq.s32.totalorder %s25, 3
      %p148 = por %p146, %p147
      %p149 = scmp.ne.s32.totalorder %s140, %s141
      %p150 = scmp.eq.s32.totalorder %s25, 0
      %p151 = por %p149, %p150
      %p152 = scmp.ne.s32.totalorder %s140, %s141
      %p153 = scmp.eq.s32.totalorder %s26, 3
      %p154 = por %p152, %p153
      %p156 = scmp.ne.s32.totalorder %s141, %s155
      %p157 = scmp.eq.s32.totalorder %s26, 0
      %p158 = por %p156, %p157
      %s159 = ssub.s32 %s20, %s27
      %p160 = scmp.eq.s32.totalorder %s159, 0
      %s162 = sadd.s32 %s161, 1
      %s163 = scalar_select %p160, %s161, %s162
      %p166 = pneg %p160
      %p167 = scmp.eq.s32.totalorder %s20, 3
      %p168 = por %p166, %p167
      %p169 = scmp.ne.s32.totalorder %s161, %s164
      %p170 = scmp.eq.s32.totalorder %s20, 0
      %p171 = por %p169, %p170
      %p172 = scmp.ne.s32.totalorder %s161, %s164
      %p173 = scmp.eq.s32.totalorder %s25, 3
      %p174 = por %p172, %p173
      %p175 = scmp.ne.s32.totalorder %s164, %s165
      %p176 = scmp.eq.s32.totalorder %s25, 0
      %p177 = por %p175, %p176
      %p178 = scmp.ne.s32.totalorder %s164, %s165
      %p179 = scmp.eq.s32.totalorder %s26, 3
      %p180 = por %p178, %p179
      %p182 = scmp.ne.s32.totalorder %s165, %s181
      %p183 = scmp.eq.s32.totalorder %s26, 0
      %p184 = por %p182, %p183
      %s185 = ssub.s32 %s20, %s27
      %p186 = scmp.eq.s32.totalorder %s185, 0
      %s188 = sadd.s32 %s187, 1
      %s189 = scalar_select %p186, %s187, %s188
      %p192 = pneg %p186
      %p193 = scmp.eq.s32.totalorder %s20, 3
      %p194 = por %p192, %p193
      %p195 = scmp.ne.s32.totalorder %s187, %s190
      %p196 = scmp.eq.s32.totalorder %s20, 0
      %p197 = por %p195, %p196
      %p198 = scmp.ne.s32.totalorder %s187, %s190
      %p199 = scmp.eq.s32.totalorder %s25, 3
      %p200 = por %p198, %p199
      %p201 = scmp.ne.s32.totalorder %s190, %s191
      %p202 = scmp.eq.s32.totalorder %s25, 0
      %p203 = por %p201, %p202
      %p204 = scmp.ne.s32.totalorder %s190, %s191
      %p205 = scmp.eq.s32.totalorder %s26, 3
      %p206 = por %p204, %p205
      %p208 = scmp.ne.s32.totalorder %s191, %s207
      %p209 = scmp.eq.s32.totalorder %s26, 0
      %p210 = por %p208, %p209
      %s211 = ssub.s32 %s20, %s27
      %p212 = scmp.eq.s32.totalorder %s211, 0
      %s214 = sadd.s32 %s213, 1
      %s215 = scalar_select %p212, %s213, %s214
      %p218 = pneg %p212
      %p219 = scmp.eq.s32.totalorder %s20, 3
      %p220 = por %p218, %p219
      %p221 = scmp.ne.s32.totalorder %s213, %s216
      %p222 = scmp.eq.s32.totalorder %s20, 0
      %p223 = por %p221, %p222
      %p224 = scmp.ne.s32.totalorder %s213, %s216
      %p225 = scmp.eq.s32.totalorder %s25, 3
      %p226 = por %p224, %p225
      %p227 = scmp.ne.s32.totalorder %s216, %s217
      %p228 = scmp.eq.s32.totalorder %s25, 0
      %p229 = por %p227, %p228
      %p230 = scmp.ne.s32.totalorder %s216, %s217
      %p231 = scmp.eq.s32.totalorder %s26, 3
      %p232 = por %p230, %p231
      %p234 = scmp.ne.s32.totalorder %s217, %s233
      %p235 = scmp.eq.s32.totalorder %s26, 0
      %p236 = por %p234, %p235
      %s237 = ssub.s32 %s20, %s27
      %p238 = scmp.eq.s32.totalorder %s237, 0
      %s240 = sadd.s32 %s239, 1
      %s241 = scalar_select %p238, %s239, %s240
      %p244 = pneg %p238
      %p245 = scmp.eq.s32.totalorder %s20, 3
      %p246 = por %p244, %p245
      %p247 = scmp.ne.s32.totalorder %s239, %s242
      %p248 = scmp.eq.s32.totalorder %s20, 0
      %p249 = por %p247, %p248
      %p250 = scmp.ne.s32.totalorder %s239, %s242
      %p251 = scmp.eq.s32.totalorder %s25, 3
      %p252 = por %p250, %p251
      %p253 = scmp.ne.s32.totalorder %s242, %s243
      %p254 = scmp.eq.s32.totalorder %s25, 0
      %p255 = por %p253, %p254
      %p256 = scmp.ne.s32.totalorder %s242, %s243
      %p257 = scmp.eq.s32.totalorder %s26, 3
      %p258 = por %p256, %p257
      %p260 = scmp.ne.s32.totalorder %s243, %s259
      %p261 = scmp.eq.s32.totalorder %s26, 0
      %p262 = por %p260, %p261
      %p263 = scmp.le.s32.totalorder 1, %s20
      %p264 = scmp.lt.s32.totalorder %s20, 5
      %p265 = pnand %p263, %p264
      %p266 = pneg %p265
      // Predicated region
      $region9: #{tpu_custom_call.1} parent=5 // pred_check
        _
      $region10: #{tpu_custom_call.1} parent=5 // pred_check_branch
        %268 = sbr.rel (%p265) target = $region12
      $region11: #{tpu_custom_call.1} parent=5 // pred_region
        %s269 = ssub.s32 %s20, 1
        // Predicated region
        $region13: #{tpu_custom_call.1} parent=11 // pred_check
          %p270 = pneg %p67
        $region14: #{tpu_custom_call.1} parent=11 // pred_check_branch
          %272 = sbr.rel (%p270) target = $region16
        $region15: #{tpu_custom_call.1} parent=11 // pred_region
          _
        $region16: #{tpu_custom_call.1} parent=11 // pred_fallthru
          _
        // Predicated region
        $region17: #{tpu_custom_call.1} parent=11 // pred_check
          %p273 = pneg %p88
        $region18: #{tpu_custom_call.1} parent=11 // pred_check_branch
          %275 = sbr.rel (%p273) target = $region20
        $region19: #{tpu_custom_call.1} parent=11 // pred_region
          _
        $region20: #{tpu_custom_call.1} parent=11 // pred_fallthru
          _
        // Predicated region
        $region21: #{tpu_custom_call.1} parent=11 // pred_check
          %p276 = pneg %p109
        $region22: #{tpu_custom_call.1} parent=11 // pred_check_branch
          %278 = sbr.rel (%p276) target = $region24
        $region23: #{tpu_custom_call.1} parent=11 // pred_region
          %s280 = ssub.s32 16, 16
          %281 = vsyncadd [#allocation4], %s280
          %s283 = sshll.u32 %s3, 4
          %s284 = int_to_ptr.vmem [resolvable:$true] %s283
          %286 = dma.vmem_to_smem %s284, 16, [#allocation2], [#allocation4]
        $region24: #{tpu_custom_call.1} parent=11 // pred_fallthru
          _
        // Predicated region
        $region25: #{tpu_custom_call.1} parent=11 // pred_check
          %p287 = pneg %p130
        $region26: #{tpu_custom_call.1} parent=11 // pred_check_branch
          %289 = sbr.rel (%p287) target = $region28
        $region27: #{tpu_custom_call.1} parent=11 // pred_region
          %s291 = ssub.s32 16, 16
          %292 = vsyncadd [#allocation6], %s291
          %s294 = sshll.u32 %s4, 4
          %s295 = int_to_ptr.vmem [resolvable:$true] %s294
          %297 = dma.vmem_to_smem %s295, 16, [#allocation5], [#allocation6]
        $region28: #{tpu_custom_call.1} parent=11 // pred_fallthru
          _
        // Predicated region
        $region29: #{tpu_custom_call.1} parent=11 // pred_check
          %p298 = pneg %p151
        $region30: #{tpu_custom_call.1} parent=11 // pred_check_branch
          %300 = sbr.rel (%p298) target = $region32
        $region31: #{tpu_custom_call.1} parent=11 // pred_region
          _
        $region32: #{tpu_custom_call.1} parent=11 // pred_fallthru
          _
      $region12: #{tpu_custom_call.1} parent=5 // pred_fallthru
        _
      %p301 = scmp.lt.s32.totalorder %s20, 4
      // Predicated region
      $region33: #{tpu_custom_call.1} parent=5 // pred_check
        %p302 = pneg %p301
      $region34: #{tpu_custom_call.1} parent=5 // pred_check_branch
        %304 = sbr.rel (%p302) target = $region36
      $region35: #{tpu_custom_call.1} parent=5 // pred_region
        // Predicated region
        $region37: #{tpu_custom_call.1} parent=35 // pred_check
          %p305 = pneg %p40
        $region38: #{tpu_custom_call.1} parent=35 // pred_check_branch
          %307 = sbr.rel (%p305) target = $region40
        $region39: #{tpu_custom_call.1} parent=35 // pred_region
          %s308 = smul.u32 32, %s20
          %p309 = scmp.lt.s32.totalorder %s308, 127
          %s310 = scalar_select %p309, %s308, 127
          %s311 = smul.addr %s310, 8
          %s312 = scalar_lea.vmem %s0, %s311
          %s313 = smul.u32 32, %s20
        $region40: #{tpu_custom_call.1} parent=35 // pred_fallthru
          _
        // Predicated region
        $region41: #{tpu_custom_call.1} parent=35 // pred_check
          %p314 = pneg %p171
        $region42: #{tpu_custom_call.1} parent=35 // pred_check_branch
          %316 = sbr.rel (%p314) target = $region44
        $region43: #{tpu_custom_call.1} parent=35 // pred_region
          %s317 = smul.u32 2, %s20
          %p318 = scmp.lt.s32.totalorder %s317, 7
          %s319 = scalar_select %p318, %s317, 7
          %s320 = smul.addr %s319, 4
          %s321 = smul.addr %s320, 8
          %s322 = scalar_lea.vmem %s6, %s321
          %s323 = smul.u32 2, %s20
        $region44: #{tpu_custom_call.1} parent=35 // pred_fallthru
          _
        // Predicated region
        $region45: #{tpu_custom_call.1} parent=35 // pred_check
          %p324 = pneg %p197
        $region46: #{tpu_custom_call.1} parent=35 // pred_check_branch
          %326 = sbr.rel (%p324) target = $region48
        $region47: #{tpu_custom_call.1} parent=35 // pred_region
          %s327 = smul.u32 2, %s20
          %p328 = scmp.lt.s32.totalorder %s327, 7
          %s329 = scalar_select %p328, %s327, 7
          %s330 = smul.addr %s329, 16
          %s331 = smul.addr %s330, 4
          %s332 = scalar_lea.vmem %s7, %s331
          %s333 = smul.u32 2, %s20
        $region48: #{tpu_custom_call.1} parent=35 // pred_fallthru
          _
        // Predicated region
        $region49: #{tpu_custom_call.1} parent=35 // pred_check
          %p334 = pneg %p223
        $region50: #{tpu_custom_call.1} parent=35 // pred_check_branch
          %336 = sbr.rel (%p334) target = $region52
        $region51: #{tpu_custom_call.1} parent=35 // pred_region
          %s337 = smul.u32 2, %s20
          %p338 = scmp.lt.s32.totalorder %s337, 7
          %s339 = scalar_select %p338, %s337, 7
          %s340 = smul.addr %s339, 2
          %s341 = smul.addr %s340, 8
          %s342 = scalar_lea.vmem %s8, %s341
          %s343 = smul.u32 2, %s20
        $region52: #{tpu_custom_call.1} parent=35 // pred_fallthru
          _
      $region36: #{tpu_custom_call.1} parent=5 // pred_fallthru
        _
      %p344 = scmp.le.s32.totalorder 1, %s20
      %p345 = scmp.lt.s32.totalorder %s20, 5
      %p346 = pnand %p344, %p345
      %p347 = pneg %p346
      // Predicated region
      $region53: #{tpu_custom_call.1} parent=5 // pred_check
        _
      $region54: #{tpu_custom_call.1} parent=5 // pred_check_branch
        %349 = sbr.rel (%p346) target = $region56
      $region55: #{tpu_custom_call.1} parent=5 // pred_region
        %s350 = ssub.s32 %s20, 1
        // Predicated region
        $region57: #{tpu_custom_call.1} parent=55 // pred_check
          %p351 = pneg %p109
        $region58: #{tpu_custom_call.1} parent=55 // pred_check_branch
          %353 = sbr.rel (%p351) target = $region60
        $region59: #{tpu_custom_call.1} parent=55 // pred_region
          %354 = dma.done [#allocation4], 16
        $region60: #{tpu_custom_call.1} parent=55 // pred_fallthru
          _
        // Predicated region
        $region61: #{tpu_custom_call.1} parent=55 // pred_check
          %p355 = pneg %p130
        $region62: #{tpu_custom_call.1} parent=55 // pred_check_branch
          %357 = sbr.rel (%p355) target = $region64
        $region63: #{tpu_custom_call.1} parent=55 // pred_region
          %358 = dma.done [#allocation6], 16
        $region64: #{tpu_custom_call.1} parent=55 // pred_fallthru
          _
        %359 = sfence
        %s360 = smul.u32 32, %s25
        %p361 = scmp.lt.s32.totalorder %s360, 127
        %s362 = scalar_select %p361, %s360, 127
        %s363 = smul.addr %s362, 8
        %s364 = scalar_lea.vmem %s0, %s363
        %p365 = pneg %p46
        %p366 = pneg %p43
        %p367 = pneg %p67
        %p368 = pneg %p64
        %p369 = pneg %p88
        %p370 = pneg %p85
        %p371 = pneg %p109
        %p372 = pneg %p106
        %p373 = pneg %p130
        %p374 = pneg %p127
        %p375 = pneg %p151
        %p376 = pneg %p148
        %s377 = smul.u32 2, %s25
        %p378 = scmp.lt.s32.totalorder %s377, 7
        %s379 = scalar_select %p378, %s377, 7
        %s380 = smul.addr %s379, 4
        %s381 = smul.addr %s380, 8
        %s382 = scalar_lea.vmem %s6, %s381
        %p383 = pneg %p177
        %p384 = pneg %p174
        %s385 = smul.u32 2, %s25
        %p386 = scmp.lt.s32.totalorder %s385, 7
        %s387 = scalar_select %p386, %s385, 7
        %s388 = smul.addr %s387, 16
        %s389 = smul.addr %s388, 4
        %s390 = scalar_lea.vmem %s7, %s389
        %p391 = pneg %p203
        %p392 = pneg %p200
        %s393 = smul.u32 2, %s25
        %p394 = scmp.lt.s32.totalorder %s393, 7
        %s395 = scalar_select %p394, %s393, 7
        %s396 = smul.addr %s395, 2
        %s397 = smul.addr %s396, 8
        %s398 = scalar_lea.vmem %s8, %s397
        %p399 = pneg %p229
        %p400 = pneg %p226
        %p401 = pneg %p255
        %p402 = pneg %p252
        %s403 = sand.u32 %s242, 1
        %s404 = scalar_lea.sflag [#allocation3], %s403
        %s405 = sand.u32 %s242, 1
        %s406 = smul.addr %s405, 32
        %s407 = scalar_lea.vmem [#allocation7], %s406
        %s408 = smul.u32 32, %s25
        %p409 = scmp.lt.s32.totalorder %s408, 127
        %s410 = scalar_select %p409, %s408, 127
        %s411 = smul.addr %s410, 8
        %s412 = scalar_lea.vmem %s0, %s411
        %s413 = smul.u32 32, %s25
        %s414 = smul.u32 2, %s25
        %p415 = scmp.lt.s32.totalorder %s414, 7
        %s416 = scalar_select %p415, %s414, 7
        %s417 = smul.addr %s416, 4
        %s418 = smul.addr %s417, 8
        %s419 = scalar_lea.vmem %s6, %s418
        %s420 = smul.u32 2, %s25
        %s421 = smul.u32 2, %s25
        %p422 = scmp.lt.s32.totalorder %s421, 7
        %s423 = scalar_select %p422, %s421, 7
        %s424 = smul.addr %s423, 16
        %s425 = smul.addr %s424, 4
        %s426 = scalar_lea.vmem %s7, %s425
        %s427 = smul.u32 2, %s25
        %s428 = smul.u32 2, %s25
        %p429 = scmp.lt.s32.totalorder %s428, 7
        %s430 = scalar_select %p429, %s428, 7
        %s431 = smul.addr %s430, 2
        %s432 = smul.addr %s431, 8
        %s433 = scalar_lea.vmem %s8, %s432
        %s434 = smul.u32 2, %s25
        %s435 = smul.u32 4, %s25
        %v437 = vld [vmem:[%s1] sm:$0xff]
        %v438 = vld [vmem:[%s1 + $0x8] sm:$0xff]
        %v439 = vld [vmem:[%s2] sm:$0x3]
        %v440 = vld [vmem:[%s5] sm:$0x1]
        %s441 = sld [smem:[#allocation2]]
        %s442 = sld [smem:[#allocation2 + $0x1]]
        %s443 = sld [smem:[#allocation2 + $0x2]]
        %s444 = sld [smem:[#allocation2 + $0x3]]
        %s445 = sld [smem:[#allocation5]]
        %s446 = sld [smem:[#allocation5 + $0x1]]
        %s447 = sld [smem:[#allocation5 + $0x2]]
        %s448 = sld [smem:[#allocation5 + $0x3]]
        %v449 = vld [vmem:[%s412] sm:$0xff]
        %v450 = vld [vmem:[%s412 + $0x8] sm:$0xff]
        %v451 = vld [vmem:[%s412 + $0x10] sm:$0xff]
        %v452 = vld [vmem:[%s412 + $0x18] sm:$0xff]
        %v453 = vld [vmem:[%s412 + $0x20] sm:$0xff]
        %v454 = vld [vmem:[%s412 + $0x28] sm:$0xff]
        %v455 = vld [vmem:[%s412 + $0x30] sm:$0xff]
        %v456 = vld [vmem:[%s412 + $0x38] sm:$0xff]
        %v457 = vld [vmem:[%s412 + $0x40] sm:$0xff]
        %v458 = vld [vmem:[%s412 + $0x48] sm:$0xff]
        %v459 = vld [vmem:[%s412 + $0x50] sm:$0xff]
        %v460 = vld [vmem:[%s412 + $0x58] sm:$0xff]
        %v461 = vld [vmem:[%s412 + $0x60] sm:$0xff]
        %v462 = vld [vmem:[%s412 + $0x68] sm:$0xff]
        %v463 = vld [vmem:[%s412 + $0x70] sm:$0xff]
        %v464 = vld [vmem:[%s412 + $0x78] sm:$0xff]
        %v466 = vlaneseq
        %v467 = vshrl.u32 %v466, 7
        %v468 = vsub.s32 0, %v467
        %v469 = vrot.slane %v439, %v468
        %v470 = vlaneseq
        %v471 = vshrl.u32 %v470, 7
        %v472 = vsub.s32 1, %v471
        %v473 = vrot.slane %v439, %v472
        %vm476 = vcmask 64512
        %v478 = vsel %vm476, %v449, 0
        %v481 = vsel %vm476, %v450, 0
        %v484 = vsel %vm476, %v451, 0
        %v487 = vsel %vm476, %v452, 0
        %v490 = vsel %vm476, %v453, 0
        %v493 = vsel %vm476, %v454, 0
        %v496 = vsel %vm476, %v455, 0
        %v499 = vsel %vm476, %v456, 0
        %v502 = vsel %vm476, %v457, 0
        %v505 = vsel %vm476, %v458, 0
        %v508 = vsel %vm476, %v459, 0
        %v511 = vsel %vm476, %v460, 0
        %v514 = vsel %vm476, %v461, 0
        %v517 = vsel %vm476, %v462, 0
        %v520 = vsel %vm476, %v463, 0
        %v523 = vsel %vm476, %v464, 0
        %525 = vmatprep.subr.mxu0 %v438
        %526 = vmatpush1.msra.mxu0 %v437
        %527 = vmatprep.subr.mxu0 0.0
        %528 = vmatpush1.msra.mxu0 0.0
        %529 = vmatprep.subr.mxu0 0.0
        %530 = vmatpush1.msra.mxu0 0.0
        %531 = vmatprep.subr.mxu0 0.0
        %532 = vmatpush1.msra.mxu0 0.0
        %533 = vmatprep.subr.mxu0 0.0
        %534 = vmatpush1.msra.mxu0 0.0
        %535 = vmatprep.subr.mxu0 0.0
        %536 = vmatpush1.msra.mxu0 0.0
        %537 = vmatprep.subr.mxu0 0.0
        %538 = vmatpush1.msra.mxu0 0.0
        %539 = vmatprep.subr.mxu0 0.0
        %540 = vmatpush1.msra.mxu0 0.0
        %541 = vmatprep.subr.mxu0 0.0
        %542 = vmatpush1.msra.mxu0 0.0
        %543 = vmatprep.subr.mxu0 0.0
        %544 = vmatpush1.msra.mxu0 0.0
        %545 = vmatprep.subr.mxu0 0.0
        %546 = vmatpush1.msra.mxu0 0.0
        %547 = vmatprep.subr.mxu0 0.0
        %548 = vmatpush1.msra.mxu0 0.0
        %549 = vmatprep.subr.mxu0 0.0
        %550 = vmatpush1.msra.mxu0 0.0
        %551 = vmatprep.subr.mxu0 0.0
        %552 = vmatpush1.msra.mxu0 0.0
        %553 = vmatprep.subr.mxu0 0.0
        %554 = vmatpush1.msra.mxu0 0.0
        %555 = vmatprep.subr.mxu0 0.0
        %556 = vmatpush1.msra.mxu0 0.0
        %557 = vmatprep.subr.mxu0 0.0
        %558 = vmatpush1.msra.mxu0 0.0
        %559 = vmatprep.subr.mxu0 0.0
        %560 = vmatpush1.msra.mxu0 0.0
        %561 = vmatprep.subr.mxu0 0.0
        %562 = vmatpush1.msra.mxu0 0.0
        %563 = vmatprep.subr.mxu0 0.0
        %564 = vmatpush1.msra.mxu0 0.0
        %565 = vmatprep.subr.mxu0 0.0
        %566 = vmatpush1.msra.mxu0 0.0
        %567 = vmatprep.subr.mxu0 0.0
        %568 = vmatpush1.msra.mxu0 0.0
        %569 = vmatprep.subr.mxu0 0.0
        %570 = vmatpush1.msra.mxu0 0.0
        %571 = vmatprep.subr.mxu0 0.0
        %572 = vmatpush1.msra.mxu0 0.0
        %573 = vmatprep.subr.mxu0 0.0
        %574 = vmatpush1.msra.mxu0 0.0
        %575 = vmatprep.subr.mxu0 0.0
        %576 = vmatpush1.msra.mxu0 0.0
        %577 = vmatprep.subr.mxu0 0.0
        %578 = vmatpush1.msra.mxu0 0.0
        %579 = vmatprep.subr.mxu0 0.0
        %580 = vmatpush1.msra.mxu0 0.0
        %581 = vmatprep.subr.mxu0 0.0
        %582 = vmatpush1.msra.mxu0 0.0
        %583 = vmatprep.subr.mxu0 0.0
        %584 = vmatpush1.msra.mxu0 0.0
        %585 = vmatprep.subr.mxu0 0.0
        %586 = vmatpush1.msra.mxu0 0.0
        %587 = vmatprep.subr.mxu0 0.0
        %588 = vmatpush1.msra.mxu0 0.0
        %589 = vmatprep.mubr.f32.mxu0 0.0
        %590 = vmatmul.mubr.f32.gmra.mrb[0].mxu0 %v478
        %v591 = vpop.f32.mrb[0].mxu0
        %v592 = vadd.f32 %v469, %v591
        %v593 = vpop.f32.mrb[0].mxu0
        %v594 = vadd.f32 %v473, %v593
        %595 = vmatprep.mubr.f32.mxu0 0.0
        %596 = vmatmul.mubr.f32.gmra.mrb[0].mxu0 %v481
        %v597 = vpop.f32.mrb[0].mxu0
        %v598 = vadd.f32 %v469, %v597
        %v599 = vpop.f32.mrb[0].mxu0
        %v600 = vadd.f32 %v473, %v599
        %601 = vmatprep.mubr.f32.mxu0 0.0
        %602 = vmatmul.mubr.f32.gmra.mrb[0].mxu0 %v484
        %v603 = vpop.f32.mrb[0].mxu0
        %v604 = vadd.f32 %v469, %v603
        %v605 = vpop.f32.mrb[0].mxu0
        %v606 = vadd.f32 %v473, %v605
        %607 = vmatprep.mubr.f32.mxu0 0.0
        %608 = vmatmul.mubr.f32.gmra.mrb[0].mxu0 %v487
        %v609 = vpop.f32.mrb[0].mxu0
        %v610 = vadd.f32 %v469, %v609
        %v611 = vpop.f32.mrb[0].mxu0
        %v612 = vadd.f32 %v473, %v611
        %613 = vmatprep.mubr.f32.mxu0 0.0
        %614 = vmatmul.mubr.f32.gmra.mrb[0].mxu0 %v490
        %v615 = vpop.f32.mrb[0].mxu0
        %v616 = vadd.f32 %v469, %v615
        %v617 = vpop.f32.mrb[0].mxu0
        %v618 = vadd.f32 %v473, %v617
        %619 = vmatprep.mubr.f32.mxu0 0.0
        %620 = vmatmul.mubr.f32.gmra.mrb[0].mxu0 %v493
        %v621 = vpop.f32.mrb[0].mxu0
        %v622 = vadd.f32 %v469, %v621
        %v623 = vpop.f32.mrb[0].mxu0
        %v624 = vadd.f32 %v473, %v623
        %625 = vmatprep.mubr.f32.mxu0 0.0
        %626 = vmatmul.mubr.f32.gmra.mrb[0].mxu0 %v496
        %v627 = vpop.f32.mrb[0].mxu0
        %v628 = vadd.f32 %v469, %v627
        %v629 = vpop.f32.mrb[0].mxu0
        %v630 = vadd.f32 %v473, %v629
        %631 = vmatprep.mubr.f32.mxu0 0.0
        %632 = vmatmul.mubr.f32.gmra.mrb[0].mxu0 %v499
        %v633 = vpop.f32.mrb[0].mxu0
        %v634 = vadd.f32 %v469, %v633
        %v635 = vpop.f32.mrb[0].mxu0
        %v636 = vadd.f32 %v473, %v635
        %637 = vmatprep.mubr.f32.mxu0 0.0
        %638 = vmatmul.mubr.f32.gmra.mrb[0].mxu0 %v502
        %v639 = vpop.f32.mrb[0].mxu0
        %v640 = vadd.f32 %v469, %v639
        %v641 = vpop.f32.mrb[0].mxu0
        %v642 = vadd.f32 %v473, %v641
        %643 = vmatprep.mubr.f32.mxu0 0.0
        %644 = vmatmul.mubr.f32.gmra.mrb[0].mxu0 %v505
        %v645 = vpop.f32.mrb[0].mxu0
        %v646 = vadd.f32 %v469, %v645
        %v647 = vpop.f32.mrb[0].mxu0
        %v648 = vadd.f32 %v473, %v647
        %649 = vmatprep.mubr.f32.mxu0 0.0
        %650 = vmatmul.mubr.f32.gmra.mrb[0].mxu0 %v508
        %v651 = vpop.f32.mrb[0].mxu0
        %v652 = vadd.f32 %v469, %v651
        %v653 = vpop.f32.mrb[0].mxu0
        %v654 = vadd.f32 %v473, %v653
        %655 = vmatprep.mubr.f32.mxu0 0.0
        %656 = vmatmul.mubr.f32.gmra.mrb[0].mxu0 %v511
        %v657 = vpop.f32.mrb[0].mxu0
        %v658 = vadd.f32 %v469, %v657
        %v659 = vpop.f32.mrb[0].mxu0
        %v660 = vadd.f32 %v473, %v659
        %661 = vmatprep.mubr.f32.mxu0 0.0
        %662 = vmatmul.mubr.f32.gmra.mrb[0].mxu0 %v514
        %v663 = vpop.f32.mrb[0].mxu0
        %v664 = vadd.f32 %v469, %v663
        %v665 = vpop.f32.mrb[0].mxu0
        %v666 = vadd.f32 %v473, %v665
        %667 = vmatprep.mubr.f32.mxu0 0.0
        %668 = vmatmul.mubr.f32.gmra.mrb[0].mxu0 %v517
        %v669 = vpop.f32.mrb[0].mxu0
        %v670 = vadd.f32 %v469, %v669
        %v671 = vpop.f32.mrb[0].mxu0
        %v672 = vadd.f32 %v473, %v671
        %673 = vmatprep.mubr.f32.mxu0 0.0
        %674 = vmatmul.mubr.f32.gmra.mrb[0].mxu0 %v520
        %v675 = vpop.f32.mrb[0].mxu0
        %v676 = vadd.f32 %v469, %v675
        %v677 = vpop.f32.mrb[0].mxu0
        %v678 = vadd.f32 %v473, %v677
        %679 = vmatprep.mubr.f32.mxu0 0.0
        %680 = vmatmul.mubr.f32.gmra.mrb[0].mxu0 %v523
        %v681 = vpop.f32.mrb[0].mxu0
        %v682 = vadd.f32 %v469, %v681
        %v683 = vpop.f32.mrb[0].mxu0
        %v684 = vadd.f32 %v473, %v683
        %685 = vdwg.mxu0
        %v686 = vld [vmem:[%s426] sm:$0xf]
        %v687 = vld [vmem:[%s426 + $0x4] sm:$0xf]
        %v688 = vld [vmem:[%s426 + $0x8] sm:$0xf]
        %v689 = vld [vmem:[%s426 + $0xc] sm:$0xf]
        %v690 = vld [vmem:[%s426 + $0x10] sm:$0xf]
        %v691 = vld [vmem:[%s426 + $0x14] sm:$0xf]
        %v692 = vld [vmem:[%s426 + $0x18] sm:$0xf]
        %v693 = vld [vmem:[%s426 + $0x1c] sm:$0xf]
        %v694 = vld [vmem:[%s426 + $0x20] sm:$0xf]
        %v695 = vld [vmem:[%s426 + $0x24] sm:$0xf]
        %v696 = vld [vmem:[%s426 + $0x28] sm:$0xf]
        %v697 = vld [vmem:[%s426 + $0x2c] sm:$0xf]
        %v698 = vld [vmem:[%s426 + $0x30] sm:$0xf]
        %v699 = vld [vmem:[%s426 + $0x34] sm:$0xf]
        %v700 = vld [vmem:[%s426 + $0x38] sm:$0xf]
        %v701 = vld [vmem:[%s426 + $0x3c] sm:$0xf]
        %v702 = vunpack.c.l.bf16 %v686
        %v703 = vunpack.c.l.bf16 %v687
        %v704 = vunpack.c.l.bf16 %v688
        %v705 = vunpack.c.l.bf16 %v689
        %v706 = vunpack.c.l.bf16 %v690
        %v707 = vunpack.c.l.bf16 %v691
        %v708 = vunpack.c.l.bf16 %v692
        %v709 = vunpack.c.l.bf16 %v693
        %v710 = vunpack.c.l.bf16 %v694
        %v711 = vunpack.c.l.bf16 %v695
        %v712 = vunpack.c.l.bf16 %v696
        %v713 = vunpack.c.l.bf16 %v697
        %v714 = vunpack.c.l.bf16 %v698
        %v715 = vunpack.c.l.bf16 %v699
        %v716 = vunpack.c.l.bf16 %v700
        %v717 = vunpack.c.l.bf16 %v701
        %v718 = vld [vmem:[%s419] sm:$0xff]
        %v719 = vld [vmem:[%s419 + $0x8] sm:$0xff]
        %v720 = vld [vmem:[%s419 + $0x10] sm:$0xff]
        %v721 = vld [vmem:[%s419 + $0x18] sm:$0xff]
        %v722 = vunpack.c.0.s8 %v718
        %v723 = vunpack.c.1.s8 %v718
        %v724 = vunpack.c.2.s8 %v718
        %v725 = vunpack.c.3.s8 %v718
        %v726 = vunpack.c.0.s8 %v719
        %v727 = vunpack.c.1.s8 %v719
        %v728 = vunpack.c.2.s8 %v719
        %v729 = vunpack.c.3.s8 %v719
        %v730 = vunpack.c.0.s8 %v720
        %v731 = vunpack.c.1.s8 %v720
        %v732 = vunpack.c.2.s8 %v720
        %v733 = vunpack.c.3.s8 %v720
        %v734 = vunpack.c.0.s8 %v721
        %v735 = vunpack.c.1.s8 %v721
        %v736 = vunpack.c.2.s8 %v721
        %v737 = vunpack.c.3.s8 %v721
        %v738 = vcvt.s32.f32 %v722
        %v739 = vcvt.s32.f32 %v723
        %v740 = vcvt.s32.f32 %v724
        %v741 = vcvt.s32.f32 %v725
        %v742 = vcvt.s32.f32 %v726
        %v743 = vcvt.s32.f32 %v727
        %v744 = vcvt.s32.f32 %v728
        %v745 = vcvt.s32.f32 %v729
        %v746 = vcvt.s32.f32 %v730
        %v747 = vcvt.s32.f32 %v731
        %v748 = vcvt.s32.f32 %v732
        %v749 = vcvt.s32.f32 %v733
        %v750 = vcvt.s32.f32 %v734
        %v751 = vcvt.s32.f32 %v735
        %v752 = vcvt.s32.f32 %v736
        %v753 = vcvt.s32.f32 %v737
        %vm754 = vcmp.gt.f32.partialorder %v738, 0.0
        %vm755 = vcmp.gt.f32.partialorder %v739, 0.0
        %vm756 = vcmp.gt.f32.partialorder %v740, 0.0
        %vm757 = vcmp.gt.f32.partialorder %v741, 0.0
        %vm758 = vcmp.gt.f32.partialorder %v742, 0.0
        %vm759 = vcmp.gt.f32.partialorder %v743, 0.0
        %vm760 = vcmp.gt.f32.partialorder %v744, 0.0
        %vm761 = vcmp.gt.f32.partialorder %v745, 0.0
        %vm762 = vcmp.gt.f32.partialorder %v746, 0.0
        %vm763 = vcmp.gt.f32.partialorder %v747, 0.0
        %vm764 = vcmp.gt.f32.partialorder %v748, 0.0
        %vm765 = vcmp.gt.f32.partialorder %v749, 0.0
        %vm766 = vcmp.gt.f32.partialorder %v750, 0.0
        %vm767 = vcmp.gt.f32.partialorder %v751, 0.0
        %vm768 = vcmp.gt.f32.partialorder %v752, 0.0
        %vm769 = vcmp.gt.f32.partialorder %v753, 0.0
        %770 = vxpose.xlu0.b32.start [1/16] %v592, 128
        %771 = vxpose.xlu0.b32.cont [2/16] %v598, 128
        %772 = vxpose.xlu0.b32.cont [3/16] %v604, 128
        %773 = vxpose.xlu0.b32.cont [4/16] %v610, 128
        %774 = vxpose.xlu0.b32.cont [5/16] %v616, 128
        %775 = vxpose.xlu0.b32.cont [6/16] %v622, 128
        %776 = vxpose.xlu0.b32.cont [7/16] %v628, 128
        %777 = vxpose.xlu0.b32.cont [8/16] %v634, 128
        %778 = vxpose.xlu0.b32.cont [9/16] %v640, 128
        %779 = vxpose.xlu0.b32.cont [10/16] %v646, 128
        %780 = vxpose.xlu0.b32.cont [11/16] %v652, 128
        %781 = vxpose.xlu0.b32.cont [12/16] %v658, 128
        %782 = vxpose.xlu0.b32.cont [13/16] %v664, 128
        %783 = vxpose.xlu0.b32.cont [14/16] %v670, 128
        %784 = vxpose.xlu0.b32.cont [15/16] %v676, 128
        %785 = vxpose.xlu0.b32.end [16/16] %v682, 128
        %v786 = vpop.trf.xlu0
        %v787 = vpop.trf.xlu0
        %v788 = vpop.trf.xlu0
        %v789 = vpop.trf.xlu0
        %v790 = vpop.trf.xlu0
        %v791 = vpop.trf.xlu0
        %v792 = vpop.trf.xlu0
        %v793 = vpop.trf.xlu0
        %v794 = vpop.trf.xlu0
        %v795 = vpop.trf.xlu0
        %v796 = vpop.trf.xlu0
        %v797 = vpop.trf.xlu0
        %v798 = vpop.trf.xlu0
        %v799 = vpop.trf.xlu0
        %v800 = vpop.trf.xlu0
        %v801 = vpop.trf.xlu0
        %803 = vset.pattern.permute.xlu0 0
        %804 = vperm.xlu0 %803, %v594
        %v805 = vpop.permute.xlu0 %804
        %808 = vset.pattern.permute.xlu0 0
        %809 = vperm.xlu0 %808, %v600
        %v810 = vpop.permute.xlu0 %809
        %813 = vset.pattern.permute.xlu0 0
        %814 = vperm.xlu0 %813, %v606
        %v815 = vpop.permute.xlu0 %814
        %818 = vset.pattern.permute.xlu0 0
        %819 = vperm.xlu0 %818, %v612
        %v820 = vpop.permute.xlu0 %819
        %823 = vset.pattern.permute.xlu0 0
        %824 = vperm.xlu0 %823, %v618
        %v825 = vpop.permute.xlu0 %824
        %828 = vset.pattern.permute.xlu0 0
        %829 = vperm.xlu0 %828, %v624
        %v830 = vpop.permute.xlu0 %829
        %833 = vset.pattern.permute.xlu0 0
        %834 = vperm.xlu0 %833, %v630
        %v835 = vpop.permute.xlu0 %834
        %838 = vset.pattern.permute.xlu0 0
        %839 = vperm.xlu0 %838, %v636
        %v840 = vpop.permute.xlu0 %839
        %843 = vset.pattern.permute.xlu0 0
        %844 = vperm.xlu0 %843, %v642
        %v845 = vpop.permute.xlu0 %844
        %848 = vset.pattern.permute.xlu0 0
        %849 = vperm.xlu0 %848, %v648
        %v850 = vpop.permute.xlu0 %849
        %853 = vset.pattern.permute.xlu0 0
        %854 = vperm.xlu0 %853, %v654
        %v855 = vpop.permute.xlu0 %854
        %858 = vset.pattern.permute.xlu0 0
        %859 = vperm.xlu0 %858, %v660
        %v860 = vpop.permute.xlu0 %859
        %863 = vset.pattern.permute.xlu0 0
        %864 = vperm.xlu0 %863, %v666
        %v865 = vpop.permute.xlu0 %864
        %868 = vset.pattern.permute.xlu0 0
        %869 = vperm.xlu0 %868, %v672
        %v870 = vpop.permute.xlu0 %869
        %873 = vset.pattern.permute.xlu0 0
        %874 = vperm.xlu0 %873, %v678
        %v875 = vpop.permute.xlu0 %874
        %878 = vset.pattern.permute.xlu0 0
        %879 = vperm.xlu0 %878, %v684
        %v880 = vpop.permute.xlu0 %879
        %v882 = vlaneseq
        %v883 = vshrl.u32 %v882, 7
        %v884 = vsub.s32 0, %v883
        %v885 = vrot.slane %v786, %v884
        %v886 = vadd.f32 %v805, %v885
        %v887 = vadd.f32 %v810, %v885
        %v888 = vadd.f32 %v815, %v885
        %v889 = vadd.f32 %v820, %v885
        %v890 = vadd.f32 %v825, %v885
        %v891 = vadd.f32 %v830, %v885
        %v892 = vadd.f32 %v835, %v885
        %v893 = vadd.f32 %v840, %v885
        %v894 = vadd.f32 %v845, %v885
        %v895 = vadd.f32 %v850, %v885
        %v896 = vadd.f32 %v855, %v885
        %v897 = vadd.f32 %v860, %v885
        %v898 = vadd.f32 %v865, %v885
        %v899 = vadd.f32 %v870, %v885
        %v900 = vadd.f32 %v875, %v885
        %v901 = vadd.f32 %v880, %v885
        %v902 = vstv %s441
        %v903 = vmul.f32 %v702, %v902
        %v904 = vmul.f32 %v703, %v902
        %v905 = vmul.f32 %v704, %v902
        %v906 = vmul.f32 %v705, %v902
        %v907 = vmul.f32 %v706, %v902
        %v908 = vmul.f32 %v707, %v902
        %v909 = vmul.f32 %v708, %v902
        %v910 = vmul.f32 %v709, %v902
        %v911 = vmul.f32 %v710, %v902
        %v912 = vmul.f32 %v711, %v902
        %v913 = vmul.f32 %v712, %v902
        %v914 = vmul.f32 %v713, %v902
        %v915 = vmul.f32 %v714, %v902
        %v916 = vmul.f32 %v715, %v902
        %v917 = vmul.f32 %v716, %v902
        %v918 = vmul.f32 %v717, %v902
        %v919 = vadd.f32 %v886, %v903
        %v920 = vadd.f32 %v887, %v904
        %v921 = vadd.f32 %v888, %v905
        %v922 = vadd.f32 %v889, %v906
        %v923 = vadd.f32 %v890, %v907
        %v924 = vadd.f32 %v891, %v908
        %v925 = vadd.f32 %v892, %v909
        %v926 = vadd.f32 %v893, %v910
        %v927 = vadd.f32 %v894, %v911
        %v928 = vadd.f32 %v895, %v912
        %v929 = vadd.f32 %v896, %v913
        %v930 = vadd.f32 %v897, %v914
        %v931 = vadd.f32 %v898, %v915
        %v932 = vadd.f32 %v899, %v916
        %v933 = vadd.f32 %v900, %v917
        %v934 = vadd.f32 %v901, %v918
        %vm935 = vcmp.gt.f32.partialorder %v919, 0.0
        %vm936 = vcmp.gt.f32.partialorder %v920, 0.0
        %vm937 = vcmp.gt.f32.partialorder %v921, 0.0
        %vm938 = vcmp.gt.f32.partialorder %v922, 0.0
        %vm939 = vcmp.gt.f32.partialorder %v923, 0.0
        %vm940 = vcmp.gt.f32.partialorder %v924, 0.0
        %vm941 = vcmp.gt.f32.partialorder %v925, 0.0
        %vm942 = vcmp.gt.f32.partialorder %v926, 0.0
        %vm943 = vcmp.gt.f32.partialorder %v927, 0.0
        %vm944 = vcmp.gt.f32.partialorder %v928, 0.0
        %vm945 = vcmp.gt.f32.partialorder %v929, 0.0
        %vm946 = vcmp.gt.f32.partialorder %v930, 0.0
        %vm947 = vcmp.gt.f32.partialorder %v931, 0.0
        %vm948 = vcmp.gt.f32.partialorder %v932, 0.0
        %vm949 = vcmp.gt.f32.partialorder %v933, 0.0
        %vm950 = vcmp.gt.f32.partialorder %v934, 0.0
        %v951 = vmul.f32 %v919, 0.2
        %v952 = vmul.f32 %v920, 0.2
        %v953 = vmul.f32 %v921, 0.2
        %v954 = vmul.f32 %v922, 0.2
        %v955 = vmul.f32 %v923, 0.2
        %v956 = vmul.f32 %v924, 0.2
        %v957 = vmul.f32 %v925, 0.2
        %v958 = vmul.f32 %v926, 0.2
        %v959 = vmul.f32 %v927, 0.2
        %v960 = vmul.f32 %v928, 0.2
        %v961 = vmul.f32 %v929, 0.2
        %v962 = vmul.f32 %v930, 0.2
        %v963 = vmul.f32 %v931, 0.2
        %v964 = vmul.f32 %v932, 0.2
        %v965 = vmul.f32 %v933, 0.2
        %v966 = vmul.f32 %v934, 0.2
        %v967 = vsel %vm935, %v919, %v951
        %v968 = vsel %vm936, %v920, %v952
        %v969 = vsel %vm937, %v921, %v953
        %v970 = vsel %vm938, %v922, %v954
        %v971 = vsel %vm939, %v923, %v955
        %v972 = vsel %vm940, %v924, %v956
        %v973 = vsel %vm941, %v925, %v957
        %v974 = vsel %vm942, %v926, %v958
        %v975 = vsel %vm943, %v927, %v959
        %v976 = vsel %vm944, %v928, %v960
        %v977 = vsel %vm945, %v929, %v961
        %v978 = vsel %vm946, %v930, %v962
        %v979 = vsel %vm947, %v931, %v963
        %v980 = vsel %vm948, %v932, %v964
        %v981 = vsel %vm949, %v933, %v965
        %v982 = vsel %vm950, %v934, %v966
        %v983 = vstv %s445
        %v984 = vmul.f32 %v983, %v967
        %v985 = vmul.f32 %v983, %v968
        %v986 = vmul.f32 %v983, %v969
        %v987 = vmul.f32 %v983, %v970
        %v988 = vmul.f32 %v983, %v971
        %v989 = vmul.f32 %v983, %v972
        %v990 = vmul.f32 %v983, %v973
        %v991 = vmul.f32 %v983, %v974
        %v992 = vmul.f32 %v983, %v975
        %v993 = vmul.f32 %v983, %v976
        %v994 = vmul.f32 %v983, %v977
        %v995 = vmul.f32 %v983, %v978
        %v996 = vmul.f32 %v983, %v979
        %v997 = vmul.f32 %v983, %v980
        %v998 = vmul.f32 %v983, %v981
        %v999 = vmul.f32 %v983, %v982
        %1000 = vset.pattern.permute.xlu0 1
        %1001 = vperm.xlu0 %1000, %v594
        %v1002 = vpop.permute.xlu0 %1001
        %1004 = vset.pattern.permute.xlu0 1
        %1005 = vperm.xlu0 %1004, %v600
        %v1006 = vpop.permute.xlu0 %1005
        %1008 = vset.pattern.permute.xlu0 1
        %1009 = vperm.xlu0 %1008, %v606
        %v1010 = vpop.permute.xlu0 %1009
        %1012 = vset.pattern.permute.xlu0 1
        %1013 = vperm.xlu0 %1012, %v612
        %v1014 = vpop.permute.xlu0 %1013
        %1016 = vset.pattern.permute.xlu0 1
        %1017 = vperm.xlu0 %1016, %v618
        %v1018 = vpop.permute.xlu0 %1017
        %1020 = vset.pattern.permute.xlu0 1
        %1021 = vperm.xlu0 %1020, %v624
        %v1022 = vpop.permute.xlu0 %1021
        %1024 = vset.pattern.permute.xlu0 1
        %1025 = vperm.xlu0 %1024, %v630
        %v1026 = vpop.permute.xlu0 %1025
        %1028 = vset.pattern.permute.xlu0 1
        %1029 = vperm.xlu0 %1028, %v636
        %v1030 = vpop.permute.xlu0 %1029
        %1032 = vset.pattern.permute.xlu0 1
        %1033 = vperm.xlu0 %1032, %v642
        %v1034 = vpop.permute.xlu0 %1033
        %1036 = vset.pattern.permute.xlu0 1
        %1037 = vperm.xlu0 %1036, %v648
        %v1038 = vpop.permute.xlu0 %1037
        %1040 = vset.pattern.permute.xlu0 1
        %1041 = vperm.xlu0 %1040, %v654
        %v1042 = vpop.permute.xlu0 %1041
        %1044 = vset.pattern.permute.xlu0 1
        %1045 = vperm.xlu0 %1044, %v660
        %v1046 = vpop.permute.xlu0 %1045
        %1048 = vset.pattern.permute.xlu0 1
        %1049 = vperm.xlu0 %1048, %v666
        %v1050 = vpop.permute.xlu0 %1049
        %1052 = vset.pattern.permute.xlu0 1
        %1053 = vperm.xlu0 %1052, %v672
        %v1054 = vpop.permute.xlu0 %1053
        %1056 = vset.pattern.permute.xlu0 1
        %1057 = vperm.xlu0 %1056, %v678
        %v1058 = vpop.permute.xlu0 %1057
        %1060 = vset.pattern.permute.xlu0 1
        %1061 = vperm.xlu0 %1060, %v684
        %v1062 = vpop.permute.xlu0 %1061
        %v1064 = vlaneseq
        %v1065 = vshrl.u32 %v1064, 7
        %v1066 = vsub.s32 1, %v1065
        %v1067 = vrot.slane %v786, %v1066
        %v1068 = vadd.f32 %v1002, %v1067
        %v1069 = vadd.f32 %v1006, %v1067
        %v1070 = vadd.f32 %v1010, %v1067
        %v1071 = vadd.f32 %v1014, %v1067
        %v1072 = vadd.f32 %v1018, %v1067
        %v1073 = vadd.f32 %v1022, %v1067
        %v1074 = vadd.f32 %v1026, %v1067
        %v1075 = vadd.f32 %v1030, %v1067
        %v1076 = vadd.f32 %v1034, %v1067
        %v1077 = vadd.f32 %v1038, %v1067
        %v1078 = vadd.f32 %v1042, %v1067
        %v1079 = vadd.f32 %v1046, %v1067
        %v1080 = vadd.f32 %v1050, %v1067
        %v1081 = vadd.f32 %v1054, %v1067
        %v1082 = vadd.f32 %v1058, %v1067
        %v1083 = vadd.f32 %v1062, %v1067
        %v1084 = vstv %s442
        %v1085 = vmul.f32 %v702, %v1084
        %v1086 = vmul.f32 %v703, %v1084
        %v1087 = vmul.f32 %v704, %v1084
        %v1088 = vmul.f32 %v705, %v1084
        %v1089 = vmul.f32 %v706, %v1084
        %v1090 = vmul.f32 %v707, %v1084
        %v1091 = vmul.f32 %v708, %v1084
        %v1092 = vmul.f32 %v709, %v1084
        %v1093 = vmul.f32 %v710, %v1084
        %v1094 = vmul.f32 %v711, %v1084
        %v1095 = vmul.f32 %v712, %v1084
        %v1096 = vmul.f32 %v713, %v1084
        %v1097 = vmul.f32 %v714, %v1084
        %v1098 = vmul.f32 %v715, %v1084
        %v1099 = vmul.f32 %v716, %v1084
        %v1100 = vmul.f32 %v717, %v1084
        %v1101 = vadd.f32 %v1068, %v1085
        %v1102 = vadd.f32 %v1069, %v1086
        %v1103 = vadd.f32 %v1070, %v1087
        %v1104 = vadd.f32 %v1071, %v1088
        %v1105 = vadd.f32 %v1072, %v1089
        %v1106 = vadd.f32 %v1073, %v1090
        %v1107 = vadd.f32 %v1074, %v1091
        %v1108 = vadd.f32 %v1075, %v1092
        %v1109 = vadd.f32 %v1076, %v1093
        %v1110 = vadd.f32 %v1077, %v1094
        %v1111 = vadd.f32 %v1078, %v1095
        %v1112 = vadd.f32 %v1079, %v1096
        %v1113 = vadd.f32 %v1080, %v1097
        %v1114 = vadd.f32 %v1081, %v1098
        %v1115 = vadd.f32 %v1082, %v1099
        %v1116 = vadd.f32 %v1083, %v1100
        %vm1117 = vcmp.gt.f32.partialorder %v1101, 0.0
        %vm1118 = vcmp.gt.f32.partialorder %v1102, 0.0
        %vm1119 = vcmp.gt.f32.partialorder %v1103, 0.0
        %vm1120 = vcmp.gt.f32.partialorder %v1104, 0.0
        %vm1121 = vcmp.gt.f32.partialorder %v1105, 0.0
        %vm1122 = vcmp.gt.f32.partialorder %v1106, 0.0
        %vm1123 = vcmp.gt.f32.partialorder %v1107, 0.0
        %vm1124 = vcmp.gt.f32.partialorder %v1108, 0.0
        %vm1125 = vcmp.gt.f32.partialorder %v1109, 0.0
        %vm1126 = vcmp.gt.f32.partialorder %v1110, 0.0
        %vm1127 = vcmp.gt.f32.partialorder %v1111, 0.0
        %vm1128 = vcmp.gt.f32.partialorder %v1112, 0.0
        %vm1129 = vcmp.gt.f32.partialorder %v1113, 0.0
        %vm1130 = vcmp.gt.f32.partialorder %v1114, 0.0
        %vm1131 = vcmp.gt.f32.partialorder %v1115, 0.0
        %vm1132 = vcmp.gt.f32.partialorder %v1116, 0.0
        %v1133 = vmul.f32 %v1101, 0.2
        %v1134 = vmul.f32 %v1102, 0.2
        %v1135 = vmul.f32 %v1103, 0.2
        %v1136 = vmul.f32 %v1104, 0.2
        %v1137 = vmul.f32 %v1105, 0.2
        %v1138 = vmul.f32 %v1106, 0.2
        %v1139 = vmul.f32 %v1107, 0.2
        %v1140 = vmul.f32 %v1108, 0.2
        %v1141 = vmul.f32 %v1109, 0.2
        %v1142 = vmul.f32 %v1110, 0.2
        %v1143 = vmul.f32 %v1111, 0.2
        %v1144 = vmul.f32 %v1112, 0.2
        %v1145 = vmul.f32 %v1113, 0.2
        %v1146 = vmul.f32 %v1114, 0.2
        %v1147 = vmul.f32 %v1115, 0.2
        %v1148 = vmul.f32 %v1116, 0.2
        %v1149 = vsel %vm1117, %v1101, %v1133
        %v1150 = vsel %vm1118, %v1102, %v1134
        %v1151 = vsel %vm1119, %v1103, %v1135
        %v1152 = vsel %vm1120, %v1104, %v1136
        %v1153 = vsel %vm1121, %v1105, %v1137
        %v1154 = vsel %vm1122, %v1106, %v1138
        %v1155 = vsel %vm1123, %v1107, %v1139
        %v1156 = vsel %vm1124, %v1108, %v1140
        %v1157 = vsel %vm1125, %v1109, %v1141
        %v1158 = vsel %vm1126, %v1110, %v1142
        %v1159 = vsel %vm1127, %v1111, %v1143
        %v1160 = vsel %vm1128, %v1112, %v1144
        %v1161 = vsel %vm1129, %v1113, %v1145
        %v1162 = vsel %vm1130, %v1114, %v1146
        %v1163 = vsel %vm1131, %v1115, %v1147
        %v1164 = vsel %vm1132, %v1116, %v1148
        %v1165 = vstv %s446
        %v1166 = vmul.f32 %v1165, %v1149
        %v1167 = vmul.f32 %v1165, %v1150
        %v1168 = vmul.f32 %v1165, %v1151
        %v1169 = vmul.f32 %v1165, %v1152
        %v1170 = vmul.f32 %v1165, %v1153
        %v1171 = vmul.f32 %v1165, %v1154
        %v1172 = vmul.f32 %v1165, %v1155
        %v1173 = vmul.f32 %v1165, %v1156
        %v1174 = vmul.f32 %v1165, %v1157
        %v1175 = vmul.f32 %v1165, %v1158
        %v1176 = vmul.f32 %v1165, %v1159
        %v1177 = vmul.f32 %v1165, %v1160
        %v1178 = vmul.f32 %v1165, %v1161
        %v1179 = vmul.f32 %v1165, %v1162
        %v1180 = vmul.f32 %v1165, %v1163
        %v1181 = vmul.f32 %v1165, %v1164
        %v1182 = vadd.f32 %v984, %v1166
        %v1183 = vadd.f32 %v985, %v1167
        %v1184 = vadd.f32 %v986, %v1168
        %v1185 = vadd.f32 %v987, %v1169
        %v1186 = vadd.f32 %v988, %v1170
        %v1187 = vadd.f32 %v989, %v1171
        %v1188 = vadd.f32 %v990, %v1172
        %v1189 = vadd.f32 %v991, %v1173
        %v1190 = vadd.f32 %v992, %v1174
        %v1191 = vadd.f32 %v993, %v1175
        %v1192 = vadd.f32 %v994, %v1176
        %v1193 = vadd.f32 %v995, %v1177
        %v1194 = vadd.f32 %v996, %v1178
        %v1195 = vadd.f32 %v997, %v1179
        %v1196 = vadd.f32 %v998, %v1180
        %v1197 = vadd.f32 %v999, %v1181
        %1198 = vset.pattern.permute.xlu0 2
        %1199 = vperm.xlu0 %1198, %v594
        %v1200 = vpop.permute.xlu0 %1199
        %1202 = vset.pattern.permute.xlu0 2
        %1203 = vperm.xlu0 %1202, %v600
        %v1204 = vpop.permute.xlu0 %1203
        %1206 = vset.pattern.permute.xlu0 2
        %1207 = vperm.xlu0 %1206, %v606
        %v1208 = vpop.permute.xlu0 %1207
        %1210 = vset.pattern.permute.xlu0 2
        %1211 = vperm.xlu0 %1210, %v612
        %v1212 = vpop.permute.xlu0 %1211
        %1214 = vset.pattern.permute.xlu0 2
        %1215 = vperm.xlu0 %1214, %v618
        %v1216 = vpop.permute.xlu0 %1215
        %1218 = vset.pattern.permute.xlu0 2
        %1219 = vperm.xlu0 %1218, %v624
        %v1220 = vpop.permute.xlu0 %1219
        %1222 = vset.pattern.permute.xlu0 2
        %1223 = vperm.xlu0 %1222, %v630
        %v1224 = vpop.permute.xlu0 %1223
        %1226 = vset.pattern.permute.xlu0 2
        %1227 = vperm.xlu0 %1226, %v636
        %v1228 = vpop.permute.xlu0 %1227
        %1230 = vset.pattern.permute.xlu0 2
        %1231 = vperm.xlu0 %1230, %v642
        %v1232 = vpop.permute.xlu0 %1231
        %1234 = vset.pattern.permute.xlu0 2
        %1235 = vperm.xlu0 %1234, %v648
        %v1236 = vpop.permute.xlu0 %1235
        %1238 = vset.pattern.permute.xlu0 2
        %1239 = vperm.xlu0 %1238, %v654
        %v1240 = vpop.permute.xlu0 %1239
        %1242 = vset.pattern.permute.xlu0 2
        %1243 = vperm.xlu0 %1242, %v660
        %v1244 = vpop.permute.xlu0 %1243
        %1246 = vset.pattern.permute.xlu0 2
        %1247 = vperm.xlu0 %1246, %v666
        %v1248 = vpop.permute.xlu0 %1247
        %1250 = vset.pattern.permute.xlu0 2
        %1251 = vperm.xlu0 %1250, %v672
        %v1252 = vpop.permute.xlu0 %1251
        %1254 = vset.pattern.permute.xlu0 2
        %1255 = vperm.xlu0 %1254, %v678
        %v1256 = vpop.permute.xlu0 %1255
        %1258 = vset.pattern.permute.xlu0 2
        %1259 = vperm.xlu0 %1258, %v684
        %v1260 = vpop.permute.xlu0 %1259
        %v1262 = vlaneseq
        %v1263 = vshrl.u32 %v1262, 7
        %v1264 = vsub.s32 2, %v1263
        %v1265 = vrot.slane %v786, %v1264
        %v1266 = vadd.f32 %v1200, %v1265
        %v1267 = vadd.f32 %v1204, %v1265
        %v1268 = vadd.f32 %v1208, %v1265
        %v1269 = vadd.f32 %v1212, %v1265
        %v1270 = vadd.f32 %v1216, %v1265
        %v1271 = vadd.f32 %v1220, %v1265
        %v1272 = vadd.f32 %v1224, %v1265
        %v1273 = vadd.f32 %v1228, %v1265
        %v1274 = vadd.f32 %v1232, %v1265
        %v1275 = vadd.f32 %v1236, %v1265
        %v1276 = vadd.f32 %v1240, %v1265
        %v1277 = vadd.f32 %v1244, %v1265
        %v1278 = vadd.f32 %v1248, %v1265
        %v1279 = vadd.f32 %v1252, %v1265
        %v1280 = vadd.f32 %v1256, %v1265
        %v1281 = vadd.f32 %v1260, %v1265
        %v1282 = vstv %s443
        %v1283 = vmul.f32 %v702, %v1282
        %v1284 = vmul.f32 %v703, %v1282
        %v1285 = vmul.f32 %v704, %v1282
        %v1286 = vmul.f32 %v705, %v1282
        %v1287 = vmul.f32 %v706, %v1282
        %v1288 = vmul.f32 %v707, %v1282
        %v1289 = vmul.f32 %v708, %v1282
        %v1290 = vmul.f32 %v709, %v1282
        %v1291 = vmul.f32 %v710, %v1282
        %v1292 = vmul.f32 %v711, %v1282
        %v1293 = vmul.f32 %v712, %v1282
        %v1294 = vmul.f32 %v713, %v1282
        %v1295 = vmul.f32 %v714, %v1282
        %v1296 = vmul.f32 %v715, %v1282
        %v1297 = vmul.f32 %v716, %v1282
        %v1298 = vmul.f32 %v717, %v1282
        %v1299 = vadd.f32 %v1266, %v1283
        %v1300 = vadd.f32 %v1267, %v1284
        %v1301 = vadd.f32 %v1268, %v1285
        %v1302 = vadd.f32 %v1269, %v1286
        %v1303 = vadd.f32 %v1270, %v1287
        %v1304 = vadd.f32 %v1271, %v1288
        %v1305 = vadd.f32 %v1272, %v1289
        %v1306 = vadd.f32 %v1273, %v1290
        %v1307 = vadd.f32 %v1274, %v1291
        %v1308 = vadd.f32 %v1275, %v1292
        %v1309 = vadd.f32 %v1276, %v1293
        %v1310 = vadd.f32 %v1277, %v1294
        %v1311 = vadd.f32 %v1278, %v1295
        %v1312 = vadd.f32 %v1279, %v1296
        %v1313 = vadd.f32 %v1280, %v1297
        %v1314 = vadd.f32 %v1281, %v1298
        %vm1315 = vcmp.gt.f32.partialorder %v1299, 0.0
        %vm1316 = vcmp.gt.f32.partialorder %v1300, 0.0
        %vm1317 = vcmp.gt.f32.partialorder %v1301, 0.0
        %vm1318 = vcmp.gt.f32.partialorder %v1302, 0.0
        %vm1319 = vcmp.gt.f32.partialorder %v1303, 0.0
        %vm1320 = vcmp.gt.f32.partialorder %v1304, 0.0
        %vm1321 = vcmp.gt.f32.partialorder %v1305, 0.0
        %vm1322 = vcmp.gt.f32.partialorder %v1306, 0.0
        %vm1323 = vcmp.gt.f32.partialorder %v1307, 0.0
        %vm1324 = vcmp.gt.f32.partialorder %v1308, 0.0
        %vm1325 = vcmp.gt.f32.partialorder %v1309, 0.0
        %vm1326 = vcmp.gt.f32.partialorder %v1310, 0.0
        %vm1327 = vcmp.gt.f32.partialorder %v1311, 0.0
        %vm1328 = vcmp.gt.f32.partialorder %v1312, 0.0
        %vm1329 = vcmp.gt.f32.partialorder %v1313, 0.0
        %vm1330 = vcmp.gt.f32.partialorder %v1314, 0.0
        %v1331 = vmul.f32 %v1299, 0.2
        %v1332 = vmul.f32 %v1300, 0.2
        %v1333 = vmul.f32 %v1301, 0.2
        %v1334 = vmul.f32 %v1302, 0.2
        %v1335 = vmul.f32 %v1303, 0.2
        %v1336 = vmul.f32 %v1304, 0.2
        %v1337 = vmul.f32 %v1305, 0.2
        %v1338 = vmul.f32 %v1306, 0.2
        %v1339 = vmul.f32 %v1307, 0.2
        %v1340 = vmul.f32 %v1308, 0.2
        %v1341 = vmul.f32 %v1309, 0.2
        %v1342 = vmul.f32 %v1310, 0.2
        %v1343 = vmul.f32 %v1311, 0.2
        %v1344 = vmul.f32 %v1312, 0.2
        %v1345 = vmul.f32 %v1313, 0.2
        %v1346 = vmul.f32 %v1314, 0.2
        %v1347 = vsel %vm1315, %v1299, %v1331
        %v1348 = vsel %vm1316, %v1300, %v1332
        %v1349 = vsel %vm1317, %v1301, %v1333
        %v1350 = vsel %vm1318, %v1302, %v1334
        %v1351 = vsel %vm1319, %v1303, %v1335
        %v1352 = vsel %vm1320, %v1304, %v1336
        %v1353 = vsel %vm1321, %v1305, %v1337
        %v1354 = vsel %vm1322, %v1306, %v1338
        %v1355 = vsel %vm1323, %v1307, %v1339
        %v1356 = vsel %vm1324, %v1308, %v1340
        %v1357 = vsel %vm1325, %v1309, %v1341
        %v1358 = vsel %vm1326, %v1310, %v1342
        %v1359 = vsel %vm1327, %v1311, %v1343
        %v1360 = vsel %vm1328, %v1312, %v1344
        %v1361 = vsel %vm1329, %v1313, %v1345
        %v1362 = vsel %vm1330, %v1314, %v1346
        %v1363 = vstv %s447
        %v1364 = vmul.f32 %v1363, %v1347
        %v1365 = vmul.f32 %v1363, %v1348
        %v1366 = vmul.f32 %v1363, %v1349
        %v1367 = vmul.f32 %v1363, %v1350
        %v1368 = vmul.f32 %v1363, %v1351
        %v1369 = vmul.f32 %v1363, %v1352
        %v1370 = vmul.f32 %v1363, %v1353
        %v1371 = vmul.f32 %v1363, %v1354
        %v1372 = vmul.f32 %v1363, %v1355
        %v1373 = vmul.f32 %v1363, %v1356
        %v1374 = vmul.f32 %v1363, %v1357
        %v1375 = vmul.f32 %v1363, %v1358
        %v1376 = vmul.f32 %v1363, %v1359
        %v1377 = vmul.f32 %v1363, %v1360
        %v1378 = vmul.f32 %v1363, %v1361
        %v1379 = vmul.f32 %v1363, %v1362
        %v1380 = vadd.f32 %v1182, %v1364
        %v1381 = vadd.f32 %v1183, %v1365
        %v1382 = vadd.f32 %v1184, %v1366
        %v1383 = vadd.f32 %v1185, %v1367
        %v1384 = vadd.f32 %v1186, %v1368
        %v1385 = vadd.f32 %v1187, %v1369
        %v1386 = vadd.f32 %v1188, %v1370
        %v1387 = vadd.f32 %v1189, %v1371
        %v1388 = vadd.f32 %v1190, %v1372
        %v1389 = vadd.f32 %v1191, %v1373
        %v1390 = vadd.f32 %v1192, %v1374
        %v1391 = vadd.f32 %v1193, %v1375
        %v1392 = vadd.f32 %v1194, %v1376
        %v1393 = vadd.f32 %v1195, %v1377
        %v1394 = vadd.f32 %v1196, %v1378
        %v1395 = vadd.f32 %v1197, %v1379
        %1396 = vset.pattern.permute.xlu0 3
        %1397 = vperm.xlu0 %1396, %v594
        %v1398 = vpop.permute.xlu0 %1397
        %1400 = vset.pattern.permute.xlu0 3
        %1401 = vperm.xlu0 %1400, %v600
        %v1402 = vpop.permute.xlu0 %1401
        %1404 = vset.pattern.permute.xlu0 3
        %1405 = vperm.xlu0 %1404, %v606
        %v1406 = vpop.permute.xlu0 %1405
        %1408 = vset.pattern.permute.xlu0 3
        %1409 = vperm.xlu0 %1408, %v612
        %v1410 = vpop.permute.xlu0 %1409
        %1412 = vset.pattern.permute.xlu0 3
        %1413 = vperm.xlu0 %1412, %v618
        %v1414 = vpop.permute.xlu0 %1413
        %1416 = vset.pattern.permute.xlu0 3
        %1417 = vperm.xlu0 %1416, %v624
        %v1418 = vpop.permute.xlu0 %1417
        %1420 = vset.pattern.permute.xlu0 3
        %1421 = vperm.xlu0 %1420, %v630
        %v1422 = vpop.permute.xlu0 %1421
        %1424 = vset.pattern.permute.xlu0 3
        %1425 = vperm.xlu0 %1424, %v636
        %v1426 = vpop.permute.xlu0 %1425
        %1428 = vset.pattern.permute.xlu0 3
        %1429 = vperm.xlu0 %1428, %v642
        %v1430 = vpop.permute.xlu0 %1429
        %1432 = vset.pattern.permute.xlu0 3
        %1433 = vperm.xlu0 %1432, %v648
        %v1434 = vpop.permute.xlu0 %1433
        %1436 = vset.pattern.permute.xlu0 3
        %1437 = vperm.xlu0 %1436, %v654
        %v1438 = vpop.permute.xlu0 %1437
        %1440 = vset.pattern.permute.xlu0 3
        %1441 = vperm.xlu0 %1440, %v660
        %v1442 = vpop.permute.xlu0 %1441
        %1444 = vset.pattern.permute.xlu0 3
        %1445 = vperm.xlu0 %1444, %v666
        %v1446 = vpop.permute.xlu0 %1445
        %1448 = vset.pattern.permute.xlu0 3
        %1449 = vperm.xlu0 %1448, %v672
        %v1450 = vpop.permute.xlu0 %1449
        %1452 = vset.pattern.permute.xlu0 3
        %1453 = vperm.xlu0 %1452, %v678
        %v1454 = vpop.permute.xlu0 %1453
        %1456 = vset.pattern.permute.xlu0 3
        %1457 = vperm.xlu0 %1456, %v684
        %v1458 = vpop.permute.xlu0 %1457
        %v1460 = vlaneseq
        %v1461 = vshrl.u32 %v1460, 7
        %v1462 = vsub.s32 3, %v1461
        %v1463 = vrot.slane %v786, %v1462
        %v1464 = vadd.f32 %v1398, %v1463
        %v1465 = vadd.f32 %v1402, %v1463
        %v1466 = vadd.f32 %v1406, %v1463
        %v1467 = vadd.f32 %v1410, %v1463
        %v1468 = vadd.f32 %v1414, %v1463
        %v1469 = vadd.f32 %v1418, %v1463
        %v1470 = vadd.f32 %v1422, %v1463
        %v1471 = vadd.f32 %v1426, %v1463
        %v1472 = vadd.f32 %v1430, %v1463
        %v1473 = vadd.f32 %v1434, %v1463
        %v1474 = vadd.f32 %v1438, %v1463
        %v1475 = vadd.f32 %v1442, %v1463
        %v1476 = vadd.f32 %v1446, %v1463
        %v1477 = vadd.f32 %v1450, %v1463
        %v1478 = vadd.f32 %v1454, %v1463
        %v1479 = vadd.f32 %v1458, %v1463
        %v1480 = vstv %s444
        %v1481 = vmul.f32 %v702, %v1480
        %v1482 = vmul.f32 %v703, %v1480
        %v1483 = vmul.f32 %v704, %v1480
        %v1484 = vmul.f32 %v705, %v1480
        %v1485 = vmul.f32 %v706, %v1480
        %v1486 = vmul.f32 %v707, %v1480
        %v1487 = vmul.f32 %v708, %v1480
        %v1488 = vmul.f32 %v709, %v1480
        %v1489 = vmul.f32 %v710, %v1480
        %v1490 = vmul.f32 %v711, %v1480
        %v1491 = vmul.f32 %v712, %v1480
        %v1492 = vmul.f32 %v713, %v1480
        %v1493 = vmul.f32 %v714, %v1480
        %v1494 = vmul.f32 %v715, %v1480
        %v1495 = vmul.f32 %v716, %v1480
        %v1496 = vmul.f32 %v717, %v1480
        %v1497 = vadd.f32 %v1464, %v1481
        %v1498 = vadd.f32 %v1465, %v1482
        %v1499 = vadd.f32 %v1466, %v1483
        %v1500 = vadd.f32 %v1467, %v1484
        %v1501 = vadd.f32 %v1468, %v1485
        %v1502 = vadd.f32 %v1469, %v1486
        %v1503 = vadd.f32 %v1470, %v1487
        %v1504 = vadd.f32 %v1471, %v1488
        %v1505 = vadd.f32 %v1472, %v1489
        %v1506 = vadd.f32 %v1473, %v1490
        %v1507 = vadd.f32 %v1474, %v1491
        %v1508 = vadd.f32 %v1475, %v1492
        %v1509 = vadd.f32 %v1476, %v1493
        %v1510 = vadd.f32 %v1477, %v1494
        %v1511 = vadd.f32 %v1478, %v1495
        %v1512 = vadd.f32 %v1479, %v1496
        %vm1513 = vcmp.gt.f32.partialorder %v1497, 0.0
        %vm1514 = vcmp.gt.f32.partialorder %v1498, 0.0
        %vm1515 = vcmp.gt.f32.partialorder %v1499, 0.0
        %vm1516 = vcmp.gt.f32.partialorder %v1500, 0.0
        %vm1517 = vcmp.gt.f32.partialorder %v1501, 0.0
        %vm1518 = vcmp.gt.f32.partialorder %v1502, 0.0
        %vm1519 = vcmp.gt.f32.partialorder %v1503, 0.0
        %vm1520 = vcmp.gt.f32.partialorder %v1504, 0.0
        %vm1521 = vcmp.gt.f32.partialorder %v1505, 0.0
        %vm1522 = vcmp.gt.f32.partialorder %v1506, 0.0
        %vm1523 = vcmp.gt.f32.partialorder %v1507, 0.0
        %vm1524 = vcmp.gt.f32.partialorder %v1508, 0.0
        %vm1525 = vcmp.gt.f32.partialorder %v1509, 0.0
        %vm1526 = vcmp.gt.f32.partialorder %v1510, 0.0
        %vm1527 = vcmp.gt.f32.partialorder %v1511, 0.0
        %vm1528 = vcmp.gt.f32.partialorder %v1512, 0.0
        %v1529 = vmul.f32 %v1497, 0.2
        %v1530 = vmul.f32 %v1498, 0.2
        %v1531 = vmul.f32 %v1499, 0.2
        %v1532 = vmul.f32 %v1500, 0.2
        %v1533 = vmul.f32 %v1501, 0.2
        %v1534 = vmul.f32 %v1502, 0.2
        %v1535 = vmul.f32 %v1503, 0.2
        %v1536 = vmul.f32 %v1504, 0.2
        %v1537 = vmul.f32 %v1505, 0.2
        %v1538 = vmul.f32 %v1506, 0.2
        %v1539 = vmul.f32 %v1507, 0.2
        %v1540 = vmul.f32 %v1508, 0.2
        %v1541 = vmul.f32 %v1509, 0.2
        %v1542 = vmul.f32 %v1510, 0.2
        %v1543 = vmul.f32 %v1511, 0.2
        %v1544 = vmul.f32 %v1512, 0.2
        %v1545 = vsel %vm1513, %v1497, %v1529
        %v1546 = vsel %vm1514, %v1498, %v1530
        %v1547 = vsel %vm1515, %v1499, %v1531
        %v1548 = vsel %vm1516, %v1500, %v1532
        %v1549 = vsel %vm1517, %v1501, %v1533
        %v1550 = vsel %vm1518, %v1502, %v1534
        %v1551 = vsel %vm1519, %v1503, %v1535
        %v1552 = vsel %vm1520, %v1504, %v1536
        %v1553 = vsel %vm1521, %v1505, %v1537
        %v1554 = vsel %vm1522, %v1506, %v1538
        %v1555 = vsel %vm1523, %v1507, %v1539
        %v1556 = vsel %vm1524, %v1508, %v1540
        %v1557 = vsel %vm1525, %v1509, %v1541
        %v1558 = vsel %vm1526, %v1510, %v1542
        %v1559 = vsel %vm1527, %v1511, %v1543
        %v1560 = vsel %vm1528, %v1512, %v1544
        %v1561 = vstv %s448
        %v1562 = vmul.f32 %v1561, %v1545
        %v1563 = vmul.f32 %v1561, %v1546
        %v1564 = vmul.f32 %v1561, %v1547
        %v1565 = vmul.f32 %v1561, %v1548
        %v1566 = vmul.f32 %v1561, %v1549
        %v1567 = vmul.f32 %v1561, %v1550
        %v1568 = vmul.f32 %v1561, %v1551
        %v1569 = vmul.f32 %v1561, %v1552
        %v1570 = vmul.f32 %v1561, %v1553
        %v1571 = vmul.f32 %v1561, %v1554
        %v1572 = vmul.f32 %v1561, %v1555
        %v1573 = vmul.f32 %v1561, %v1556
        %v1574 = vmul.f32 %v1561, %v1557
        %v1575 = vmul.f32 %v1561, %v1558
        %v1576 = vmul.f32 %v1561, %v1559
        %v1577 = vmul.f32 %v1561, %v1560
        %v1578 = vadd.f32 %v1380, %v1562
        %v1579 = vadd.f32 %v1381, %v1563
        %v1580 = vadd.f32 %v1382, %v1564
        %v1581 = vadd.f32 %v1383, %v1565
        %v1582 = vadd.f32 %v1384, %v1566
        %v1583 = vadd.f32 %v1385, %v1567
        %v1584 = vadd.f32 %v1386, %v1568
        %v1585 = vadd.f32 %v1387, %v1569
        %v1586 = vadd.f32 %v1388, %v1570
        %v1587 = vadd.f32 %v1389, %v1571
        %v1588 = vadd.f32 %v1390, %v1572
        %v1589 = vadd.f32 %v1391, %v1573
        %v1590 = vadd.f32 %v1392, %v1574
        %v1591 = vadd.f32 %v1393, %v1575
        %v1592 = vadd.f32 %v1394, %v1576
        %v1593 = vadd.f32 %v1395, %v1577
        %v1594 = vsel %vm754, %v1578, -1e+30
        %v1595 = vsel %vm755, %v1579, -1e+30
        %v1596 = vsel %vm756, %v1580, -1e+30
        %v1597 = vsel %vm757, %v1581, -1e+30
        %v1598 = vsel %vm758, %v1582, -1e+30
        %v1599 = vsel %vm759, %v1583, -1e+30
        %v1600 = vsel %vm760, %v1584, -1e+30
        %v1601 = vsel %vm761, %v1585, -1e+30
        %v1602 = vsel %vm762, %v1586, -1e+30
        %v1603 = vsel %vm763, %v1587, -1e+30
        %v1604 = vsel %vm764, %v1588, -1e+30
        %v1605 = vsel %vm765, %v1589, -1e+30
        %v1606 = vsel %vm766, %v1590, -1e+30
        %v1607 = vsel %vm767, %v1591, -1e+30
        %v1608 = vsel %vm768, %v1592, -1e+30
        %v1609 = vsel %vm769, %v1593, -1e+30
        %1610 = vmax.xlane.f32.xlu0 %v1594
        %v1611 = vpop.xlane.xlu0 %1610
        %1612 = vmax.xlane.f32.xlu0 %v1595
        %v1613 = vpop.xlane.xlu0 %1612
        %1614 = vmax.xlane.f32.xlu0 %v1596
        %v1615 = vpop.xlane.xlu0 %1614
        %1616 = vmax.xlane.f32.xlu0 %v1597
        %v1617 = vpop.xlane.xlu0 %1616
        %1618 = vmax.xlane.f32.xlu0 %v1598
        %v1619 = vpop.xlane.xlu0 %1618
        %1620 = vmax.xlane.f32.xlu0 %v1599
        %v1621 = vpop.xlane.xlu0 %1620
        %1622 = vmax.xlane.f32.xlu0 %v1600
        %v1623 = vpop.xlane.xlu0 %1622
        %1624 = vmax.xlane.f32.xlu0 %v1601
        %v1625 = vpop.xlane.xlu0 %1624
        %1626 = vmax.xlane.f32.xlu0 %v1602
        %v1627 = vpop.xlane.xlu0 %1626
        %1628 = vmax.xlane.f32.xlu0 %v1603
        %v1629 = vpop.xlane.xlu0 %1628
        %1630 = vmax.xlane.f32.xlu0 %v1604
        %v1631 = vpop.xlane.xlu0 %1630
        %1632 = vmax.xlane.f32.xlu0 %v1605
        %v1633 = vpop.xlane.xlu0 %1632
        %1634 = vmax.xlane.f32.xlu0 %v1606
        %v1635 = vpop.xlane.xlu0 %1634
        %1636 = vmax.xlane.f32.xlu0 %v1607
        %v1637 = vpop.xlane.xlu0 %1636
        %1638 = vmax.xlane.f32.xlu0 %v1608
        %v1639 = vpop.xlane.xlu0 %1638
        %1640 = vmax.xlane.f32.xlu0 %v1609
        %v1641 = vpop.xlane.xlu0 %1640
        %v1642 = vsub.f32 %v1594, %v1611
        %v1643 = vsub.f32 %v1595, %v1613
        %v1644 = vsub.f32 %v1596, %v1615
        %v1645 = vsub.f32 %v1597, %v1617
        %v1646 = vsub.f32 %v1598, %v1619
        %v1647 = vsub.f32 %v1599, %v1621
        %v1648 = vsub.f32 %v1600, %v1623
        %v1649 = vsub.f32 %v1601, %v1625
        %v1650 = vsub.f32 %v1602, %v1627
        %v1651 = vsub.f32 %v1603, %v1629
        %v1652 = vsub.f32 %v1604, %v1631
        %v1653 = vsub.f32 %v1605, %v1633
        %v1654 = vsub.f32 %v1606, %v1635
        %v1655 = vsub.f32 %v1607, %v1637
        %v1656 = vsub.f32 %v1608, %v1639
        %v1657 = vsub.f32 %v1609, %v1641
        %v1658 = vmul.f32 %v1642, 1.442695
        %v1659 = vpow.pop %v1658
        %v1660 = vmul.f32 %v1643, 1.442695
        %v1661 = vpow.pop %v1660
        %v1662 = vmul.f32 %v1644, 1.442695
        %v1663 = vpow.pop %v1662
        %v1664 = vmul.f32 %v1645, 1.442695
        %v1665 = vpow.pop %v1664
        %v1666 = vmul.f32 %v1646, 1.442695
        %v1667 = vpow.pop %v1666
        %v1668 = vmul.f32 %v1647, 1.442695
        %v1669 = vpow.pop %v1668
        %v1670 = vmul.f32 %v1648, 1.442695
        %v1671 = vpow.pop %v1670
        %v1672 = vmul.f32 %v1649, 1.442695
        %v1673 = vpow.pop %v1672
        %v1674 = vmul.f32 %v1650, 1.442695
        %v1675 = vpow.pop %v1674
        %v1676 = vmul.f32 %v1651, 1.442695
        %v1677 = vpow.pop %v1676
        %v1678 = vmul.f32 %v1652, 1.442695
        %v1679 = vpow.pop %v1678
        %v1680 = vmul.f32 %v1653, 1.442695
        %v1681 = vpow.pop %v1680
        %v1682 = vmul.f32 %v1654, 1.442695
        %v1683 = vpow.pop %v1682
        %v1684 = vmul.f32 %v1655, 1.442695
        %v1685 = vpow.pop %v1684
        %v1686 = vmul.f32 %v1656, 1.442695
        %v1687 = vpow.pop %v1686
        %v1688 = vmul.f32 %v1657, 1.442695
        %v1689 = vpow.pop %v1688
        %1690 = vadd.xlane.f32.xlu0 %v1659
        %v1691 = vpop.xlane.xlu0 %1690
        %1692 = vadd.xlane.f32.xlu0 %v1661
        %v1693 = vpop.xlane.xlu0 %1692
        %1694 = vadd.xlane.f32.xlu0 %v1663
        %v1695 = vpop.xlane.xlu0 %1694
        %1696 = vadd.xlane.f32.xlu0 %v1665
        %v1697 = vpop.xlane.xlu0 %1696
        %1698 = vadd.xlane.f32.xlu0 %v1667
        %v1699 = vpop.xlane.xlu0 %1698
        %1700 = vadd.xlane.f32.xlu0 %v1669
        %v1701 = vpop.xlane.xlu0 %1700
        %1702 = vadd.xlane.f32.xlu0 %v1671
        %v1703 = vpop.xlane.xlu0 %1702
        %1704 = vadd.xlane.f32.xlu0 %v1673
        %v1705 = vpop.xlane.xlu0 %1704
        %1706 = vadd.xlane.f32.xlu0 %v1675
        %v1707 = vpop.xlane.xlu0 %1706
        %1708 = vadd.xlane.f32.xlu0 %v1677
        %v1709 = vpop.xlane.xlu0 %1708
        %1710 = vadd.xlane.f32.xlu0 %v1679
        %v1711 = vpop.xlane.xlu0 %1710
        %1712 = vadd.xlane.f32.xlu0 %v1681
        %v1713 = vpop.xlane.xlu0 %1712
        %1714 = vadd.xlane.f32.xlu0 %v1683
        %v1715 = vpop.xlane.xlu0 %1714
        %1716 = vadd.xlane.f32.xlu0 %v1685
        %v1717 = vpop.xlane.xlu0 %1716
        %1718 = vadd.xlane.f32.xlu0 %v1687
        %v1719 = vpop.xlane.xlu0 %1718
        %1720 = vadd.xlane.f32.xlu0 %v1689
        %v1721 = vpop.xlane.xlu0 %1720
        %v1722 = vrcp.pop %v1691
        %v1723 = vrcp.pop %v1693
        %v1724 = vrcp.pop %v1695
        %v1725 = vrcp.pop %v1697
        %v1726 = vrcp.pop %v1699
        %v1727 = vrcp.pop %v1701
        %v1728 = vrcp.pop %v1703
        %v1729 = vrcp.pop %v1705
        %v1730 = vrcp.pop %v1707
        %v1731 = vrcp.pop %v1709
        %v1732 = vrcp.pop %v1711
        %v1733 = vrcp.pop %v1713
        %v1734 = vrcp.pop %v1715
        %v1735 = vrcp.pop %v1717
        %v1736 = vrcp.pop %v1719
        %v1737 = vrcp.pop %v1721
        %v1738 = vmul.f32 %v1659, %v1722
        %v1739 = vmul.f32 %v1661, %v1723
        %v1740 = vmul.f32 %v1663, %v1724
        %v1741 = vmul.f32 %v1665, %v1725
        %v1742 = vmul.f32 %v1667, %v1726
        %v1743 = vmul.f32 %v1669, %v1727
        %v1744 = vmul.f32 %v1671, %v1728
        %v1745 = vmul.f32 %v1673, %v1729
        %v1746 = vmul.f32 %v1675, %v1730
        %v1747 = vmul.f32 %v1677, %v1731
        %v1748 = vmul.f32 %v1679, %v1732
        %v1749 = vmul.f32 %v1681, %v1733
        %v1750 = vmul.f32 %v1683, %v1734
        %v1751 = vmul.f32 %v1685, %v1735
        %v1752 = vmul.f32 %v1687, %v1736
        %v1753 = vmul.f32 %v1689, %v1737
        %v1754 = vld [vmem:[%s433] sm:$0xff]
        %v1755 = vld [vmem:[%s433 + $0x8] sm:$0xff]
        %v1756 = vpack.c.bf16 %v1755, %v1754
        %v1757 = vpack.c.bf16 %v1739, %v1738
        %v1758 = vpack.c.bf16 %v1741, %v1740
        %v1759 = vpack.c.bf16 %v1743, %v1742
        %v1760 = vpack.c.bf16 %v1745, %v1744
        %v1761 = vpack.c.bf16 %v1747, %v1746
        %v1762 = vpack.c.bf16 %v1749, %v1748
        %v1763 = vpack.c.bf16 %v1751, %v1750
        %v1764 = vpack.c.bf16 %v1753, %v1752
        %1765 = vmatprep.subr.bf16.mxu0 0
        %1766 = vmatpush1.bf16.msra.mxu0 %v1757
        %1767 = vmatprep.subr.bf16.mxu0 0
        %1768 = vmatpush1.bf16.msra.mxu0 %v1758
        %1769 = vmatprep.subr.bf16.mxu0 0
        %1770 = vmatpush1.bf16.msra.mxu0 %v1759
        %1771 = vmatprep.subr.bf16.mxu0 0
        %1772 = vmatpush1.bf16.msra.mxu0 %v1760
        %1773 = vmatprep.subr.bf16.mxu0 0
        %1774 = vmatpush1.bf16.msra.mxu0 %v1761
        %1775 = vmatprep.subr.bf16.mxu0 0
        %1776 = vmatpush1.bf16.msra.mxu0 %v1762
        %1777 = vmatprep.subr.bf16.mxu0 0
        %1778 = vmatpush1.bf16.msra.mxu0 %v1763
        %1779 = vmatprep.subr.bf16.mxu0 0
        %1780 = vmatpush1.bf16.msra.mxu0 %v1764
        %1781 = vmatprep.subr.bf16.mxu0 0
        %1782 = vmatpush1.bf16.msra.mxu0 0
        %1783 = vmatprep.subr.bf16.mxu0 0
        %1784 = vmatpush1.bf16.msra.mxu0 0
        %1785 = vmatprep.subr.bf16.mxu0 0
        %1786 = vmatpush1.bf16.msra.mxu0 0
        %1787 = vmatprep.subr.bf16.mxu0 0
        %1788 = vmatpush1.bf16.msra.mxu0 0
        %1789 = vmatprep.subr.bf16.mxu0 0
        %1790 = vmatpush1.bf16.msra.mxu0 0
        %1791 = vmatprep.subr.bf16.mxu0 0
        %1792 = vmatpush1.bf16.msra.mxu0 0
        %1793 = vmatprep.subr.bf16.mxu0 0
        %1794 = vmatpush1.bf16.msra.mxu0 0
        %1795 = vmatprep.subr.bf16.mxu0 0
        %1796 = vmatpush1.bf16.msra.mxu0 0
        %1797 = vmatprep.mubr.bf16.mxu0 0
        %1798 = vmatmul.mubr.bf16.gmra.mrb[0].mxu0 %v1756
        %v1799 = vpop.f32.mrb[0].mxu0
        %v1800 = vadd.f32 0.0, %v1799
        %v1801 = vpop.f32.mrb[0].mxu0
        %v1802 = vpop.f32.mrb[0].mxu0
        %v1803 = vadd.f32 0.0, %v1802
        %v1804 = vpop.f32.mrb[0].mxu0
        %1805 = vdwg.mxu0
        %v1806 = vpack.c.bf16 %v1803, %v1800
        %v1807 = vpack.c.bf16 %v598, %v592
        %v1808 = vpack.c.bf16 %v610, %v604
        %v1809 = vpack.c.bf16 %v622, %v616
        %v1810 = vpack.c.bf16 %v634, %v628
        %v1811 = vpack.c.bf16 %v646, %v640
        %v1812 = vpack.c.bf16 %v658, %v652
        %v1813 = vpack.c.bf16 %v670, %v664
        %v1814 = vpack.c.bf16 %v682, %v676
        %v1816 = vlaneseq
        %v1817 = vshrl.u32 %v1816, 7
        %v1818 = vsub.s32 0, %v1817
        %v1819 = vrot.slane %v440, %v1818
        %1821 = vmatprep.subr.bf16.mxu0 0
        %1822 = vmatpush1.bf16.msra.mxu0 %v1807
        %1823 = vmatprep.subr.bf16.mxu0 0
        %1824 = vmatpush1.bf16.msra.mxu0 %v1808
        %1825 = vmatprep.subr.bf16.mxu0 0
        %1826 = vmatpush1.bf16.msra.mxu0 %v1809
        %1827 = vmatprep.subr.bf16.mxu0 0
        %1828 = vmatpush1.bf16.msra.mxu0 %v1810
        %1829 = vmatprep.subr.bf16.mxu0 0
        %1830 = vmatpush1.bf16.msra.mxu0 %v1811
        %1831 = vmatprep.subr.bf16.mxu0 0
        %1832 = vmatpush1.bf16.msra.mxu0 %v1812
        %1833 = vmatprep.subr.bf16.mxu0 0
        %1834 = vmatpush1.bf16.msra.mxu0 %v1813
        %1835 = vmatprep.subr.bf16.mxu0 0
        %1836 = vmatpush1.bf16.msra.mxu0 %v1814
        %1837 = vmatprep.subr.bf16.mxu0 0
        %1838 = vmatpush1.bf16.msra.mxu0 0
        %1839 = vmatprep.subr.bf16.mxu0 0
        %1840 = vmatpush1.bf16.msra.mxu0 0
        %1841 = vmatprep.subr.bf16.mxu0 0
        %1842 = vmatpush1.bf16.msra.mxu0 0
        %1843 = vmatprep.subr.bf16.mxu0 0
        %1844 = vmatpush1.bf16.msra.mxu0 0
        %1845 = vmatprep.subr.bf16.mxu0 0
        %1846 = vmatpush1.bf16.msra.mxu0 0
        %1847 = vmatprep.subr.bf16.mxu0 0
        %1848 = vmatpush1.bf16.msra.mxu0 0
        %1849 = vmatprep.subr.bf16.mxu0 0
        %1850 = vmatpush1.bf16.msra.mxu0 0
        %1851 = vmatprep.subr.bf16.mxu0 0
        %1852 = vmatpush1.bf16.msra.mxu0 0
        %1853 = vmatprep.mubr.bf16.mxu0 0
        %1854 = vmatmul.mubr.bf16.gmra.mrb[0].mxu0 %v1806
        %v1855 = vpop.f32.mrb[0].mxu0
        %v1856 = vadd.f32 %v1819, %v1855
        %v1857 = vpop.f32.mrb[0].mxu0
        %v1858 = vpop.f32.mrb[0].mxu0
        %v1859 = vadd.f32 %v1819, %v1858
        %v1860 = vpop.f32.mrb[0].mxu0
        %1861 = vdwg.mxu0
        %1862 = vst [vmem:[%s407] sm:$0xff] %v1856
        %1863 = vst [vmem:[%s407 + $0x8] sm:$0xff] %v1859
        %v1864 = vld [vmem:[%s412 + $0x80] sm:$0xff]
        %v1865 = vld [vmem:[%s412 + $0x88] sm:$0xff]
        %v1866 = vld [vmem:[%s412 + $0x90] sm:$0xff]
        %v1867 = vld [vmem:[%s412 + $0x98] sm:$0xff]
        %v1868 = vld [vmem:[%s412 + $0xa0] sm:$0xff]
        %v1869 = vld [vmem:[%s412 + $0xa8] sm:$0xff]
        %v1870 = vld [vmem:[%s412 + $0xb0] sm:$0xff]
        %v1871 = vld [vmem:[%s412 + $0xb8] sm:$0xff]
        %v1872 = vld [vmem:[%s412 + $0xc0] sm:$0xff]
        %v1873 = vld [vmem:[%s412 + $0xc8] sm:$0xff]
        %v1874 = vld [vmem:[%s412 + $0xd0] sm:$0xff]
        %v1875 = vld [vmem:[%s412 + $0xd8] sm:$0xff]
        %v1876 = vld [vmem:[%s412 + $0xe0] sm:$0xff]
        %v1877 = vld [vmem:[%s412 + $0xe8] sm:$0xff]
        %v1878 = vld [vmem:[%s412 + $0xf0] sm:$0xff]
        %v1879 = vld [vmem:[%s412 + $0xf8] sm:$0xff]
        %v1881 = vsel %vm476, %v1864, 0
        %v1884 = vsel %vm476, %v1865, 0
        %v1887 = vsel %vm476, %v1866, 0
        %v1890 = vsel %vm476, %v1867, 0
        %v1893 = vsel %vm476, %v1868, 0
        %v1896 = vsel %vm476, %v1869, 0
        %v1899 = vsel %vm476, %v1870, 0
        %v1902 = vsel %vm476, %v1871, 0
        %v1905 = vsel %vm476, %v1872, 0
        %v1908 = vsel %vm476, %v1873, 0
        %v1911 = vsel %vm476, %v1874, 0
        %v1914 = vsel %vm476, %v1875, 0
        %v1917 = vsel %vm476, %v1876, 0
        %v1920 = vsel %vm476, %v1877, 0
        %v1923 = vsel %vm476, %v1878, 0
        %v1926 = vsel %vm476, %v1879, 0
        %1928 = vmatprep.subr.mxu0 %v438
        %1929 = vmatpush1.msra.mxu0 %v437
        %1930 = vmatprep.subr.mxu0 0.0
        %1931 = vmatpush1.msra.mxu0 0.0
        %1932 = vmatprep.subr.mxu0 0.0
        %1933 = vmatpush1.msra.mxu0 0.0
        %1934 = vmatprep.subr.mxu0 0.0
        %1935 = vmatpush1.msra.mxu0 0.0
        %1936 = vmatprep.subr.mxu0 0.0
        %1937 = vmatpush1.msra.mxu0 0.0
        %1938 = vmatprep.subr.mxu0 0.0
        %1939 = vmatpush1.msra.mxu0 0.0
        %1940 = vmatprep.subr.mxu0 0.0
        %1941 = vmatpush1.msra.mxu0 0.0
        %1942 = vmatprep.subr.mxu0 0.0
        %1943 = vmatpush1.msra.mxu0 0.0
        %1944 = vmatprep.subr.mxu0 0.0
        %1945 = vmatpush1.msra.mxu0 0.0
        %1946 = vmatprep.subr.mxu0 0.0
        %1947 = vmatpush1.msra.mxu0 0.0
        %1948 = vmatprep.subr.mxu0 0.0
        %1949 = vmatpush1.msra.mxu0 0.0
        %1950 = vmatprep.subr.mxu0 0.0
        %1951 = vmatpush1.msra.mxu0 0.0
        %1952 = vmatprep.subr.mxu0 0.0
        %1953 = vmatpush1.msra.mxu0 0.0
        %1954 = vmatprep.subr.mxu0 0.0
        %1955 = vmatpush1.msra.mxu0 0.0
        %1956 = vmatprep.subr.mxu0 0.0
        %1957 = vmatpush1.msra.mxu0 0.0
        %1958 = vmatprep.subr.mxu0 0.0
        %1959 = vmatpush1.msra.mxu0 0.0
        %1960 = vmatprep.subr.mxu0 0.0
        %1961 = vmatpush1.msra.mxu0 0.0
        %1962 = vmatprep.subr.mxu0 0.0
        %1963 = vmatpush1.msra.mxu0 0.0
        %1964 = vmatprep.subr.mxu0 0.0
        %1965 = vmatpush1.msra.mxu0 0.0
        %1966 = vmatprep.subr.mxu0 0.0
        %1967 = vmatpush1.msra.mxu0 0.0
        %1968 = vmatprep.subr.mxu0 0.0
        %1969 = vmatpush1.msra.mxu0 0.0
        %1970 = vmatprep.subr.mxu0 0.0
        %1971 = vmatpush1.msra.mxu0 0.0
        %1972 = vmatprep.subr.mxu0 0.0
        %1973 = vmatpush1.msra.mxu0 0.0
        %1974 = vmatprep.subr.mxu0 0.0
        %1975 = vmatpush1.msra.mxu0 0.0
        %1976 = vmatprep.subr.mxu0 0.0
        %1977 = vmatpush1.msra.mxu0 0.0
        %1978 = vmatprep.subr.mxu0 0.0
        %1979 = vmatpush1.msra.mxu0 0.0
        %1980 = vmatprep.subr.mxu0 0.0
        %1981 = vmatpush1.msra.mxu0 0.0
        %1982 = vmatprep.subr.mxu0 0.0
        %1983 = vmatpush1.msra.mxu0 0.0
        %1984 = vmatprep.subr.mxu0 0.0
        %1985 = vmatpush1.msra.mxu0 0.0
        %1986 = vmatprep.subr.mxu0 0.0
        %1987 = vmatpush1.msra.mxu0 0.0
        %1988 = vmatprep.subr.mxu0 0.0
        %1989 = vmatpush1.msra.mxu0 0.0
        %1990 = vmatprep.subr.mxu0 0.0
        %1991 = vmatpush1.msra.mxu0 0.0
        %1992 = vmatprep.mubr.f32.mxu0 0.0
        %1993 = vmatmul.mubr.f32.gmra.mrb[0].mxu0 %v1881
        %v1994 = vpop.f32.mrb[0].mxu0
        %v1995 = vadd.f32 %v469, %v1994
        %v1996 = vpop.f32.mrb[0].mxu0
        %v1997 = vadd.f32 %v473, %v1996
        %1998 = vmatprep.mubr.f32.mxu0 0.0
        %1999 = vmatmul.mubr.f32.gmra.mrb[0].mxu0 %v1884
        %v2000 = vpop.f32.mrb[0].mxu0
        %v2001 = vadd.f32 %v469, %v2000
        %v2002 = vpop.f32.mrb[0].mxu0
        %v2003 = vadd.f32 %v473, %v2002
        %2004 = vmatprep.mubr.f32.mxu0 0.0
        %2005 = vmatmul.mubr.f32.gmra.mrb[0].mxu0 %v1887
        %v2006 = vpop.f32.mrb[0].mxu0
        %v2007 = vadd.f32 %v469, %v2006
        %v2008 = vpop.f32.mrb[0].mxu0
        %v2009 = vadd.f32 %v473, %v2008
        %2010 = vmatprep.mubr.f32.mxu0 0.0
        %2011 = vmatmul.mubr.f32.gmra.mrb[0].mxu0 %v1890
        %v2012 = vpop.f32.mrb[0].mxu0
        %v2013 = vadd.f32 %v469, %v2012
        %v2014 = vpop.f32.mrb[0].mxu0
        %v2015 = vadd.f32 %v473, %v2014
        %2016 = vmatprep.mubr.f32.mxu0 0.0
        %2017 = vmatmul.mubr.f32.gmra.mrb[0].mxu0 %v1893
        %v2018 = vpop.f32.mrb[0].mxu0
        %v2019 = vadd.f32 %v469, %v2018
        %v2020 = vpop.f32.mrb[0].mxu0
        %v2021 = vadd.f32 %v473, %v2020
        %2022 = vmatprep.mubr.f32.mxu0 0.0
        %2023 = vmatmul.mubr.f32.gmra.mrb[0].mxu0 %v1896
        %v2024 = vpop.f32.mrb[0].mxu0
        %v2025 = vadd.f32 %v469, %v2024
        %v2026 = vpop.f32.mrb[0].mxu0
        %v2027 = vadd.f32 %v473, %v2026
        %2028 = vmatprep.mubr.f32.mxu0 0.0
        %2029 = vmatmul.mubr.f32.gmra.mrb[0].mxu0 %v1899
        %v2030 = vpop.f32.mrb[0].mxu0
        %v2031 = vadd.f32 %v469, %v2030
        %v2032 = vpop.f32.mrb[0].mxu0
        %v2033 = vadd.f32 %v473, %v2032
        %2034 = vmatprep.mubr.f32.mxu0 0.0
        %2035 = vmatmul.mubr.f32.gmra.mrb[0].mxu0 %v1902
        %v2036 = vpop.f32.mrb[0].mxu0
        %v2037 = vadd.f32 %v469, %v2036
        %v2038 = vpop.f32.mrb[0].mxu0
        %v2039 = vadd.f32 %v473, %v2038
        %2040 = vmatprep.mubr.f32.mxu0 0.0
        %2041 = vmatmul.mubr.f32.gmra.mrb[0].mxu0 %v1905
        %v2042 = vpop.f32.mrb[0].mxu0
        %v2043 = vadd.f32 %v469, %v2042
        %v2044 = vpop.f32.mrb[0].mxu0
        %v2045 = vadd.f32 %v473, %v2044
        %2046 = vmatprep.mubr.f32.mxu0 0.0
        %2047 = vmatmul.mubr.f32.gmra.mrb[0].mxu0 %v1908
        %v2048 = vpop.f32.mrb[0].mxu0
        %v2049 = vadd.f32 %v469, %v2048
        %v2050 = vpop.f32.mrb[0].mxu0
        %v2051 = vadd.f32 %v473, %v2050
        %2052 = vmatprep.mubr.f32.mxu0 0.0
        %2053 = vmatmul.mubr.f32.gmra.mrb[0].mxu0 %v1911
        %v2054 = vpop.f32.mrb[0].mxu0
        %v2055 = vadd.f32 %v469, %v2054
        %v2056 = vpop.f32.mrb[0].mxu0
        %v2057 = vadd.f32 %v473, %v2056
        %2058 = vmatprep.mubr.f32.mxu0 0.0
        %2059 = vmatmul.mubr.f32.gmra.mrb[0].mxu0 %v1914
        %v2060 = vpop.f32.mrb[0].mxu0
        %v2061 = vadd.f32 %v469, %v2060
        %v2062 = vpop.f32.mrb[0].mxu0
        %v2063 = vadd.f32 %v473, %v2062
        %2064 = vmatprep.mubr.f32.mxu0 0.0
        %2065 = vmatmul.mubr.f32.gmra.mrb[0].mxu0 %v1917
        %v2066 = vpop.f32.mrb[0].mxu0
        %v2067 = vadd.f32 %v469, %v2066
        %v2068 = vpop.f32.mrb[0].mxu0
        %v2069 = vadd.f32 %v473, %v2068
        %2070 = vmatprep.mubr.f32.mxu0 0.0
        %2071 = vmatmul.mubr.f32.gmra.mrb[0].mxu0 %v1920
        %v2072 = vpop.f32.mrb[0].mxu0
        %v2073 = vadd.f32 %v469, %v2072
        %v2074 = vpop.f32.mrb[0].mxu0
        %v2075 = vadd.f32 %v473, %v2074
        %2076 = vmatprep.mubr.f32.mxu0 0.0
        %2077 = vmatmul.mubr.f32.gmra.mrb[0].mxu0 %v1923
        %v2078 = vpop.f32.mrb[0].mxu0
        %v2079 = vadd.f32 %v469, %v2078
        %v2080 = vpop.f32.mrb[0].mxu0
        %v2081 = vadd.f32 %v473, %v2080
        %2082 = vmatprep.mubr.f32.mxu0 0.0
        %2083 = vmatmul.mubr.f32.gmra.mrb[0].mxu0 %v1926
        %v2084 = vpop.f32.mrb[0].mxu0
        %v2085 = vadd.f32 %v469, %v2084
        %v2086 = vpop.f32.mrb[0].mxu0
        %v2087 = vadd.f32 %v473, %v2086
        %2088 = vdwg.mxu0
        %s2089 = scalar_lea.vmem %s426, 64
        %v2090 = vld [vmem:[%s2089] sm:$0xf]
        %v2091 = vld [vmem:[%s2089 + $0x4] sm:$0xf]
        %v2092 = vld [vmem:[%s2089 + $0x8] sm:$0xf]
        %v2093 = vld [vmem:[%s2089 + $0xc] sm:$0xf]
        %v2094 = vld [vmem:[%s2089 + $0x10] sm:$0xf]
        %v2095 = vld [vmem:[%s2089 + $0x14] sm:$0xf]
        %v2096 = vld [vmem:[%s2089 + $0x18] sm:$0xf]
        %v2097 = vld [vmem:[%s2089 + $0x1c] sm:$0xf]
        %v2098 = vld [vmem:[%s2089 + $0x20] sm:$0xf]
        %v2099 = vld [vmem:[%s2089 + $0x24] sm:$0xf]
        %v2100 = vld [vmem:[%s2089 + $0x28] sm:$0xf]
        %v2101 = vld [vmem:[%s2089 + $0x2c] sm:$0xf]
        %v2102 = vld [vmem:[%s2089 + $0x30] sm:$0xf]
        %v2103 = vld [vmem:[%s2089 + $0x34] sm:$0xf]
        %v2104 = vld [vmem:[%s2089 + $0x38] sm:$0xf]
        %v2105 = vld [vmem:[%s2089 + $0x3c] sm:$0xf]
        %v2106 = vunpack.c.l.bf16 %v2090
        %v2107 = vunpack.c.l.bf16 %v2091
        %v2108 = vunpack.c.l.bf16 %v2092
        %v2109 = vunpack.c.l.bf16 %v2093
        %v2110 = vunpack.c.l.bf16 %v2094
        %v2111 = vunpack.c.l.bf16 %v2095
        %v2112 = vunpack.c.l.bf16 %v2096
        %v2113 = vunpack.c.l.bf16 %v2097
        %v2114 = vunpack.c.l.bf16 %v2098
        %v2115 = vunpack.c.l.bf16 %v2099
        %v2116 = vunpack.c.l.bf16 %v2100
        %v2117 = vunpack.c.l.bf16 %v2101
        %v2118 = vunpack.c.l.bf16 %v2102
        %v2119 = vunpack.c.l.bf16 %v2103
        %v2120 = vunpack.c.l.bf16 %v2104
        %v2121 = vunpack.c.l.bf16 %v2105
        %s2122 = scalar_lea.vmem %s419, 32
        %v2123 = vld [vmem:[%s2122] sm:$0xff]
        %v2124 = vld [vmem:[%s2122 + $0x8] sm:$0xff]
        %v2125 = vld [vmem:[%s2122 + $0x10] sm:$0xff]
        %v2126 = vld [vmem:[%s2122 + $0x18] sm:$0xff]
        %v2127 = vunpack.c.0.s8 %v2123
        %v2128 = vunpack.c.1.s8 %v2123
        %v2129 = vunpack.c.2.s8 %v2123
        %v2130 = vunpack.c.3.s8 %v2123
        %v2131 = vunpack.c.0.s8 %v2124
        %v2132 = vunpack.c.1.s8 %v2124
        %v2133 = vunpack.c.2.s8 %v2124
        %v2134 = vunpack.c.3.s8 %v2124
        %v2135 = vunpack.c.0.s8 %v2125
        %v2136 = vunpack.c.1.s8 %v2125
        %v2137 = vunpack.c.2.s8 %v2125
        %v2138 = vunpack.c.3.s8 %v2125
        %v2139 = vunpack.c.0.s8 %v2126
        %v2140 = vunpack.c.1.s8 %v2126
        %v2141 = vunpack.c.2.s8 %v2126
        %v2142 = vunpack.c.3.s8 %v2126
        %v2143 = vcvt.s32.f32 %v2127
        %v2144 = vcvt.s32.f32 %v2128
        %v2145 = vcvt.s32.f32 %v2129
        %v2146 = vcvt.s32.f32 %v2130
        %v2147 = vcvt.s32.f32 %v2131
        %v2148 = vcvt.s32.f32 %v2132
        %v2149 = vcvt.s32.f32 %v2133
        %v2150 = vcvt.s32.f32 %v2134
        %v2151 = vcvt.s32.f32 %v2135
        %v2152 = vcvt.s32.f32 %v2136
        %v2153 = vcvt.s32.f32 %v2137
        %v2154 = vcvt.s32.f32 %v2138
        %v2155 = vcvt.s32.f32 %v2139
        %v2156 = vcvt.s32.f32 %v2140
        %v2157 = vcvt.s32.f32 %v2141
        %v2158 = vcvt.s32.f32 %v2142
        %vm2159 = vcmp.gt.f32.partialorder %v2143, 0.0
        %vm2160 = vcmp.gt.f32.partialorder %v2144, 0.0
        %vm2161 = vcmp.gt.f32.partialorder %v2145, 0.0
        %vm2162 = vcmp.gt.f32.partialorder %v2146, 0.0
        %vm2163 = vcmp.gt.f32.partialorder %v2147, 0.0
        %vm2164 = vcmp.gt.f32.partialorder %v2148, 0.0
        %vm2165 = vcmp.gt.f32.partialorder %v2149, 0.0
        %vm2166 = vcmp.gt.f32.partialorder %v2150, 0.0
        %vm2167 = vcmp.gt.f32.partialorder %v2151, 0.0
        %vm2168 = vcmp.gt.f32.partialorder %v2152, 0.0
        %vm2169 = vcmp.gt.f32.partialorder %v2153, 0.0
        %vm2170 = vcmp.gt.f32.partialorder %v2154, 0.0
        %vm2171 = vcmp.gt.f32.partialorder %v2155, 0.0
        %vm2172 = vcmp.gt.f32.partialorder %v2156, 0.0
        %vm2173 = vcmp.gt.f32.partialorder %v2157, 0.0
        %vm2174 = vcmp.gt.f32.partialorder %v2158, 0.0
        %2175 = vxpose.xlu0.b32.start [1/16] %v1995, 128
        %2176 = vxpose.xlu0.b32.cont [2/16] %v2001, 128
        %2177 = vxpose.xlu0.b32.cont [3/16] %v2007, 128
        %2178 = vxpose.xlu0.b32.cont [4/16] %v2013, 128
        %2179 = vxpose.xlu0.b32.cont [5/16] %v2019, 128
        %2180 = vxpose.xlu0.b32.cont [6/16] %v2025, 128
        %2181 = vxpose.xlu0.b32.cont [7/16] %v2031, 128
        %2182 = vxpose.xlu0.b32.cont [8/16] %v2037, 128
        %2183 = vxpose.xlu0.b32.cont [9/16] %v2043, 128
        %2184 = vxpose.xlu0.b32.cont [10/16] %v2049, 128
        %2185 = vxpose.xlu0.b32.cont [11/16] %v2055, 128
        %2186 = vxpose.xlu0.b32.cont [12/16] %v2061, 128
        %2187 = vxpose.xlu0.b32.cont [13/16] %v2067, 128
        %2188 = vxpose.xlu0.b32.cont [14/16] %v2073, 128
        %2189 = vxpose.xlu0.b32.cont [15/16] %v2079, 128
        %2190 = vxpose.xlu0.b32.end [16/16] %v2085, 128
        %v2191 = vpop.trf.xlu0
        %v2192 = vpop.trf.xlu0
        %v2193 = vpop.trf.xlu0
        %v2194 = vpop.trf.xlu0
        %v2195 = vpop.trf.xlu0
        %v2196 = vpop.trf.xlu0
        %v2197 = vpop.trf.xlu0
        %v2198 = vpop.trf.xlu0
        %v2199 = vpop.trf.xlu0
        %v2200 = vpop.trf.xlu0
        %v2201 = vpop.trf.xlu0
        %v2202 = vpop.trf.xlu0
        %v2203 = vpop.trf.xlu0
        %v2204 = vpop.trf.xlu0
        %v2205 = vpop.trf.xlu0
        %v2206 = vpop.trf.xlu0
        %2208 = vset.pattern.permute.xlu0 0
        %2209 = vperm.xlu0 %2208, %v1997
        %v2210 = vpop.permute.xlu0 %2209
        %2213 = vset.pattern.permute.xlu0 0
        %2214 = vperm.xlu0 %2213, %v2003
        %v2215 = vpop.permute.xlu0 %2214
        %2218 = vset.pattern.permute.xlu0 0
        %2219 = vperm.xlu0 %2218, %v2009
        %v2220 = vpop.permute.xlu0 %2219
        %2223 = vset.pattern.permute.xlu0 0
        %2224 = vperm.xlu0 %2223, %v2015
        %v2225 = vpop.permute.xlu0 %2224
        %2228 = vset.pattern.permute.xlu0 0
        %2229 = vperm.xlu0 %2228, %v2021
        %v2230 = vpop.permute.xlu0 %2229
        %2233 = vset.pattern.permute.xlu0 0
        %2234 = vperm.xlu0 %2233, %v2027
        %v2235 = vpop.permute.xlu0 %2234
        %2238 = vset.pattern.permute.xlu0 0
        %2239 = vperm.xlu0 %2238, %v2033
        %v2240 = vpop.permute.xlu0 %2239
        %2243 = vset.pattern.permute.xlu0 0
        %2244 = vperm.xlu0 %2243, %v2039
        %v2245 = vpop.permute.xlu0 %2244
        %2248 = vset.pattern.permute.xlu0 0
        %2249 = vperm.xlu0 %2248, %v2045
        %v2250 = vpop.permute.xlu0 %2249
        %2253 = vset.pattern.permute.xlu0 0
        %2254 = vperm.xlu0 %2253, %v2051
        %v2255 = vpop.permute.xlu0 %2254
        %2258 = vset.pattern.permute.xlu0 0
        %2259 = vperm.xlu0 %2258, %v2057
        %v2260 = vpop.permute.xlu0 %2259
        %2263 = vset.pattern.permute.xlu0 0
        %2264 = vperm.xlu0 %2263, %v2063
        %v2265 = vpop.permute.xlu0 %2264
        %2268 = vset.pattern.permute.xlu0 0
        %2269 = vperm.xlu0 %2268, %v2069
        %v2270 = vpop.permute.xlu0 %2269
        %2273 = vset.pattern.permute.xlu0 0
        %2274 = vperm.xlu0 %2273, %v2075
        %v2275 = vpop.permute.xlu0 %2274
        %2278 = vset.pattern.permute.xlu0 0
        %2279 = vperm.xlu0 %2278, %v2081
        %v2280 = vpop.permute.xlu0 %2279
        %2283 = vset.pattern.permute.xlu0 0
        %2284 = vperm.xlu0 %2283, %v2087
        %v2285 = vpop.permute.xlu0 %2284
        %v2287 = vlaneseq
        %v2288 = vshrl.u32 %v2287, 7
        %v2289 = vsub.s32 0, %v2288
        %v2290 = vrot.slane %v2191, %v2289
        %v2291 = vadd.f32 %v2210, %v2290
        %v2292 = vadd.f32 %v2215, %v2290
        %v2293 = vadd.f32 %v2220, %v2290
        %v2294 = vadd.f32 %v2225, %v2290
        %v2295 = vadd.f32 %v2230, %v2290
        %v2296 = vadd.f32 %v2235, %v2290
        %v2297 = vadd.f32 %v2240, %v2290
        %v2298 = vadd.f32 %v2245, %v2290
        %v2299 = vadd.f32 %v2250, %v2290
        %v2300 = vadd.f32 %v2255, %v2290
        %v2301 = vadd.f32 %v2260, %v2290
        %v2302 = vadd.f32 %v2265, %v2290
        %v2303 = vadd.f32 %v2270, %v2290
        %v2304 = vadd.f32 %v2275, %v2290
        %v2305 = vadd.f32 %v2280, %v2290
        %v2306 = vadd.f32 %v2285, %v2290
        %v2307 = vmul.f32 %v2106, %v902
        %v2308 = vmul.f32 %v2107, %v902
        %v2309 = vmul.f32 %v2108, %v902
        %v2310 = vmul.f32 %v2109, %v902
        %v2311 = vmul.f32 %v2110, %v902
        %v2312 = vmul.f32 %v2111, %v902
        %v2313 = vmul.f32 %v2112, %v902
        %v2314 = vmul.f32 %v2113, %v902
        %v2315 = vmul.f32 %v2114, %v902
        %v2316 = vmul.f32 %v2115, %v902
        %v2317 = vmul.f32 %v2116, %v902
        %v2318 = vmul.f32 %v2117, %v902
        %v2319 = vmul.f32 %v2118, %v902
        %v2320 = vmul.f32 %v2119, %v902
        %v2321 = vmul.f32 %v2120, %v902
        %v2322 = vmul.f32 %v2121, %v902
        %v2323 = vadd.f32 %v2291, %v2307
        %v2324 = vadd.f32 %v2292, %v2308
        %v2325 = vadd.f32 %v2293, %v2309
        %v2326 = vadd.f32 %v2294, %v2310
        %v2327 = vadd.f32 %v2295, %v2311
        %v2328 = vadd.f32 %v2296, %v2312
        %v2329 = vadd.f32 %v2297, %v2313
        %v2330 = vadd.f32 %v2298, %v2314
        %v2331 = vadd.f32 %v2299, %v2315
        %v2332 = vadd.f32 %v2300, %v2316
        %v2333 = vadd.f32 %v2301, %v2317
        %v2334 = vadd.f32 %v2302, %v2318
        %v2335 = vadd.f32 %v2303, %v2319
        %v2336 = vadd.f32 %v2304, %v2320
        %v2337 = vadd.f32 %v2305, %v2321
        %v2338 = vadd.f32 %v2306, %v2322
        %vm2339 = vcmp.gt.f32.partialorder %v2323, 0.0
        %vm2340 = vcmp.gt.f32.partialorder %v2324, 0.0
        %vm2341 = vcmp.gt.f32.partialorder %v2325, 0.0
        %vm2342 = vcmp.gt.f32.partialorder %v2326, 0.0
        %vm2343 = vcmp.gt.f32.partialorder %v2327, 0.0
        %vm2344 = vcmp.gt.f32.partialorder %v2328, 0.0
        %vm2345 = vcmp.gt.f32.partialorder %v2329, 0.0
        %vm2346 = vcmp.gt.f32.partialorder %v2330, 0.0
        %vm2347 = vcmp.gt.f32.partialorder %v2331, 0.0
        %vm2348 = vcmp.gt.f32.partialorder %v2332, 0.0
        %vm2349 = vcmp.gt.f32.partialorder %v2333, 0.0
        %vm2350 = vcmp.gt.f32.partialorder %v2334, 0.0
        %vm2351 = vcmp.gt.f32.partialorder %v2335, 0.0
        %vm2352 = vcmp.gt.f32.partialorder %v2336, 0.0
        %vm2353 = vcmp.gt.f32.partialorder %v2337, 0.0
        %vm2354 = vcmp.gt.f32.partialorder %v2338, 0.0
        %v2355 = vmul.f32 %v2323, 0.2
        %v2356 = vmul.f32 %v2324, 0.2
        %v2357 = vmul.f32 %v2325, 0.2
        %v2358 = vmul.f32 %v2326, 0.2
        %v2359 = vmul.f32 %v2327, 0.2
        %v2360 = vmul.f32 %v2328, 0.2
        %v2361 = vmul.f32 %v2329, 0.2
        %v2362 = vmul.f32 %v2330, 0.2
        %v2363 = vmul.f32 %v2331, 0.2
        %v2364 = vmul.f32 %v2332, 0.2
        %v2365 = vmul.f32 %v2333, 0.2
        %v2366 = vmul.f32 %v2334, 0.2
        %v2367 = vmul.f32 %v2335, 0.2
        %v2368 = vmul.f32 %v2336, 0.2
        %v2369 = vmul.f32 %v2337, 0.2
        %v2370 = vmul.f32 %v2338, 0.2
        %v2371 = vsel %vm2339, %v2323, %v2355
        %v2372 = vsel %vm2340, %v2324, %v2356
        %v2373 = vsel %vm2341, %v2325, %v2357
        %v2374 = vsel %vm2342, %v2326, %v2358
        %v2375 = vsel %vm2343, %v2327, %v2359
        %v2376 = vsel %vm2344, %v2328, %v2360
        %v2377 = vsel %vm2345, %v2329, %v2361
        %v2378 = vsel %vm2346, %v2330, %v2362
        %v2379 = vsel %vm2347, %v2331, %v2363
        %v2380 = vsel %vm2348, %v2332, %v2364
        %v2381 = vsel %vm2349, %v2333, %v2365
        %v2382 = vsel %vm2350, %v2334, %v2366
        %v2383 = vsel %vm2351, %v2335, %v2367
        %v2384 = vsel %vm2352, %v2336, %v2368
        %v2385 = vsel %vm2353, %v2337, %v2369
        %v2386 = vsel %vm2354, %v2338, %v2370
        %v2387 = vmul.f32 %v983, %v2371
        %v2388 = vmul.f32 %v983, %v2372
        %v2389 = vmul.f32 %v983, %v2373
        %v2390 = vmul.f32 %v983, %v2374
        %v2391 = vmul.f32 %v983, %v2375
        %v2392 = vmul.f32 %v983, %v2376
        %v2393 = vmul.f32 %v983, %v2377
        %v2394 = vmul.f32 %v983, %v2378
        %v2395 = vmul.f32 %v983, %v2379
        %v2396 = vmul.f32 %v983, %v2380
        %v2397 = vmul.f32 %v983, %v2381
        %v2398 = vmul.f32 %v983, %v2382
        %v2399 = vmul.f32 %v983, %v2383
        %v2400 = vmul.f32 %v983, %v2384
        %v2401 = vmul.f32 %v983, %v2385
        %v2402 = vmul.f32 %v983, %v2386
        %2403 = vset.pattern.permute.xlu0 1
        %2404 = vperm.xlu0 %2403, %v1997
        %v2405 = vpop.permute.xlu0 %2404
        %2407 = vset.pattern.permute.xlu0 1
        %2408 = vperm.xlu0 %2407, %v2003
        %v2409 = vpop.permute.xlu0 %2408
        %2411 = vset.pattern.permute.xlu0 1
        %2412 = vperm.xlu0 %2411, %v2009
        %v2413 = vpop.permute.xlu0 %2412
        %2415 = vset.pattern.permute.xlu0 1
        %2416 = vperm.xlu0 %2415, %v2015
        %v2417 = vpop.permute.xlu0 %2416
        %2419 = vset.pattern.permute.xlu0 1
        %2420 = vperm.xlu0 %2419, %v2021
        %v2421 = vpop.permute.xlu0 %2420
        %2423 = vset.pattern.permute.xlu0 1
        %2424 = vperm.xlu0 %2423, %v2027
        %v2425 = vpop.permute.xlu0 %2424
        %2427 = vset.pattern.permute.xlu0 1
        %2428 = vperm.xlu0 %2427, %v2033
        %v2429 = vpop.permute.xlu0 %2428
        %2431 = vset.pattern.permute.xlu0 1
        %2432 = vperm.xlu0 %2431, %v2039
        %v2433 = vpop.permute.xlu0 %2432
        %2435 = vset.pattern.permute.xlu0 1
        %2436 = vperm.xlu0 %2435, %v2045
        %v2437 = vpop.permute.xlu0 %2436
        %2439 = vset.pattern.permute.xlu0 1
        %2440 = vperm.xlu0 %2439, %v2051
        %v2441 = vpop.permute.xlu0 %2440
        %2443 = vset.pattern.permute.xlu0 1
        %2444 = vperm.xlu0 %2443, %v2057
        %v2445 = vpop.permute.xlu0 %2444
        %2447 = vset.pattern.permute.xlu0 1
        %2448 = vperm.xlu0 %2447, %v2063
        %v2449 = vpop.permute.xlu0 %2448
        %2451 = vset.pattern.permute.xlu0 1
        %2452 = vperm.xlu0 %2451, %v2069
        %v2453 = vpop.permute.xlu0 %2452
        %2455 = vset.pattern.permute.xlu0 1
        %2456 = vperm.xlu0 %2455, %v2075
        %v2457 = vpop.permute.xlu0 %2456
        %2459 = vset.pattern.permute.xlu0 1
        %2460 = vperm.xlu0 %2459, %v2081
        %v2461 = vpop.permute.xlu0 %2460
        %2463 = vset.pattern.permute.xlu0 1
        %2464 = vperm.xlu0 %2463, %v2087
        %v2465 = vpop.permute.xlu0 %2464
        %v2467 = vlaneseq
        %v2468 = vshrl.u32 %v2467, 7
        %v2469 = vsub.s32 1, %v2468
        %v2470 = vrot.slane %v2191, %v2469
        %v2471 = vadd.f32 %v2405, %v2470
        %v2472 = vadd.f32 %v2409, %v2470
        %v2473 = vadd.f32 %v2413, %v2470
        %v2474 = vadd.f32 %v2417, %v2470
        %v2475 = vadd.f32 %v2421, %v2470
        %v2476 = vadd.f32 %v2425, %v2470
        %v2477 = vadd.f32 %v2429, %v2470
        %v2478 = vadd.f32 %v2433, %v2470
        %v2479 = vadd.f32 %v2437, %v2470
        %v2480 = vadd.f32 %v2441, %v2470
        %v2481 = vadd.f32 %v2445, %v2470
        %v2482 = vadd.f32 %v2449, %v2470
        %v2483 = vadd.f32 %v2453, %v2470
        %v2484 = vadd.f32 %v2457, %v2470
        %v2485 = vadd.f32 %v2461, %v2470
        %v2486 = vadd.f32 %v2465, %v2470
        %v2487 = vmul.f32 %v2106, %v1084
        %v2488 = vmul.f32 %v2107, %v1084
        %v2489 = vmul.f32 %v2108, %v1084
        %v2490 = vmul.f32 %v2109, %v1084
        %v2491 = vmul.f32 %v2110, %v1084
        %v2492 = vmul.f32 %v2111, %v1084
        %v2493 = vmul.f32 %v2112, %v1084
        %v2494 = vmul.f32 %v2113, %v1084
        %v2495 = vmul.f32 %v2114, %v1084
        %v2496 = vmul.f32 %v2115, %v1084
        %v2497 = vmul.f32 %v2116, %v1084
        %v2498 = vmul.f32 %v2117, %v1084
        %v2499 = vmul.f32 %v2118, %v1084
        %v2500 = vmul.f32 %v2119, %v1084
        %v2501 = vmul.f32 %v2120, %v1084
        %v2502 = vmul.f32 %v2121, %v1084
        %v2503 = vadd.f32 %v2471, %v2487
        %v2504 = vadd.f32 %v2472, %v2488
        %v2505 = vadd.f32 %v2473, %v2489
        %v2506 = vadd.f32 %v2474, %v2490
        %v2507 = vadd.f32 %v2475, %v2491
        %v2508 = vadd.f32 %v2476, %v2492
        %v2509 = vadd.f32 %v2477, %v2493
        %v2510 = vadd.f32 %v2478, %v2494
        %v2511 = vadd.f32 %v2479, %v2495
        %v2512 = vadd.f32 %v2480, %v2496
        %v2513 = vadd.f32 %v2481, %v2497
        %v2514 = vadd.f32 %v2482, %v2498
        %v2515 = vadd.f32 %v2483, %v2499
        %v2516 = vadd.f32 %v2484, %v2500
        %v2517 = vadd.f32 %v2485, %v2501
        %v2518 = vadd.f32 %v2486, %v2502
        %vm2519 = vcmp.gt.f32.partialorder %v2503, 0.0
        %vm2520 = vcmp.gt.f32.partialorder %v2504, 0.0
        %vm2521 = vcmp.gt.f32.partialorder %v2505, 0.0
        %vm2522 = vcmp.gt.f32.partialorder %v2506, 0.0
        %vm2523 = vcmp.gt.f32.partialorder %v2507, 0.0
        %vm2524 = vcmp.gt.f32.partialorder %v2508, 0.0
        %vm2525 = vcmp.gt.f32.partialorder %v2509, 0.0
        %vm2526 = vcmp.gt.f32.partialorder %v2510, 0.0
        %vm2527 = vcmp.gt.f32.partialorder %v2511, 0.0
        %vm2528 = vcmp.gt.f32.partialorder %v2512, 0.0
        %vm2529 = vcmp.gt.f32.partialorder %v2513, 0.0
        %vm2530 = vcmp.gt.f32.partialorder %v2514, 0.0
        %vm2531 = vcmp.gt.f32.partialorder %v2515, 0.0
        %vm2532 = vcmp.gt.f32.partialorder %v2516, 0.0
        %vm2533 = vcmp.gt.f32.partialorder %v2517, 0.0
        %vm2534 = vcmp.gt.f32.partialorder %v2518, 0.0
        %v2535 = vmul.f32 %v2503, 0.2
        %v2536 = vmul.f32 %v2504, 0.2
        %v2537 = vmul.f32 %v2505, 0.2
        %v2538 = vmul.f32 %v2506, 0.2
        %v2539 = vmul.f32 %v2507, 0.2
        %v2540 = vmul.f32 %v2508, 0.2
        %v2541 = vmul.f32 %v2509, 0.2
        %v2542 = vmul.f32 %v2510, 0.2
        %v2543 = vmul.f32 %v2511, 0.2
        %v2544 = vmul.f32 %v2512, 0.2
        %v2545 = vmul.f32 %v2513, 0.2
        %v2546 = vmul.f32 %v2514, 0.2
        %v2547 = vmul.f32 %v2515, 0.2
        %v2548 = vmul.f32 %v2516, 0.2
        %v2549 = vmul.f32 %v2517, 0.2
        %v2550 = vmul.f32 %v2518, 0.2
        %v2551 = vsel %vm2519, %v2503, %v2535
        %v2552 = vsel %vm2520, %v2504, %v2536
        %v2553 = vsel %vm2521, %v2505, %v2537
        %v2554 = vsel %vm2522, %v2506, %v2538
        %v2555 = vsel %vm2523, %v2507, %v2539
        %v2556 = vsel %vm2524, %v2508, %v2540
        %v2557 = vsel %vm2525, %v2509, %v2541
        %v2558 = vsel %vm2526, %v2510, %v2542
        %v2559 = vsel %vm2527, %v2511, %v2543
        %v2560 = vsel %vm2528, %v2512, %v2544
        %v2561 = vsel %vm2529, %v2513, %v2545
        %v2562 = vsel %vm2530, %v2514, %v2546
        %v2563 = vsel %vm2531, %v2515, %v2547
        %v2564 = vsel %vm2532, %v2516, %v2548
        %v2565 = vsel %vm2533, %v2517, %v2549
        %v2566 = vsel %vm2534, %v2518, %v2550
        %v2567 = vmul.f32 %v1165, %v2551
        %v2568 = vmul.f32 %v1165, %v2552
        %v2569 = vmul.f32 %v1165, %v2553
        %v2570 = vmul.f32 %v1165, %v2554
        %v2571 = vmul.f32 %v1165, %v2555
        %v2572 = vmul.f32 %v1165, %v2556
        %v2573 = vmul.f32 %v1165, %v2557
        %v2574 = vmul.f32 %v1165, %v2558
        %v2575 = vmul.f32 %v1165, %v2559
        %v2576 = vmul.f32 %v1165, %v2560
        %v2577 = vmul.f32 %v1165, %v2561
        %v2578 = vmul.f32 %v1165, %v2562
        %v2579 = vmul.f32 %v1165, %v2563
        %v2580 = vmul.f32 %v1165, %v2564
        %v2581 = vmul.f32 %v1165, %v2565
        %v2582 = vmul.f32 %v1165, %v2566
        %v2583 = vadd.f32 %v2387, %v2567
        %v2584 = vadd.f32 %v2388, %v2568
        %v2585 = vadd.f32 %v2389, %v2569
        %v2586 = vadd.f32 %v2390, %v2570
        %v2587 = vadd.f32 %v2391, %v2571
        %v2588 = vadd.f32 %v2392, %v2572
        %v2589 = vadd.f32 %v2393, %v2573
        %v2590 = vadd.f32 %v2394, %v2574
        %v2591 = vadd.f32 %v2395, %v2575
        %v2592 = vadd.f32 %v2396, %v2576
        %v2593 = vadd.f32 %v2397, %v2577
        %v2594 = vadd.f32 %v2398, %v2578
        %v2595 = vadd.f32 %v2399, %v2579
        %v2596 = vadd.f32 %v2400, %v2580
        %v2597 = vadd.f32 %v2401, %v2581
        %v2598 = vadd.f32 %v2402, %v2582
        %2599 = vset.pattern.permute.xlu0 2
        %2600 = vperm.xlu0 %2599, %v1997
        %v2601 = vpop.permute.xlu0 %2600
        %2603 = vset.pattern.permute.xlu0 2
        %2604 = vperm.xlu0 %2603, %v2003
        %v2605 = vpop.permute.xlu0 %2604
        %2607 = vset.pattern.permute.xlu0 2
        %2608 = vperm.xlu0 %2607, %v2009
        %v2609 = vpop.permute.xlu0 %2608
        %2611 = vset.pattern.permute.xlu0 2
        %2612 = vperm.xlu0 %2611, %v2015
        %v2613 = vpop.permute.xlu0 %2612
        %2615 = vset.pattern.permute.xlu0 2
        %2616 = vperm.xlu0 %2615, %v2021
        %v2617 = vpop.permute.xlu0 %2616
        %2619 = vset.pattern.permute.xlu0 2
        %2620 = vperm.xlu0 %2619, %v2027
        %v2621 = vpop.permute.xlu0 %2620
        %2623 = vset.pattern.permute.xlu0 2
        %2624 = vperm.xlu0 %2623, %v2033
        %v2625 = vpop.permute.xlu0 %2624
        %2627 = vset.pattern.permute.xlu0 2
        %2628 = vperm.xlu0 %2627, %v2039
        %v2629 = vpop.permute.xlu0 %2628
        %2631 = vset.pattern.permute.xlu0 2
        %2632 = vperm.xlu0 %2631, %v2045
        %v2633 = vpop.permute.xlu0 %2632
        %2635 = vset.pattern.permute.xlu0 2
        %2636 = vperm.xlu0 %2635, %v2051
        %v2637 = vpop.permute.xlu0 %2636
        %2639 = vset.pattern.permute.xlu0 2
        %2640 = vperm.xlu0 %2639, %v2057
        %v2641 = vpop.permute.xlu0 %2640
        %2643 = vset.pattern.permute.xlu0 2
        %2644 = vperm.xlu0 %2643, %v2063
        %v2645 = vpop.permute.xlu0 %2644
        %2647 = vset.pattern.permute.xlu0 2
        %2648 = vperm.xlu0 %2647, %v2069
        %v2649 = vpop.permute.xlu0 %2648
        %2651 = vset.pattern.permute.xlu0 2
        %2652 = vperm.xlu0 %2651, %v2075
        %v2653 = vpop.permute.xlu0 %2652
        %2655 = vset.pattern.permute.xlu0 2
        %2656 = vperm.xlu0 %2655, %v2081
        %v2657 = vpop.permute.xlu0 %2656
        %2659 = vset.pattern.permute.xlu0 2
        %2660 = vperm.xlu0 %2659, %v2087
        %v2661 = vpop.permute.xlu0 %2660
        %v2663 = vlaneseq
        %v2664 = vshrl.u32 %v2663, 7
        %v2665 = vsub.s32 2, %v2664
        %v2666 = vrot.slane %v2191, %v2665
        %v2667 = vadd.f32 %v2601, %v2666
        %v2668 = vadd.f32 %v2605, %v2666
        %v2669 = vadd.f32 %v2609, %v2666
        %v2670 = vadd.f32 %v2613, %v2666
        %v2671 = vadd.f32 %v2617, %v2666
        %v2672 = vadd.f32 %v2621, %v2666
        %v2673 = vadd.f32 %v2625, %v2666
        %v2674 = vadd.f32 %v2629, %v2666
        %v2675 = vadd.f32 %v2633, %v2666
        %v2676 = vadd.f32 %v2637, %v2666
        %v2677 = vadd.f32 %v2641, %v2666
        %v2678 = vadd.f32 %v2645, %v2666
        %v2679 = vadd.f32 %v2649, %v2666
        %v2680 = vadd.f32 %v2653, %v2666
        %v2681 = vadd.f32 %v2657, %v2666
        %v2682 = vadd.f32 %v2661, %v2666
        %v2683 = vmul.f32 %v2106, %v1282
        %v2684 = vmul.f32 %v2107, %v1282
        %v2685 = vmul.f32 %v2108, %v1282
        %v2686 = vmul.f32 %v2109, %v1282
        %v2687 = vmul.f32 %v2110, %v1282
        %v2688 = vmul.f32 %v2111, %v1282
        %v2689 = vmul.f32 %v2112, %v1282
        %v2690 = vmul.f32 %v2113, %v1282
        %v2691 = vmul.f32 %v2114, %v1282
        %v2692 = vmul.f32 %v2115, %v1282
        %v2693 = vmul.f32 %v2116, %v1282
        %v2694 = vmul.f32 %v2117, %v1282
        %v2695 = vmul.f32 %v2118, %v1282
        %v2696 = vmul.f32 %v2119, %v1282
        %v2697 = vmul.f32 %v2120, %v1282
        %v2698 = vmul.f32 %v2121, %v1282
        %v2699 = vadd.f32 %v2667, %v2683
        %v2700 = vadd.f32 %v2668, %v2684
        %v2701 = vadd.f32 %v2669, %v2685
        %v2702 = vadd.f32 %v2670, %v2686
        %v2703 = vadd.f32 %v2671, %v2687
        %v2704 = vadd.f32 %v2672, %v2688
        %v2705 = vadd.f32 %v2673, %v2689
        %v2706 = vadd.f32 %v2674, %v2690
        %v2707 = vadd.f32 %v2675, %v2691
        %v2708 = vadd.f32 %v2676, %v2692
        %v2709 = vadd.f32 %v2677, %v2693
        %v2710 = vadd.f32 %v2678, %v2694
        %v2711 = vadd.f32 %v2679, %v2695
        %v2712 = vadd.f32 %v2680, %v2696
        %v2713 = vadd.f32 %v2681, %v2697
        %v2714 = vadd.f32 %v2682, %v2698
        %vm2715 = vcmp.gt.f32.partialorder %v2699, 0.0
        %vm2716 = vcmp.gt.f32.partialorder %v2700, 0.0
        %vm2717 = vcmp.gt.f32.partialorder %v2701, 0.0
        %vm2718 = vcmp.gt.f32.partialorder %v2702, 0.0
        %vm2719 = vcmp.gt.f32.partialorder %v2703, 0.0
        %vm2720 = vcmp.gt.f32.partialorder %v2704, 0.0
        %vm2721 = vcmp.gt.f32.partialorder %v2705, 0.0
        %vm2722 = vcmp.gt.f32.partialorder %v2706, 0.0
        %vm2723 = vcmp.gt.f32.partialorder %v2707, 0.0
        %vm2724 = vcmp.gt.f32.partialorder %v2708, 0.0
        %vm2725 = vcmp.gt.f32.partialorder %v2709, 0.0
        %vm2726 = vcmp.gt.f32.partialorder %v2710, 0.0
        %vm2727 = vcmp.gt.f32.partialorder %v2711, 0.0
        %vm2728 = vcmp.gt.f32.partialorder %v2712, 0.0
        %vm2729 = vcmp.gt.f32.partialorder %v2713, 0.0
        %vm2730 = vcmp.gt.f32.partialorder %v2714, 0.0
        %v2731 = vmul.f32 %v2699, 0.2
        %v2732 = vmul.f32 %v2700, 0.2
        %v2733 = vmul.f32 %v2701, 0.2
        %v2734 = vmul.f32 %v2702, 0.2
        %v2735 = vmul.f32 %v2703, 0.2
        %v2736 = vmul.f32 %v2704, 0.2
        %v2737 = vmul.f32 %v2705, 0.2
        %v2738 = vmul.f32 %v2706, 0.2
        %v2739 = vmul.f32 %v2707, 0.2
        %v2740 = vmul.f32 %v2708, 0.2
        %v2741 = vmul.f32 %v2709, 0.2
        %v2742 = vmul.f32 %v2710, 0.2
        %v2743 = vmul.f32 %v2711, 0.2
        %v2744 = vmul.f32 %v2712, 0.2
        %v2745 = vmul.f32 %v2713, 0.2
        %v2746 = vmul.f32 %v2714, 0.2
        %v2747 = vsel %vm2715, %v2699, %v2731
        %v2748 = vsel %vm2716, %v2700, %v2732
        %v2749 = vsel %vm2717, %v2701, %v2733
        %v2750 = vsel %vm2718, %v2702, %v2734
        %v2751 = vsel %vm2719, %v2703, %v2735
        %v2752 = vsel %vm2720, %v2704, %v2736
        %v2753 = vsel %vm2721, %v2705, %v2737
        %v2754 = vsel %vm2722, %v2706, %v2738
        %v2755 = vsel %vm2723, %v2707, %v2739
        %v2756 = vsel %vm2724, %v2708, %v2740
        %v2757 = vsel %vm2725, %v2709, %v2741
        %v2758 = vsel %vm2726, %v2710, %v2742
        %v2759 = vsel %vm2727, %v2711, %v2743
        %v2760 = vsel %vm2728, %v2712, %v2744
        %v2761 = vsel %vm2729, %v2713, %v2745
        %v2762 = vsel %vm2730, %v2714, %v2746
        %v2763 = vmul.f32 %v1363, %v2747
        %v2764 = vmul.f32 %v1363, %v2748
        %v2765 = vmul.f32 %v1363, %v2749
        %v2766 = vmul.f32 %v1363, %v2750
        %v2767 = vmul.f32 %v1363, %v2751
        %v2768 = vmul.f32 %v1363, %v2752
        %v2769 = vmul.f32 %v1363, %v2753
        %v2770 = vmul.f32 %v1363, %v2754
        %v2771 = vmul.f32 %v1363, %v2755
        %v2772 = vmul.f32 %v1363, %v2756
        %v2773 = vmul.f32 %v1363, %v2757
        %v2774 = vmul.f32 %v1363, %v2758
        %v2775 = vmul.f32 %v1363, %v2759
        %v2776 = vmul.f32 %v1363, %v2760
        %v2777 = vmul.f32 %v1363, %v2761
        %v2778 = vmul.f32 %v1363, %v2762
        %v2779 = vadd.f32 %v2583, %v2763
        %v2780 = vadd.f32 %v2584, %v2764
        %v2781 = vadd.f32 %v2585, %v2765
        %v2782 = vadd.f32 %v2586, %v2766
        %v2783 = vadd.f32 %v2587, %v2767
        %v2784 = vadd.f32 %v2588, %v2768
        %v2785 = vadd.f32 %v2589, %v2769
        %v2786 = vadd.f32 %v2590, %v2770
        %v2787 = vadd.f32 %v2591, %v2771
        %v2788 = vadd.f32 %v2592, %v2772
        %v2789 = vadd.f32 %v2593, %v2773
        %v2790 = vadd.f32 %v2594, %v2774
        %v2791 = vadd.f32 %v2595, %v2775
        %v2792 = vadd.f32 %v2596, %v2776
        %v2793 = vadd.f32 %v2597, %v2777
        %v2794 = vadd.f32 %v2598, %v2778
        %2795 = vset.pattern.permute.xlu0 3
        %2796 = vperm.xlu0 %2795, %v1997
        %v2797 = vpop.permute.xlu0 %2796
        %2799 = vset.pattern.permute.xlu0 3
        %2800 = vperm.xlu0 %2799, %v2003
        %v2801 = vpop.permute.xlu0 %2800
        %2803 = vset.pattern.permute.xlu0 3
        %2804 = vperm.xlu0 %2803, %v2009
        %v2805 = vpop.permute.xlu0 %2804
        %2807 = vset.pattern.permute.xlu0 3
        %2808 = vperm.xlu0 %2807, %v2015
        %v2809 = vpop.permute.xlu0 %2808
        %2811 = vset.pattern.permute.xlu0 3
        %2812 = vperm.xlu0 %2811, %v2021
        %v2813 = vpop.permute.xlu0 %2812
        %2815 = vset.pattern.permute.xlu0 3
        %2816 = vperm.xlu0 %2815, %v2027
        %v2817 = vpop.permute.xlu0 %2816
        %2819 = vset.pattern.permute.xlu0 3
        %2820 = vperm.xlu0 %2819, %v2033
        %v2821 = vpop.permute.xlu0 %2820
        %2823 = vset.pattern.permute.xlu0 3
        %2824 = vperm.xlu0 %2823, %v2039
        %v2825 = vpop.permute.xlu0 %2824
        %2827 = vset.pattern.permute.xlu0 3
        %2828 = vperm.xlu0 %2827, %v2045
        %v2829 = vpop.permute.xlu0 %2828
        %2831 = vset.pattern.permute.xlu0 3
        %2832 = vperm.xlu0 %2831, %v2051
        %v2833 = vpop.permute.xlu0 %2832
        %2835 = vset.pattern.permute.xlu0 3
        %2836 = vperm.xlu0 %2835, %v2057
        %v2837 = vpop.permute.xlu0 %2836
        %2839 = vset.pattern.permute.xlu0 3
        %2840 = vperm.xlu0 %2839, %v2063
        %v2841 = vpop.permute.xlu0 %2840
        %2843 = vset.pattern.permute.xlu0 3
        %2844 = vperm.xlu0 %2843, %v2069
        %v2845 = vpop.permute.xlu0 %2844
        %2847 = vset.pattern.permute.xlu0 3
        %2848 = vperm.xlu0 %2847, %v2075
        %v2849 = vpop.permute.xlu0 %2848
        %2851 = vset.pattern.permute.xlu0 3
        %2852 = vperm.xlu0 %2851, %v2081
        %v2853 = vpop.permute.xlu0 %2852
        %2855 = vset.pattern.permute.xlu0 3
        %2856 = vperm.xlu0 %2855, %v2087
        %v2857 = vpop.permute.xlu0 %2856
        %v2859 = vlaneseq
        %v2860 = vshrl.u32 %v2859, 7
        %v2861 = vsub.s32 3, %v2860
        %v2862 = vrot.slane %v2191, %v2861
        %v2863 = vadd.f32 %v2797, %v2862
        %v2864 = vadd.f32 %v2801, %v2862
        %v2865 = vadd.f32 %v2805, %v2862
        %v2866 = vadd.f32 %v2809, %v2862
        %v2867 = vadd.f32 %v2813, %v2862
        %v2868 = vadd.f32 %v2817, %v2862
        %v2869 = vadd.f32 %v2821, %v2862
        %v2870 = vadd.f32 %v2825, %v2862
        %v2871 = vadd.f32 %v2829, %v2862
        %v2872 = vadd.f32 %v2833, %v2862
        %v2873 = vadd.f32 %v2837, %v2862
        %v2874 = vadd.f32 %v2841, %v2862
        %v2875 = vadd.f32 %v2845, %v2862
        %v2876 = vadd.f32 %v2849, %v2862
        %v2877 = vadd.f32 %v2853, %v2862
        %v2878 = vadd.f32 %v2857, %v2862
        %v2879 = vmul.f32 %v2106, %v1480
        %v2880 = vmul.f32 %v2107, %v1480
        %v2881 = vmul.f32 %v2108, %v1480
        %v2882 = vmul.f32 %v2109, %v1480
        %v2883 = vmul.f32 %v2110, %v1480
        %v2884 = vmul.f32 %v2111, %v1480
        %v2885 = vmul.f32 %v2112, %v1480
        %v2886 = vmul.f32 %v2113, %v1480
        %v2887 = vmul.f32 %v2114, %v1480
        %v2888 = vmul.f32 %v2115, %v1480
        %v2889 = vmul.f32 %v2116, %v1480
        %v2890 = vmul.f32 %v2117, %v1480
        %v2891 = vmul.f32 %v2118, %v1480
        %v2892 = vmul.f32 %v2119, %v1480
        %v2893 = vmul.f32 %v2120, %v1480
        %v2894 = vmul.f32 %v2121, %v1480
        %v2895 = vadd.f32 %v2863, %v2879
        %v2896 = vadd.f32 %v2864, %v2880
        %v2897 = vadd.f32 %v2865, %v2881
        %v2898 = vadd.f32 %v2866, %v2882
        %v2899 = vadd.f32 %v2867, %v2883
        %v2900 = vadd.f32 %v2868, %v2884
        %v2901 = vadd.f32 %v2869, %v2885
        %v2902 = vadd.f32 %v2870, %v2886
        %v2903 = vadd.f32 %v2871, %v2887
        %v2904 = vadd.f32 %v2872, %v2888
        %v2905 = vadd.f32 %v2873, %v2889
        %v2906 = vadd.f32 %v2874, %v2890
        %v2907 = vadd.f32 %v2875, %v2891
        %v2908 = vadd.f32 %v2876, %v2892
        %v2909 = vadd.f32 %v2877, %v2893
        %v2910 = vadd.f32 %v2878, %v2894
        %vm2911 = vcmp.gt.f32.partialorder %v2895, 0.0
        %vm2912 = vcmp.gt.f32.partialorder %v2896, 0.0
        %vm2913 = vcmp.gt.f32.partialorder %v2897, 0.0
        %vm2914 = vcmp.gt.f32.partialorder %v2898, 0.0
        %vm2915 = vcmp.gt.f32.partialorder %v2899, 0.0
        %vm2916 = vcmp.gt.f32.partialorder %v2900, 0.0
        %vm2917 = vcmp.gt.f32.partialorder %v2901, 0.0
        %vm2918 = vcmp.gt.f32.partialorder %v2902, 0.0
        %vm2919 = vcmp.gt.f32.partialorder %v2903, 0.0
        %vm2920 = vcmp.gt.f32.partialorder %v2904, 0.0
        %vm2921 = vcmp.gt.f32.partialorder %v2905, 0.0
        %vm2922 = vcmp.gt.f32.partialorder %v2906, 0.0
        %vm2923 = vcmp.gt.f32.partialorder %v2907, 0.0
        %vm2924 = vcmp.gt.f32.partialorder %v2908, 0.0
        %vm2925 = vcmp.gt.f32.partialorder %v2909, 0.0
        %vm2926 = vcmp.gt.f32.partialorder %v2910, 0.0
        %v2927 = vmul.f32 %v2895, 0.2
        %v2928 = vmul.f32 %v2896, 0.2
        %v2929 = vmul.f32 %v2897, 0.2
        %v2930 = vmul.f32 %v2898, 0.2
        %v2931 = vmul.f32 %v2899, 0.2
        %v2932 = vmul.f32 %v2900, 0.2
        %v2933 = vmul.f32 %v2901, 0.2
        %v2934 = vmul.f32 %v2902, 0.2
        %v2935 = vmul.f32 %v2903, 0.2
        %v2936 = vmul.f32 %v2904, 0.2
        %v2937 = vmul.f32 %v2905, 0.2
        %v2938 = vmul.f32 %v2906, 0.2
        %v2939 = vmul.f32 %v2907, 0.2
        %v2940 = vmul.f32 %v2908, 0.2
        %v2941 = vmul.f32 %v2909, 0.2
        %v2942 = vmul.f32 %v2910, 0.2
        %v2943 = vsel %vm2911, %v2895, %v2927
        %v2944 = vsel %vm2912, %v2896, %v2928
        %v2945 = vsel %vm2913, %v2897, %v2929
        %v2946 = vsel %vm2914, %v2898, %v2930
        %v2947 = vsel %vm2915, %v2899, %v2931
        %v2948 = vsel %vm2916, %v2900, %v2932
        %v2949 = vsel %vm2917, %v2901, %v2933
        %v2950 = vsel %vm2918, %v2902, %v2934
        %v2951 = vsel %vm2919, %v2903, %v2935
        %v2952 = vsel %vm2920, %v2904, %v2936
        %v2953 = vsel %vm2921, %v2905, %v2937
        %v2954 = vsel %vm2922, %v2906, %v2938
        %v2955 = vsel %vm2923, %v2907, %v2939
        %v2956 = vsel %vm2924, %v2908, %v2940
        %v2957 = vsel %vm2925, %v2909, %v2941
        %v2958 = vsel %vm2926, %v2910, %v2942
        %v2959 = vmul.f32 %v1561, %v2943
        %v2960 = vmul.f32 %v1561, %v2944
        %v2961 = vmul.f32 %v1561, %v2945
        %v2962 = vmul.f32 %v1561, %v2946
        %v2963 = vmul.f32 %v1561, %v2947
        %v2964 = vmul.f32 %v1561, %v2948
        %v2965 = vmul.f32 %v1561, %v2949
        %v2966 = vmul.f32 %v1561, %v2950
        %v2967 = vmul.f32 %v1561, %v2951
        %v2968 = vmul.f32 %v1561, %v2952
        %v2969 = vmul.f32 %v1561, %v2953
        %v2970 = vmul.f32 %v1561, %v2954
        %v2971 = vmul.f32 %v1561, %v2955
        %v2972 = vmul.f32 %v1561, %v2956
        %v2973 = vmul.f32 %v1561, %v2957
        %v2974 = vmul.f32 %v1561, %v2958
        %v2975 = vadd.f32 %v2779, %v2959
        %v2976 = vadd.f32 %v2780, %v2960
        %v2977 = vadd.f32 %v2781, %v2961
        %v2978 = vadd.f32 %v2782, %v2962
        %v2979 = vadd.f32 %v2783, %v2963
        %v2980 = vadd.f32 %v2784, %v2964
        %v2981 = vadd.f32 %v2785, %v2965
        %v2982 = vadd.f32 %v2786, %v2966
        %v2983 = vadd.f32 %v2787, %v2967
        %v2984 = vadd.f32 %v2788, %v2968
        %v2985 = vadd.f32 %v2789, %v2969
        %v2986 = vadd.f32 %v2790, %v2970
        %v2987 = vadd.f32 %v2791, %v2971
        %v2988 = vadd.f32 %v2792, %v2972
        %v2989 = vadd.f32 %v2793, %v2973
        %v2990 = vadd.f32 %v2794, %v2974
        %v2991 = vsel %vm2159, %v2975, -1e+30
        %v2992 = vsel %vm2160, %v2976, -1e+30
        %v2993 = vsel %vm2161, %v2977, -1e+30
        %v2994 = vsel %vm2162, %v2978, -1e+30
        %v2995 = vsel %vm2163, %v2979, -1e+30
        %v2996 = vsel %vm2164, %v2980, -1e+30
        %v2997 = vsel %vm2165, %v2981, -1e+30
        %v2998 = vsel %vm2166, %v2982, -1e+30
        %v2999 = vsel %vm2167, %v2983, -1e+30
        %v3000 = vsel %vm2168, %v2984, -1e+30
        %v3001 = vsel %vm2169, %v2985, -1e+30
        %v3002 = vsel %vm2170, %v2986, -1e+30
        %v3003 = vsel %vm2171, %v2987, -1e+30
        %v3004 = vsel %vm2172, %v2988, -1e+30
        %v3005 = vsel %vm2173, %v2989, -1e+30
        %v3006 = vsel %vm2174, %v2990, -1e+30
        %3007 = vmax.xlane.f32.xlu0 %v2991
        %v3008 = vpop.xlane.xlu0 %3007
        %3009 = vmax.xlane.f32.xlu0 %v2992
        %v3010 = vpop.xlane.xlu0 %3009
        %3011 = vmax.xlane.f32.xlu0 %v2993
        %v3012 = vpop.xlane.xlu0 %3011
        %3013 = vmax.xlane.f32.xlu0 %v2994
        %v3014 = vpop.xlane.xlu0 %3013
        %3015 = vmax.xlane.f32.xlu0 %v2995
        %v3016 = vpop.xlane.xlu0 %3015
        %3017 = vmax.xlane.f32.xlu0 %v2996
        %v3018 = vpop.xlane.xlu0 %3017
        %3019 = vmax.xlane.f32.xlu0 %v2997
        %v3020 = vpop.xlane.xlu0 %3019
        %3021 = vmax.xlane.f32.xlu0 %v2998
        %v3022 = vpop.xlane.xlu0 %3021
        %3023 = vmax.xlane.f32.xlu0 %v2999
        %v3024 = vpop.xlane.xlu0 %3023
        %3025 = vmax.xlane.f32.xlu0 %v3000
        %v3026 = vpop.xlane.xlu0 %3025
        %3027 = vmax.xlane.f32.xlu0 %v3001
        %v3028 = vpop.xlane.xlu0 %3027
        %3029 = vmax.xlane.f32.xlu0 %v3002
        %v3030 = vpop.xlane.xlu0 %3029
        %3031 = vmax.xlane.f32.xlu0 %v3003
        %v3032 = vpop.xlane.xlu0 %3031
        %3033 = vmax.xlane.f32.xlu0 %v3004
        %v3034 = vpop.xlane.xlu0 %3033
        %3035 = vmax.xlane.f32.xlu0 %v3005
        %v3036 = vpop.xlane.xlu0 %3035
        %3037 = vmax.xlane.f32.xlu0 %v3006
        %v3038 = vpop.xlane.xlu0 %3037
        %v3039 = vsub.f32 %v2991, %v3008
        %v3040 = vsub.f32 %v2992, %v3010
        %v3041 = vsub.f32 %v2993, %v3012
        %v3042 = vsub.f32 %v2994, %v3014
        %v3043 = vsub.f32 %v2995, %v3016
        %v3044 = vsub.f32 %v2996, %v3018
        %v3045 = vsub.f32 %v2997, %v3020
        %v3046 = vsub.f32 %v2998, %v3022
        %v3047 = vsub.f32 %v2999, %v3024
        %v3048 = vsub.f32 %v3000, %v3026
        %v3049 = vsub.f32 %v3001, %v3028
        %v3050 = vsub.f32 %v3002, %v3030
        %v3051 = vsub.f32 %v3003, %v3032
        %v3052 = vsub.f32 %v3004, %v3034
        %v3053 = vsub.f32 %v3005, %v3036
        %v3054 = vsub.f32 %v3006, %v3038
        %v3055 = vmul.f32 %v3039, 1.442695
        %v3056 = vpow.pop %v3055
        %v3057 = vmul.f32 %v3040, 1.442695
        %v3058 = vpow.pop %v3057
        %v3059 = vmul.f32 %v3041, 1.442695
        %v3060 = vpow.pop %v3059
        %v3061 = vmul.f32 %v3042, 1.442695
        %v3062 = vpow.pop %v3061
        %v3063 = vmul.f32 %v3043, 1.442695
        %v3064 = vpow.pop %v3063
        %v3065 = vmul.f32 %v3044, 1.442695
        %v3066 = vpow.pop %v3065
        %v3067 = vmul.f32 %v3045, 1.442695
        %v3068 = vpow.pop %v3067
        %v3069 = vmul.f32 %v3046, 1.442695
        %v3070 = vpow.pop %v3069
        %v3071 = vmul.f32 %v3047, 1.442695
        %v3072 = vpow.pop %v3071
        %v3073 = vmul.f32 %v3048, 1.442695
        %v3074 = vpow.pop %v3073
        %v3075 = vmul.f32 %v3049, 1.442695
        %v3076 = vpow.pop %v3075
        %v3077 = vmul.f32 %v3050, 1.442695
        %v3078 = vpow.pop %v3077
        %v3079 = vmul.f32 %v3051, 1.442695
        %v3080 = vpow.pop %v3079
        %v3081 = vmul.f32 %v3052, 1.442695
        %v3082 = vpow.pop %v3081
        %v3083 = vmul.f32 %v3053, 1.442695
        %v3084 = vpow.pop %v3083
        %v3085 = vmul.f32 %v3054, 1.442695
        %v3086 = vpow.pop %v3085
        %3087 = vadd.xlane.f32.xlu0 %v3056
        %v3088 = vpop.xlane.xlu0 %3087
        %3089 = vadd.xlane.f32.xlu0 %v3058
        %v3090 = vpop.xlane.xlu0 %3089
        %3091 = vadd.xlane.f32.xlu0 %v3060
        %v3092 = vpop.xlane.xlu0 %3091
        %3093 = vadd.xlane.f32.xlu0 %v3062
        %v3094 = vpop.xlane.xlu0 %3093
        %3095 = vadd.xlane.f32.xlu0 %v3064
        %v3096 = vpop.xlane.xlu0 %3095
        %3097 = vadd.xlane.f32.xlu0 %v3066
        %v3098 = vpop.xlane.xlu0 %3097
        %3099 = vadd.xlane.f32.xlu0 %v3068
        %v3100 = vpop.xlane.xlu0 %3099
        %3101 = vadd.xlane.f32.xlu0 %v3070
        %v3102 = vpop.xlane.xlu0 %3101
        %3103 = vadd.xlane.f32.xlu0 %v3072
        %v3104 = vpop.xlane.xlu0 %3103
        %3105 = vadd.xlane.f32.xlu0 %v3074
        %v3106 = vpop.xlane.xlu0 %3105
        %3107 = vadd.xlane.f32.xlu0 %v3076
        %v3108 = vpop.xlane.xlu0 %3107
        %3109 = vadd.xlane.f32.xlu0 %v3078
        %v3110 = vpop.xlane.xlu0 %3109
        %3111 = vadd.xlane.f32.xlu0 %v3080
        %v3112 = vpop.xlane.xlu0 %3111
        %3113 = vadd.xlane.f32.xlu0 %v3082
        %v3114 = vpop.xlane.xlu0 %3113
        %3115 = vadd.xlane.f32.xlu0 %v3084
        %v3116 = vpop.xlane.xlu0 %3115
        %3117 = vadd.xlane.f32.xlu0 %v3086
        %v3118 = vpop.xlane.xlu0 %3117
        %v3119 = vrcp.pop %v3088
        %v3120 = vrcp.pop %v3090
        %v3121 = vrcp.pop %v3092
        %v3122 = vrcp.pop %v3094
        %v3123 = vrcp.pop %v3096
        %v3124 = vrcp.pop %v3098
        %v3125 = vrcp.pop %v3100
        %v3126 = vrcp.pop %v3102
        %v3127 = vrcp.pop %v3104
        %v3128 = vrcp.pop %v3106
        %v3129 = vrcp.pop %v3108
        %v3130 = vrcp.pop %v3110
        %v3131 = vrcp.pop %v3112
        %v3132 = vrcp.pop %v3114
        %v3133 = vrcp.pop %v3116
        %v3134 = vrcp.pop %v3118
        %v3135 = vmul.f32 %v3056, %v3119
        %v3136 = vmul.f32 %v3058, %v3120
        %v3137 = vmul.f32 %v3060, %v3121
        %v3138 = vmul.f32 %v3062, %v3122
        %v3139 = vmul.f32 %v3064, %v3123
        %v3140 = vmul.f32 %v3066, %v3124
        %v3141 = vmul.f32 %v3068, %v3125
        %v3142 = vmul.f32 %v3070, %v3126
        %v3143 = vmul.f32 %v3072, %v3127
        %v3144 = vmul.f32 %v3074, %v3128
        %v3145 = vmul.f32 %v3076, %v3129
        %v3146 = vmul.f32 %v3078, %v3130
        %v3147 = vmul.f32 %v3080, %v3131
        %v3148 = vmul.f32 %v3082, %v3132
        %v3149 = vmul.f32 %v3084, %v3133
        %v3150 = vmul.f32 %v3086, %v3134
        %s3151 = scalar_lea.vmem %s433, 16
        %v3152 = vld [vmem:[%s3151] sm:$0xff]
        %v3153 = vld [vmem:[%s3151 + $0x8] sm:$0xff]
        %v3154 = vpack.c.bf16 %v3153, %v3152
        %v3155 = vpack.c.bf16 %v3136, %v3135
        %v3156 = vpack.c.bf16 %v3138, %v3137
        %v3157 = vpack.c.bf16 %v3140, %v3139
        %v3158 = vpack.c.bf16 %v3142, %v3141
        %v3159 = vpack.c.bf16 %v3144, %v3143
        %v3160 = vpack.c.bf16 %v3146, %v3145
        %v3161 = vpack.c.bf16 %v3148, %v3147
        %v3162 = vpack.c.bf16 %v3150, %v3149
        %3163 = vmatprep.subr.bf16.mxu0 0
        %3164 = vmatpush1.bf16.msra.mxu0 %v3155
        %3165 = vmatprep.subr.bf16.mxu0 0
        %3166 = vmatpush1.bf16.msra.mxu0 %v3156
        %3167 = vmatprep.subr.bf16.mxu0 0
        %3168 = vmatpush1.bf16.msra.mxu0 %v3157
        %3169 = vmatprep.subr.bf16.mxu0 0
        %3170 = vmatpush1.bf16.msra.mxu0 %v3158
        %3171 = vmatprep.subr.bf16.mxu0 0
        %3172 = vmatpush1.bf16.msra.mxu0 %v3159
        %3173 = vmatprep.subr.bf16.mxu0 0
        %3174 = vmatpush1.bf16.msra.mxu0 %v3160
        %3175 = vmatprep.subr.bf16.mxu0 0
        %3176 = vmatpush1.bf16.msra.mxu0 %v3161
        %3177 = vmatprep.subr.bf16.mxu0 0
        %3178 = vmatpush1.bf16.msra.mxu0 %v3162
        %3179 = vmatprep.subr.bf16.mxu0 0
        %3180 = vmatpush1.bf16.msra.mxu0 0
        %3181 = vmatprep.subr.bf16.mxu0 0
        %3182 = vmatpush1.bf16.msra.mxu0 0
        %3183 = vmatprep.subr.bf16.mxu0 0
        %3184 = vmatpush1.bf16.msra.mxu0 0
        %3185 = vmatprep.subr.bf16.mxu0 0
        %3186 = vmatpush1.bf16.msra.mxu0 0
        %3187 = vmatprep.subr.bf16.mxu0 0
        %3188 = vmatpush1.bf16.msra.mxu0 0
        %3189 = vmatprep.subr.bf16.mxu0 0
        %3190 = vmatpush1.bf16.msra.mxu0 0
        %3191 = vmatprep.subr.bf16.mxu0 0
        %3192 = vmatpush1.bf16.msra.mxu0 0
        %3193 = vmatprep.subr.bf16.mxu0 0
        %3194 = vmatpush1.bf16.msra.mxu0 0
        %3195 = vmatprep.mubr.bf16.mxu0 0
        %3196 = vmatmul.mubr.bf16.gmra.mrb[0].mxu0 %v3154
        %v3197 = vpop.f32.mrb[0].mxu0
        %v3198 = vadd.f32 0.0, %v3197
        %v3199 = vpop.f32.mrb[0].mxu0
        %v3200 = vpop.f32.mrb[0].mxu0
        %v3201 = vadd.f32 0.0, %v3200
        %v3202 = vpop.f32.mrb[0].mxu0
        %3203 = vdwg.mxu0
        %v3204 = vpack.c.bf16 %v3201, %v3198
        %v3205 = vpack.c.bf16 %v2001, %v1995
        %v3206 = vpack.c.bf16 %v2013, %v2007
        %v3207 = vpack.c.bf16 %v2025, %v2019
        %v3208 = vpack.c.bf16 %v2037, %v2031
        %v3209 = vpack.c.bf16 %v2049, %v2043
        %v3210 = vpack.c.bf16 %v2061, %v2055
        %v3211 = vpack.c.bf16 %v2073, %v2067
        %v3212 = vpack.c.bf16 %v2085, %v2079
        %3213 = vmatprep.subr.bf16.mxu0 0
        %3214 = vmatpush1.bf16.msra.mxu0 %v3205
        %3215 = vmatprep.subr.bf16.mxu0 0
        %3216 = vmatpush1.bf16.msra.mxu0 %v3206
        %3217 = vmatprep.subr.bf16.mxu0 0
        %3218 = vmatpush1.bf16.msra.mxu0 %v3207
        %3219 = vmatprep.subr.bf16.mxu0 0
        %3220 = vmatpush1.bf16.msra.mxu0 %v3208
        %3221 = vmatprep.subr.bf16.mxu0 0
        %3222 = vmatpush1.bf16.msra.mxu0 %v3209
        %3223 = vmatprep.subr.bf16.mxu0 0
        %3224 = vmatpush1.bf16.msra.mxu0 %v3210
        %3225 = vmatprep.subr.bf16.mxu0 0
        %3226 = vmatpush1.bf16.msra.mxu0 %v3211
        %3227 = vmatprep.subr.bf16.mxu0 0
        %3228 = vmatpush1.bf16.msra.mxu0 %v3212
        %3229 = vmatprep.subr.bf16.mxu0 0
        %3230 = vmatpush1.bf16.msra.mxu0 0
        %3231 = vmatprep.subr.bf16.mxu0 0
        %3232 = vmatpush1.bf16.msra.mxu0 0
        %3233 = vmatprep.subr.bf16.mxu0 0
        %3234 = vmatpush1.bf16.msra.mxu0 0
        %3235 = vmatprep.subr.bf16.mxu0 0
        %3236 = vmatpush1.bf16.msra.mxu0 0
        %3237 = vmatprep.subr.bf16.mxu0 0
        %3238 = vmatpush1.bf16.msra.mxu0 0
        %3239 = vmatprep.subr.bf16.mxu0 0
        %3240 = vmatpush1.bf16.msra.mxu0 0
        %3241 = vmatprep.subr.bf16.mxu0 0
        %3242 = vmatpush1.bf16.msra.mxu0 0
        %3243 = vmatprep.subr.bf16.mxu0 0
        %3244 = vmatpush1.bf16.msra.mxu0 0
        %3245 = vmatprep.mubr.bf16.mxu0 0
        %3246 = vmatmul.mubr.bf16.gmra.mrb[0].mxu0 %v3204
        %v3247 = vpop.f32.mrb[0].mxu0
        %v3248 = vadd.f32 %v1819, %v3247
        %v3249 = vpop.f32.mrb[0].mxu0
        %v3250 = vpop.f32.mrb[0].mxu0
        %v3251 = vadd.f32 %v1819, %v3250
        %v3252 = vpop.f32.mrb[0].mxu0
        %3253 = vdwg.mxu0
        %3254 = vst [vmem:[%s407 + $0x10] sm:$0xff] %v3248
        %3255 = vst [vmem:[%s407 + $0x18] sm:$0xff] %v3251
        %s3256 = sand.u32 %s242, 1
        %s3257 = scalar_lea.sflag [#allocation3], %s3256
        %s3258 = sand.u32 %s242, 1
        %s3259 = smul.addr %s3258, 32
        %s3260 = scalar_lea.vmem [#allocation7], %s3259
        // Predicated region
        $region65: #{tpu_custom_call.1} parent=55 // pred_check
          %p3261 = pneg %p252
        $region66: #{tpu_custom_call.1} parent=55 // pred_check_branch
          %3263 = sbr.rel (%p3261) target = $region68
        $region67: #{tpu_custom_call.1} parent=55 // pred_region
          %s3264 = smul.u32 4, %s25
          %s3266 = ssub.s32 512, 512
          %3267 = vsyncadd %s3257, %s3266
          %s3268 = smul.addr %s3264, 128
          %s3269 = scalar_lea.hbm %s9, %s3268
          %s3270 = sshll.u32 %s3260, 4
          %s3271 = int_to_ptr.vmem [resolvable:$true] %s3270
          %3276 = dma.vmem_to_hbm [thread:$0]  %s3271, 512, %s3269, %s3257, 128, 128, 8
        $region68: #{tpu_custom_call.1} parent=55 // pred_fallthru
          _
      $region56: #{tpu_custom_call.1} parent=5 // pred_fallthru
        _
      %p3277 = scmp.le.s32.totalorder 2, %s20
      // Predicated region
      $region69: #{tpu_custom_call.1} parent=5 // pred_check
        %p3278 = pneg %p3277
      $region70: #{tpu_custom_call.1} parent=5 // pred_check_branch
        %3280 = sbr.rel (%p3278) target = $region72
      $region71: #{tpu_custom_call.1} parent=5 // pred_region
        %s3281 = ssub.s32 %s20, 2
        // Predicated region
        $region73: #{tpu_custom_call.1} parent=71 // pred_check
          %p3282 = pneg %p258
        $region74: #{tpu_custom_call.1} parent=71 // pred_check_branch
          %3284 = sbr.rel (%p3282) target = $region76
        $region75: #{tpu_custom_call.1} parent=71 // pred_region
          %s3285 = sand.u32 %s243, 1
          %s3286 = scalar_lea.sflag [#allocation3], %s3285
          %s3287 = sand.u32 %s243, 1
          %s3288 = smul.addr %s3287, 32
          %s3289 = scalar_lea.vmem [#allocation7], %s3288
          %3290 = dma.done %s3286, 512
        $region76: #{tpu_custom_call.1} parent=71 // pred_fallthru
          _
      $region72: #{tpu_custom_call.1} parent=5 // pred_fallthru
        _
    $region6: #{tpu_custom_call.1} parent=1 // loop_footer
      %s24 = sadd.s32 1, %s20
    $region7: #{tpu_custom_call.1} parent=1 // loop_footer_branch
      %19 = sbr.rel target = $region3
    $region8: #{tpu_custom_call.1} parent=1 // loop_exit
      _
    %3291 = vsyncpa [#allocation3], 1
    %s3292 = scalar_lea.sflag [#allocation3], 1
    %3293 = vsyncpa %s3292, 1
    %3294 = vsyncpa [#allocation4], 1
    %s3295 = scalar_lea.sflag [#allocation4], 1
    %3296 = vsyncpa %s3295, 1
    %3297 = vsyncpa [#allocation6], 1

</llo_original>
